<compile_context>
chip_gen: v5e
topology: v5e:2x2
jax: 0.10.0
libtpu: 0.0.40
codegen_flags: <defaults>
</compile_context>

<pallas_src>
import jax
import jax.numpy as jnp
from jax import lax
from jax.experimental import pallas as pl
from jax.experimental.pallas import tpu as pltpu


# ----------------------------- fused kernel body -----------------------------

def _make_prb_kernel(C, IC, OC, H, W, BB, mxu_bf16):
    N = H * W
    A = N // IC          # channel-attention view trick requires A * IC == N
    HP = H + 2           # padded rows per image inside the scratch
    f32 = jnp.float32

    def cast(v):
        return v.astype(jnp.bfloat16) if mxu_bf16 else v

    def mm(a, b):
        return jnp.dot(cast(a), cast(b), preferred_element_type=f32)

    def dg(a, b, dims):
        return lax.dot_general(cast(a), cast(b), (dims, ((), ())),
                               preferred_element_type=f32)

    def softmax_last(f):
        m = jnp.max(f, axis=-1, keepdims=True)
        e = jnp.exp(f - m)
        return e / jnp.sum(e, axis=-1, keepdims=True)

    def kernel(x_ref, w0_ref, b0_ref, wt_ref, bt_ref, wqkv_ref, bqkv_ref,
               wW_ref, bW_ref, out_ref, pad_ref):
        # Zero only the 1-pixel halo; the interior is overwritten by every im2col.
        zrow = jnp.zeros((1, W + 2, 2 * C), f32)
        zcol = jnp.zeros((HP, 1, 2 * C), f32)
        for b in range(BB):
            r0 = b * HP
            pad_ref[r0:r0 + 1, :, :] = zrow
            pad_ref[r0 + H + 1:r0 + H + 2, :, :] = zrow
            pad_ref[r0:r0 + HP, 0:1, :] = zcol
            pad_ref[r0:r0 + HP, W + 1:W + 2, :] = zcol

        def im2col(v, Cin):
            # v: (BB, H, W, Cin).  Per image: write the interior, channel-concat the 9
            # shifted taps, reshape ONCE; then stack rows image-major -> (BB*N, 9*Cin).
            rows = []
            for b in range(BB):
                r0 = b * HP
                pad_ref[r0 + 1:r0 + 1 + H, 1:W + 1, 0:Cin] = v[b]
                taps = [pad_ref[r0 + dh:r0 + dh + H, dw:dw + W, 0:Cin]
                        for dh in range(3) for dw in range(3)]
                rows.append(jnp.concatenate(taps, axis=-1).reshape(N, 9 * Cin))
            return rows[0] if BB == 1 else jnp.concatenate(rows, axis=0)

        x = x_ref[...]                                                  # (BB, H, W, C)

        # conv0_0 / conv0_1 (3x3 + folded BN + ReLU): one shared im2col, one matmul.
        h = jnp.maximum(mm(im2col(x, C), w0_ref[...]) + b0_ref[...], 0.0)
        x_p = h[:, 0:C]                                                 # (BB*N, C)
        x_c = h[:, C:2 * C]

        # g/theta/phi 1x1 projections of both attention branches, batched over images.
        qkv_p = jnp.maximum(mm(x_p, wqkv_ref[:, 0:3 * IC]) + bqkv_ref[:, 0:3 * IC], 0.0)
        qkv_c = jnp.maximum(mm(x_c, wqkv_ref[:, 3 * IC:6 * IC]) + bqkv_ref[:, 3 * IC:6 * IC], 0.0)

        # Per-image attention cores ((N,N) and (IC,IC) score matrices), unrolled (BB tiny).
        y_pos, y_chan = [], []
        for b in range(BB):
            r0, r1 = b * N, (b + 1) * N
            # -------- position-aware attention --------
            g = qkv_p[r0:r1, 0:IC]
            th = qkv_p[r0:r1, IC:2 * IC]
            ph = qkv_p[r0:r1, 2 * IC:3 * IC]
            f = dg(th, ph, ((1,), (1,)))                                # (N, N)
            y_pos.append(mm(softmax_last(f), g))                        # (N, IC)
            # -------- channel-aware attention --------
            g = qkv_c[r0:r1, 0:IC]
            th = qkv_c[r0:r1, IC:2 * IC]
            ph = qkv_c[r0:r1, 2 * IC:3 * IC]
            f = dg(th, ph, ((0,), (0,)))                                # (IC, IC)
            p = softmax_last(f)
            o = dg(g, p, ((1,), (1,)))                                  # (N, IC) == torch y^T
            # torch's y.permute(0,2,1).contiguous().view(B, IC, H, W) is a RAW flat-buffer
            # reinterpretation of the (N, IC)-contiguous o as (IC, N): reproduce with a
            # leading-dim split + small lane concat (requires IC | N).
            o3 = o.reshape(IC, A, IC)
            y_chan.append(jnp.concatenate([o3[:, a, :] for a in range(A)], axis=1))  # (IC, N)

        # Attention W (1x1, BN folded) convs + residuals, batched across images again.
        y_p = y_pos[0] if BB == 1 else jnp.concatenate(y_pos, axis=0)   # (BB*N, IC)
        x_p = mm(y_p, wW_ref[:, 0:C]) + bW_ref[:, 0:C] + x_p
        y_c = y_chan[0] if BB == 1 else jnp.concatenate(y_chan, axis=1)  # (IC, BB*N)
        x_c = dg(y_c, wW_ref[:, C:2 * C], ((0,), (0,))) + bW_ref[:, C:2 * C] + x_c

        # -------- tail 3x3 convs: channel-stacked, block-structured weights --------
        xpc = jnp.concatenate([x_p.reshape(BB, H, W, C),
                               x_c.reshape(BB, H, W, C)], axis=-1)      # (BB, H, W, 2C)
        # conv1 + conv4 (block diagonal), BN folded, ReLU
        h1 = jnp.maximum(mm(im2col(xpc, 2 * C), wt_ref[:, 0:2 * C])
                         + bt_ref[:, 0:2 * C], 0.0)                     # [x_p_0 | x_c_0]
        # conv2 | conv5 | conv3 (conv3's x_p_0 + x_c_0 add folded into weight columns)
        heads = jax.nn.sigmoid(
            mm(im2col(h1.reshape(BB, H, W, 2 * C), 2 * C),
               wt_ref[:, 2 * C:2 * C + 3 * OC])
            + bt_ref[:, 2 * C:2 * C + 3 * OC])                          # (BB*N, 3*OC)

        # Lane-dense store: (3*OC, BB*N) with the stacked spatial dim on lanes (>=128).
        out_ref[0] = heads.T

    return kernel


# ----------------------------- pallas_call wrapper -----------------------------

def _default_block_batch(B, N):
    """~128 stacked rows per grid step (fills the v5e 128-row MXU; 2+ steps keep both
    v7x TensorCores busy), while keeping >= 2 grid steps when the batch allows it."""
    bb = max(1, min(B, max(1, 128 // N)))
    while B % bb != 0:
        bb -= 1
    if B // bb < 2 and bb > 1:
        bb //= 2
        while B % bb != 0:
            bb -= 1
    return max(bb, 1)


def proposal_relation_block(x_nchw, params, IC, OC, block_batch=None, mxu_bf16=False):
    B, C, H, W = x_nchw.shape
    N = H * W
    # TODO(synk): general IC not dividing H*W would need an XLA reshape between two kernels.
    assert N % IC == 0, "inter_channels must divide H*W for the fused channel-attention view"
    BB = _default_block_batch(B, N) if block_batch is None else block_batch
    assert B % BB == 0
    G = B // BB

    x_nhwc = jnp.transpose(x_nchw, (0, 2, 3, 1))     # NCHW -> NHWC (boundary layout glue)
    kernel = _make_prb_kernel(C, IC, OC, H, W, BB, mxu_bf16)

    out = pl.pallas_call(
        kernel,
        out_shape=jax.ShapeDtypeStruct((G, 3 * OC, BB * N), jnp.float32),
        grid=(G,),
        in_specs=[
            pl.BlockSpec((BB, H, W, C), lambda g: (g, 0, 0, 0)),          # x (NHWC)
            pl.BlockSpec((9 * C, 2 * C), lambda g: (0, 0)),               # conv0_0|conv0_1 weights
            pl.BlockSpec((1, 2 * C), lambda g: (0, 0)),                   # conv0 shifts
            pl.BlockSpec((18 * C, 2 * C + 3 * OC), lambda g: (0, 0)),     # tail block weights
            pl.BlockSpec((1, 2 * C + 3 * OC), lambda g: (0, 0)),          # tail shifts
            pl.BlockSpec((C, 6 * IC), lambda g: (0, 0)),                  # g/theta/phi weights
            pl.BlockSpec((1, 6 * IC), lambda g: (0, 0)),                  # g/theta/phi shifts
            pl.BlockSpec((IC, 2 * C), lambda g: (0, 0)),                  # attention W weights
            pl.BlockSpec((1, 2 * C), lambda g: (0, 0)),                   # attention W shifts
        ],
        out_specs=pl.BlockSpec((1, 3 * OC, BB * N), lambda g: (g, 0, 0)),
        scratch_shapes=[pltpu.VMEM((BB * (H + 2), W + 2, 2 * C), jnp.float32)],
        compiler_params=pltpu.CompilerParams(dimension_semantics=("parallel",)),
    )(x_nhwc, params["w0"], params["b0"], params["wt"], params["bt"],
      params["wqkv"], params["bqkv"], params["wW"], params["bW"])

    # (G, 3*OC, BB*N) -> (B, 3*OC, H, W): tiny wrapper-side reshape/transpose.
    out = out.reshape(G, 3 * OC, BB, N).transpose(0, 2, 1, 3).reshape(B, 3 * OC, H, W)
    return out[:, 0:OC], out[:, OC:2 * OC], out[:, 2 * OC:3 * OC]


# ----------------------- deterministic packed parameters -----------------------

def init_packed_params(key, C, IC, OC):
    """Random torch-like parameters with eval-mode BatchNorm folded into the weights,
    packed into lane-dense, block-structured arrays for the fused kernel."""
    keys = iter(jax.random.split(key, 128))
    nk = lambda: next(keys)
    eps = 1e-5

    def bn_fold(w, bias, cout):
        gamma = 1.0 + 0.1 * jax.random.normal(nk(), (cout,), jnp.float32)
        beta = 0.1 * jax.random.normal(nk(), (cout,), jnp.float32)
        mean = 0.1 * jax.random.normal(nk(), (cout,), jnp.float32)
        var = 0.5 + jnp.abs(jax.random.normal(nk(), (cout,), jnp.float32))
        scale = gamma / jnp.sqrt(var + eps)
        return w * scale, beta + (bias - mean) * scale          # scale folded into weight

    def conv3(cin, cout, bn):
        # weight layout (tap, Cin, Cout), tap = kh*3 + kw   <->   torch (Cout, Cin, kh, kw)
        w = 0.1 * jax.random.normal(nk(), (9, cin, cout), jnp.float32)
        b = 0.1 * jax.random.normal(nk(), (cout,), jnp.float32)
        if bn:
            w, sh = bn_fold(w, b, cout)
        else:
            sh = b
        return w, sh

    def pw(cin, cout):
        # 1x1 conv (Cin, Cout) <-> torch (Cout, Cin, 1, 1); always followed by BN here.
        w = 0.1 * jax.random.normal(nk(), (cin, cout), jnp.float32)
        b = 0.1 * jax.random.normal(nk(), (cout,), jnp.float32)
        return bn_fold(w, b, cout)

    w00, b00 = conv3(C, C, True)
    w01, b01 = conv3(C, C, True)
    w1, b1 = conv3(C, C, True)
    w4, b4 = conv3(C, C, True)
    w2, b2 = conv3(C, OC, False)
    w3c, b3c = conv3(C, OC, False)
    w5, b5 = conv3(C, OC, False)

    # conv0_0 | conv0_1 share one im2col of x: columns [conv0_0 | conv0_1]
    w0 = jnp.concatenate([w00, w01], axis=-1).reshape(9 * C, 2 * C)
    b0 = jnp.concatenate([b00, b01])[None, :]

    # Tail convs act on the channel-stacked [x_p | x_c] im2col (row = tap*2C + channel):
    zCC = jnp.zeros((9, C, C), jnp.float32)
    zCO = jnp.zeros((9, C, OC), jnp.float32)
    # conv1 + conv4 block-diagonal, output columns [x_p_0 | x_c_0]
    w14 = jnp.concatenate([jnp.concatenate([w1, zCC], axis=-1),      # x_p input rows
                           jnp.concatenate([zCC, w4], axis=-1)],     # x_c input rows
                          axis=1).reshape(18 * C, 2 * C)
    # conv2 | conv5 | conv3 heads, output columns [x_p_1 | x_c_1 | x_p_c]
    whd = jnp.concatenate([jnp.concatenate([w2, zCO, w3c], axis=-1),   # x_p_0 input rows
                           jnp.concatenate([zCO, w5, w3c], axis=-1)],  # x_c_0 input rows
                          axis=1).reshape(18 * C, 3 * OC)
    wt = jnp.concatenate([w14, whd], axis=-1)
    bt = jnp.concatenate([b1, b4, b2, b5, b3c])[None, :]

    def attn():
        gw, gb = pw(C, IC)
        tw, tb = pw(C, IC)
        fw, fb = pw(C, IC)
        Ww, Wb = pw(IC, C)
        return gw, gb, tw, tb, fw, fb, Ww, Wb

    pgw, pgb, ptw, ptb, pfw, pfb, pWw, pWb = attn()   # p_net
    cgw, cgb, ctw, ctb, cfw, cfb, cWw, cWb = attn()   # c_net

    return {
        "w0": w0, "b0": b0, "wt": wt, "bt": bt,
        # column order: [p.g | p.theta | p.phi | c.g | c.theta | c.phi]
        "wqkv": jnp.concatenate([pgw, ptw, pfw, cgw, ctw, cfw], axis=1),
        "bqkv": jnp.concatenate([pgb, ptb, pfb, cgb, ctb, cfb])[None, :],
        # column order: [p.W | c.W]
        "wW": jnp.concatenate([pWw, cWw], axis=1),
        "bW": jnp.concatenate([pWb, cWb])[None, :],
    }


if __name__ == "__main__":
    key = jax.random.PRNGKey(0)
    kx, kp = jax.random.split(key)
    B, C, H, W = 4, 8, 8, 8          # 4 images -> grid of 2 parallel steps x 2 stacked images
    IC, OC = 16, 2                   # inter_channels, out_channels

    x = jax.random.normal(kx, (B, C, H, W), jnp.float32)
    params = init_packed_params(kp, C, IC, OC)

    fwd = jax.jit(proposal_relation_block, static_argnums=(2, 3))
    x_p_1, x_c_1, x_p_c = fwd(x, params, IC, OC)
    jax.block_until_ready((x_p_1, x_c_1, x_p_c))

    assert x_p_1.shape == (B, OC, H, W)
    assert x_c_1.shape == (B, OC, H, W)
    assert x_p_c.shape == (B, OC, H, W)
    assert bool(jnp.all(jnp.isfinite(x_p_1))
                & jnp.all(jnp.isfinite(x_c_1))
                & jnp.all(jnp.isfinite(x_p_c)))
    print("KERNEL_OK")
</pallas_src>

<mosaic_0001>
module attributes {stable_mosaic.version = 11 : i64} {
  func.func @kernel(%arg0: i32, %arg1: memref<2x8x8x8xf32, #tpu.memory_space<vmem>>, %arg2: memref<72x16xf32, #tpu.memory_space<vmem>>, %arg3: memref<1x16xf32, #tpu.memory_space<vmem>>, %arg4: memref<144x22xf32, #tpu.memory_space<vmem>>, %arg5: memref<1x22xf32, #tpu.memory_space<vmem>>, %arg6: memref<8x96xf32, #tpu.memory_space<vmem>>, %arg7: memref<1x96xf32, #tpu.memory_space<vmem>>, %arg8: memref<16x16xf32, #tpu.memory_space<vmem>>, %arg9: memref<1x16xf32, #tpu.memory_space<vmem>>, %arg10: memref<1x6x128xf32, #tpu.memory_space<vmem>>, %arg11: memref<20x10x16xf32, #tpu.memory_space<vmem>>) attributes {dimension_semantics = [#tpu.dimension_semantics<parallel>], iteration_bounds = array<i64: 2>, scalar_prefetch = 0 : i64, scratch_operands = 1 : i64, tpu.core_type = #tpu.core_type<tc>, window_params = [{transform_indices = @transform_0, window_bounds = array<i64: 2, 8, 8, 8>}, {pipeline_mode = #tpu.pipeline_mode<synchronous>, transform_indices = @transform_1, window_bounds = array<i64: 72, 16>}, {pipeline_mode = #tpu.pipeline_mode<synchronous>, transform_indices = @transform_2, window_bounds = array<i64: 1, 16>}, {pipeline_mode = #tpu.pipeline_mode<synchronous>, transform_indices = @transform_3, window_bounds = array<i64: 144, 22>}, {pipeline_mode = #tpu.pipeline_mode<synchronous>, transform_indices = @transform_4, window_bounds = array<i64: 1, 22>}, {pipeline_mode = #tpu.pipeline_mode<synchronous>, transform_indices = @transform_5, window_bounds = array<i64: 8, 96>}, {pipeline_mode = #tpu.pipeline_mode<synchronous>, transform_indices = @transform_6, window_bounds = array<i64: 1, 96>}, {pipeline_mode = #tpu.pipeline_mode<synchronous>, transform_indices = @transform_7, window_bounds = array<i64: 16, 16>}, {pipeline_mode = #tpu.pipeline_mode<synchronous>, transform_indices = @transform_8, window_bounds = array<i64: 1, 16>}, {transform_indices = @transform_9, window_bounds = array<i64: 1, 6, 128>}]} {
    %cst = arith.constant 0.000000e+00 : f32
    %0 = vector.broadcast %cst : f32 to vector<1x10x16xf32>
    %cst_0 = arith.constant 0.000000e+00 : f32
    %1 = vector.broadcast %cst_0 : f32 to vector<10x1x16xf32>
    %c0 = arith.constant 0 : index
    %c0_1 = arith.constant 0 : index
    %c0_2 = arith.constant 0 : index
    %2 = vector.load %arg11[%c0, %c0_1, %c0_2] : memref<20x10x16xf32, #tpu.memory_space<vmem>>, vector<1x10x16xf32>
    tpu.vector_store %arg11[%c0, %c0_1, %c0_2], %0 {strides = array<i32>} : memref<20x10x16xf32, #tpu.memory_space<vmem>>, vector<1x10x16xf32>,
    %c9 = arith.constant 9 : index
    %c0_3 = arith.constant 0 : index
    %c0_4 = arith.constant 0 : index
    %3 = vector.load %arg11[%c9, %c0_3, %c0_4] : memref<20x10x16xf32, #tpu.memory_space<vmem>>, vector<1x10x16xf32>
    tpu.vector_store %arg11[%c9, %c0_3, %c0_4], %0 {strides = array<i32>} : memref<20x10x16xf32, #tpu.memory_space<vmem>>, vector<1x10x16xf32>,
    %c0_5 = arith.constant 0 : index
    %c0_6 = arith.constant 0 : index
    %c0_7 = arith.constant 0 : index
    %4 = vector.load %arg11[%c0_5, %c0_6, %c0_7] : memref<20x10x16xf32, #tpu.memory_space<vmem>>, vector<10x1x16xf32>
    tpu.vector_store %arg11[%c0_5, %c0_6, %c0_7], %1 {strides = array<i32>} : memref<20x10x16xf32, #tpu.memory_space<vmem>>, vector<10x1x16xf32>,
    %c0_8 = arith.constant 0 : index
    %c9_9 = arith.constant 9 : index
    %c0_10 = arith.constant 0 : index
    %5 = vector.load %arg11[%c0_8, %c9_9, %c0_10] : memref<20x10x16xf32, #tpu.memory_space<vmem>>, vector<10x1x16xf32>
    tpu.vector_store %arg11[%c0_8, %c9_9, %c0_10], %1 {strides = array<i32>} : memref<20x10x16xf32, #tpu.memory_space<vmem>>, vector<10x1x16xf32>,
    %c10 = arith.constant 10 : index
    %c0_11 = arith.constant 0 : index
    %c0_12 = arith.constant 0 : index
    %6 = vector.load %arg11[%c10, %c0_11, %c0_12] : memref<20x10x16xf32, #tpu.memory_space<vmem>>, vector<1x10x16xf32>
    tpu.vector_store %arg11[%c10, %c0_11, %c0_12], %0 {strides = array<i32>} : memref<20x10x16xf32, #tpu.memory_space<vmem>>, vector<1x10x16xf32>,
    %c19 = arith.constant 19 : index
    %c0_13 = arith.constant 0 : index
    %c0_14 = arith.constant 0 : index
    %7 = vector.load %arg11[%c19, %c0_13, %c0_14] : memref<20x10x16xf32, #tpu.memory_space<vmem>>, vector<1x10x16xf32>
    tpu.vector_store %arg11[%c19, %c0_13, %c0_14], %0 {strides = array<i32>} : memref<20x10x16xf32, #tpu.memory_space<vmem>>, vector<1x10x16xf32>,
    %c10_15 = arith.constant 10 : index
    %c0_16 = arith.constant 0 : index
    %c0_17 = arith.constant 0 : index
    %8 = vector.load %arg11[%c10_15, %c0_16, %c0_17] : memref<20x10x16xf32, #tpu.memory_space<vmem>>, vector<10x1x16xf32>
    tpu.vector_store %arg11[%c10_15, %c0_16, %c0_17], %1 {strides = array<i32>} : memref<20x10x16xf32, #tpu.memory_space<vmem>>, vector<10x1x16xf32>,
    %c10_18 = arith.constant 10 : index
    %c9_19 = arith.constant 9 : index
    %c0_20 = arith.constant 0 : index
    %9 = vector.load %arg11[%c10_18, %c9_19, %c0_20] : memref<20x10x16xf32, #tpu.memory_space<vmem>>, vector<10x1x16xf32>
    tpu.vector_store %arg11[%c10_18, %c9_19, %c0_20], %1 {strides = array<i32>} : memref<20x10x16xf32, #tpu.memory_space<vmem>>, vector<10x1x16xf32>,
    %c0_21 = arith.constant 0 : index
    %c0_22 = arith.constant 0 : index
    %c0_23 = arith.constant 0 : index
    %c0_24 = arith.constant 0 : index
    %10 = vector.load %arg1[%c0_21, %c0_22, %c0_23, %c0_24] : memref<2x8x8x8xf32, #tpu.memory_space<vmem>>, vector<2x8x8x8xf32>
    %11 = vector.extract_strided_slice %10 {offsets = [0, 0, 0, 0], sizes = [1, 8, 8, 8], strides = [1, 1, 1, 1]} : vector<2x8x8x8xf32> to vector<1x8x8x8xf32>
    %12 = vector.shape_cast %11 : vector<1x8x8x8xf32> to vector<8x8x8xf32>
    %c1 = arith.constant 1 : index
    %c1_25 = arith.constant 1 : index
    %c0_26 = arith.constant 0 : index
    %13 = vector.load %arg11[%c1, %c1_25, %c0_26] : memref<20x10x16xf32, #tpu.memory_space<vmem>>, vector<8x8x8xf32>
    tpu.vector_store %arg11[%c1, %c1_25, %c0_26], %12 {strides = array<i32>} : memref<20x10x16xf32, #tpu.memory_space<vmem>>, vector<8x8x8xf32>,
    %c0_27 = arith.constant 0 : index
    %c0_28 = arith.constant 0 : index
    %c0_29 = arith.constant 0 : index
    %14 = vector.load %arg11[%c0_27, %c0_28, %c0_29] : memref<20x10x16xf32, #tpu.memory_space<vmem>>, vector<8x8x8xf32>
    %c0_30 = arith.constant 0 : index
    %c1_31 = arith.constant 1 : index
    %c0_32 = arith.constant 0 : index
    %15 = vector.load %arg11[%c0_30, %c1_31, %c0_32] : memref<20x10x16xf32, #tpu.memory_space<vmem>>, vector<8x8x8xf32>
    %c0_33 = arith.constant 0 : index
    %c2 = arith.constant 2 : index
    %c0_34 = arith.constant 0 : index
    %16 = vector.load %arg11[%c0_33, %c2, %c0_34] : memref<20x10x16xf32, #tpu.memory_space<vmem>>, vector<8x8x8xf32>
    %c1_35 = arith.constant 1 : index
    %c0_36 = arith.constant 0 : index
    %c0_37 = arith.constant 0 : index
    %17 = vector.load %arg11[%c1_35, %c0_36, %c0_37] : memref<20x10x16xf32, #tpu.memory_space<vmem>>, vector<8x8x8xf32>
    %c1_38 = arith.constant 1 : index
    %c1_39 = arith.constant 1 : index
    %c0_40 = arith.constant 0 : index
    %18 = vector.load %arg11[%c1_38, %c1_39, %c0_40] : memref<20x10x16xf32, #tpu.memory_space<vmem>>, vector<8x8x8xf32>
    %c1_41 = arith.constant 1 : index
    %c2_42 = arith.constant 2 : index
    %c0_43 = arith.constant 0 : index
    %19 = vector.load %arg11[%c1_41, %c2_42, %c0_43] : memref<20x10x16xf32, #tpu.memory_space<vmem>>, vector<8x8x8xf32>
    %c2_44 = arith.constant 2 : index
    %c0_45 = arith.constant 0 : index
    %c0_46 = arith.constant 0 : index
    %20 = vector.load %arg11[%c2_44, %c0_45, %c0_46] : memref<20x10x16xf32, #tpu.memory_space<vmem>>, vector<8x8x8xf32>
    %c2_47 = arith.constant 2 : index
    %c1_48 = arith.constant 1 : index
    %c0_49 = arith.constant 0 : index
    %21 = vector.load %arg11[%c2_47, %c1_48, %c0_49] : memref<20x10x16xf32, #tpu.memory_space<vmem>>, vector<8x8x8xf32>
    %c2_50 = arith.constant 2 : index
    %c2_51 = arith.constant 2 : index
    %c0_52 = arith.constant 0 : index
    %22 = vector.load %arg11[%c2_50, %c2_51, %c0_52] : memref<20x10x16xf32, #tpu.memory_space<vmem>>, vector<8x8x8xf32>
    %23 = tpu.concatenate %14, %15, %16, %17, %18, %19, %20, %21, %22 in 2 : vector<8x8x8xf32>, vector<8x8x8xf32>, vector<8x8x8xf32>, vector<8x8x8xf32>, vector<8x8x8xf32>, vector<8x8x8xf32>, vector<8x8x8xf32>, vector<8x8x8xf32>, vector<8x8x8xf32> -> vector<8x8x72xf32>
    %24 = vector.shape_cast %23 : vector<8x8x72xf32> to vector<64x72xf32>
    %25 = vector.extract_strided_slice %10 {offsets = [1, 0, 0, 0], sizes = [1, 8, 8, 8], strides = [1, 1, 1, 1]} : vector<2x8x8x8xf32> to vector<1x8x8x8xf32>
    %26 = vector.shape_cast %25 : vector<1x8x8x8xf32> to vector<8x8x8xf32>
    %c11 = arith.constant 11 : index
    %c1_53 = arith.constant 1 : index
    %c0_54 = arith.constant 0 : index
    %27 = vector.load %arg11[%c11, %c1_53, %c0_54] : memref<20x10x16xf32, #tpu.memory_space<vmem>>, vector<8x8x8xf32>
    tpu.vector_store %arg11[%c11, %c1_53, %c0_54], %26 {strides = array<i32>} : memref<20x10x16xf32, #tpu.memory_space<vmem>>, vector<8x8x8xf32>,
    %c10_55 = arith.constant 10 : index
    %c0_56 = arith.constant 0 : index
    %c0_57 = arith.constant 0 : index
    %28 = vector.load %arg11[%c10_55, %c0_56, %c0_57] : memref<20x10x16xf32, #tpu.memory_space<vmem>>, vector<8x8x8xf32>
    %c10_58 = arith.constant 10 : index
    %c1_59 = arith.constant 1 : index
    %c0_60 = arith.constant 0 : index
    %29 = vector.load %arg11[%c10_58, %c1_59, %c0_60] : memref<20x10x16xf32, #tpu.memory_space<vmem>>, vector<8x8x8xf32>
    %c10_61 = arith.constant 10 : index
    %c2_62 = arith.constant 2 : index
    %c0_63 = arith.constant 0 : index
    %30 = vector.load %arg11[%c10_61, %c2_62, %c0_63] : memref<20x10x16xf32, #tpu.memory_space<vmem>>, vector<8x8x8xf32>
    %c11_64 = arith.constant 11 : index
    %c0_65 = arith.constant 0 : index
    %c0_66 = arith.constant 0 : index
    %31 = vector.load %arg11[%c11_64, %c0_65, %c0_66] : memref<20x10x16xf32, #tpu.memory_space<vmem>>, vector<8x8x8xf32>
    %c11_67 = arith.constant 11 : index
    %c1_68 = arith.constant 1 : index
    %c0_69 = arith.constant 0 : index
    %32 = vector.load %arg11[%c11_67, %c1_68, %c0_69] : memref<20x10x16xf32, #tpu.memory_space<vmem>>, vector<8x8x8xf32>
    %c11_70 = arith.constant 11 : index
    %c2_71 = arith.constant 2 : index
    %c0_72 = arith.constant 0 : index
    %33 = vector.load %arg11[%c11_70, %c2_71, %c0_72] : memref<20x10x16xf32, #tpu.memory_space<vmem>>, vector<8x8x8xf32>
    %c12 = arith.constant 12 : index
    %c0_73 = arith.constant 0 : index
    %c0_74 = arith.constant 0 : index
    %34 = vector.load %arg11[%c12, %c0_73, %c0_74] : memref<20x10x16xf32, #tpu.memory_space<vmem>>, vector<8x8x8xf32>
    %c12_75 = arith.constant 12 : index
    %c1_76 = arith.constant 1 : index
    %c0_77 = arith.constant 0 : index
    %35 = vector.load %arg11[%c12_75, %c1_76, %c0_77] : memref<20x10x16xf32, #tpu.memory_space<vmem>>, vector<8x8x8xf32>
    %c12_78 = arith.constant 12 : index
    %c2_79 = arith.constant 2 : index
    %c0_80 = arith.constant 0 : index
    %36 = vector.load %arg11[%c12_78, %c2_79, %c0_80] : memref<20x10x16xf32, #tpu.memory_space<vmem>>, vector<8x8x8xf32>
    %37 = tpu.concatenate %28, %29, %30, %31, %32, %33, %34, %35, %36 in 2 : vector<8x8x8xf32>, vector<8x8x8xf32>, vector<8x8x8xf32>, vector<8x8x8xf32>, vector<8x8x8xf32>, vector<8x8x8xf32>, vector<8x8x8xf32>, vector<8x8x8xf32>, vector<8x8x8xf32> -> vector<8x8x72xf32>
    %38 = vector.shape_cast %37 : vector<8x8x72xf32> to vector<64x72xf32>
    %39 = tpu.concatenate %24, %38 in 0 : vector<64x72xf32>, vector<64x72xf32> -> vector<128x72xf32>
    %c0_81 = arith.constant 0 : index
    %c0_82 = arith.constant 0 : index
    %40 = vector.load %arg2[%c0_81, %c0_82] : memref<72x16xf32, #tpu.memory_space<vmem>>, vector<72x16xf32>
    %cst_83 = arith.constant dense<0.000000e+00> : vector<128x16xf32>
    %41 = tpu.matmul %39, %40, %cst_83 {dimension_numbers = #tpu.dot_dimension_numbers<[1], [0], [0], [1], [0, 0, 1, 1], [], []>} : vector<128x72xf32>, vector<72x16xf32>, vector<128x16xf32> -> vector<128x16xf32>
    %c0_84 = arith.constant 0 : index
    %c0_85 = arith.constant 0 : index
    %42 = vector.load %arg3[%c0_84, %c0_85] : memref<1x16xf32, #tpu.memory_space<vmem>>, vector<1x16xf32>
    %43 = vector.broadcast %42 : vector<1x16xf32> to vector<128x16xf32>
    %44 = arith.addf %41, %43 : vector<128x16xf32>
    %cst_86 = arith.constant 0.000000e+00 : f32
    %45 = vector.broadcast %cst_86 : f32 to vector<128x16xf32>
    %46 = arith.maximumf %44, %45 : vector<128x16xf32>
    %47 = vector.extract_strided_slice %46 {offsets = [0, 0], sizes = [128, 8], strides = [1, 1]} : vector<128x16xf32> to vector<128x8xf32>
    %48 = vector.extract_strided_slice %46 {offsets = [0, 8], sizes = [128, 8], strides = [1, 1]} : vector<128x16xf32> to vector<128x8xf32>
    %c0_87 = arith.constant 0 : index
    %c0_88 = arith.constant 0 : index
    %49 = vector.load %arg6[%c0_87, %c0_88] : memref<8x96xf32, #tpu.memory_space<vmem>>, vector<8x48xf32>
    %cst_89 = arith.constant dense<0.000000e+00> : vector<128x48xf32>
    %50 = tpu.matmul %47, %49, %cst_89 {dimension_numbers = #tpu.dot_dimension_numbers<[1], [0], [0], [1], [0, 0, 1, 1], [], []>} : vector<128x8xf32>, vector<8x48xf32>, vector<128x48xf32> -> vector<128x48xf32>
    %c0_90 = arith.constant 0 : index
    %c0_91 = arith.constant 0 : index
    %51 = vector.load %arg7[%c0_90, %c0_91] : memref<1x96xf32, #tpu.memory_space<vmem>>, vector<1x48xf32>
    %52 = vector.broadcast %51 : vector<1x48xf32> to vector<128x48xf32>
    %53 = arith.addf %50, %52 : vector<128x48xf32>
    %cst_92 = arith.constant 0.000000e+00 : f32
    %54 = vector.broadcast %cst_92 : f32 to vector<128x48xf32>
    %55 = arith.maximumf %53, %54 : vector<128x48xf32>
    %c0_93 = arith.constant 0 : index
    %c48 = arith.constant 48 : index
    %56 = vector.load %arg6[%c0_93, %c48] : memref<8x96xf32, #tpu.memory_space<vmem>>, vector<8x48xf32>
    %cst_94 = arith.constant dense<0.000000e+00> : vector<128x48xf32>
    %57 = tpu.matmul %48, %56, %cst_94 {dimension_numbers = #tpu.dot_dimension_numbers<[1], [0], [0], [1], [0, 0, 1, 1], [], []>} : vector<128x8xf32>, vector<8x48xf32>, vector<128x48xf32> -> vector<128x48xf32>
    %c0_95 = arith.constant 0 : index
    %c48_96 = arith.constant 48 : index
    %58 = vector.load %arg7[%c0_95, %c48_96] : memref<1x96xf32, #tpu.memory_space<vmem>>, vector<1x48xf32>
    %59 = vector.broadcast %58 : vector<1x48xf32> to vector<128x48xf32>
    %60 = arith.addf %57, %59 : vector<128x48xf32>
    %cst_97 = arith.constant 0.000000e+00 : f32
    %61 = vector.broadcast %cst_97 : f32 to vector<128x48xf32>
    %62 = arith.maximumf %60, %61 : vector<128x48xf32>
    %63 = vector.extract_strided_slice %55 {offsets = [0, 0], sizes = [64, 16], strides = [1, 1]} : vector<128x48xf32> to vector<64x16xf32>
    %64 = vector.extract_strided_slice %55 {offsets = [0, 16], sizes = [64, 16], strides = [1, 1]} : vector<128x48xf32> to vector<64x16xf32>
    %65 = vector.extract_strided_slice %55 {offsets = [0, 32], sizes = [64, 16], strides = [1, 1]} : vector<128x48xf32> to vector<64x16xf32>
    %cst_98 = arith.constant dense<0.000000e+00> : vector<64x64xf32>
    %66 = tpu.matmul %64, %65, %cst_98 {dimension_numbers = #tpu.dot_dimension_numbers<[1], [1], [0], [0], [0, 0, 1, 0], [], []>} : vector<64x16xf32>, vector<64x16xf32>, vector<64x64xf32> -> vector<64x64xf32>
    %cst_99 = arith.constant dense<0xFF800000> : vector<64xf32>
    %67 = vector.multi_reduction <maximumf>, %66, %cst_99 [1] : vector<64x64xf32> to vector<64xf32>
    %68 = vector.shape_cast %67 : vector<64xf32> to vector<64x1xf32>
    %69 = vector.broadcast %68 : vector<64x1xf32> to vector<64x64xf32>
    %70 = arith.subf %66, %69 : vector<64x64xf32>
    %71 = math.exp %70 : vector<64x64xf32>
    %cst_100 = arith.constant dense<0.000000e+00> : vector<64xf32>
    %72 = vector.multi_reduction <add>, %71, %cst_100 [1] : vector<64x64xf32> to vector<64xf32>
    %73 = vector.shape_cast %72 : vector<64xf32> to vector<64x1xf32>
    %74 = vector.broadcast %73 : vector<64x1xf32> to vector<64x64xf32>
    %75 = arith.divf %71, %74 : vector<64x64xf32>
    %cst_101 = arith.constant dense<0.000000e+00> : vector<64x16xf32>
    %76 = tpu.matmul %75, %63, %cst_101 {dimension_numbers = #tpu.dot_dimension_numbers<[1], [0], [0], [1], [0, 0, 1, 1], [], []>} : vector<64x64xf32>, vector<64x16xf32>, vector<64x16xf32> -> vector<64x16xf32>
    %77 = vector.extract_strided_slice %62 {offsets = [0, 0], sizes = [64, 16], strides = [1, 1]} : vector<128x48xf32> to vector<64x16xf32>
    %78 = vector.extract_strided_slice %62 {offsets = [0, 16], sizes = [64, 16], strides = [1, 1]} : vector<128x48xf32> to vector<64x16xf32>
    %79 = vector.extract_strided_slice %62 {offsets = [0, 32], sizes = [64, 16], strides = [1, 1]} : vector<128x48xf32> to vector<64x16xf32>
    %cst_102 = arith.constant dense<0.000000e+00> : vector<16x16xf32>
    %80 = tpu.matmul %78, %79, %cst_102 {dimension_numbers = #tpu.dot_dimension_numbers<[0], [0], [1], [1], [0, 1, 1, 1], [], []>} : vector<64x16xf32>, vector<64x16xf32>, vector<16x16xf32> -> vector<16x16xf32>
    %cst_103 = arith.constant dense<0xFF800000> : vector<16xf32>
    %81 = vector.multi_reduction <maximumf>, %80, %cst_103 [1] : vector<16x16xf32> to vector<16xf32>
    %82 = vector.shape_cast %81 : vector<16xf32> to vector<16x1xf32>
    %83 = vector.broadcast %82 : vector<16x1xf32> to vector<16x16xf32>
    %84 = arith.subf %80, %83 : vector<16x16xf32>
    %85 = math.exp %84 : vector<16x16xf32>
    %cst_104 = arith.constant dense<0.000000e+00> : vector<16xf32>
    %86 = vector.multi_reduction <add>, %85, %cst_104 [1] : vector<16x16xf32> to vector<16xf32>
    %87 = vector.shape_cast %86 : vector<16xf32> to vector<16x1xf32>
    %88 = vector.broadcast %87 : vector<16x1xf32> to vector<16x16xf32>
    %89 = arith.divf %85, %88 : vector<16x16xf32>
    %cst_105 = arith.constant dense<0.000000e+00> : vector<64x16xf32>
    %90 = tpu.matmul %77, %89, %cst_105 {dimension_numbers = #tpu.dot_dimension_numbers<[1], [1], [0], [0], [0, 0, 1, 0], [], []>} : vector<64x16xf32>, vector<16x16xf32>, vector<64x16xf32> -> vector<64x16xf32>
    %91 = vector.shape_cast %90 : vector<64x16xf32> to vector<16x4x16xf32>
    %92 = vector.extract_strided_slice %91 {offsets = [0, 0, 0], sizes = [16, 1, 16], strides = [1, 1, 1]} : vector<16x4x16xf32> to vector<16x1x16xf32>
    %93 = vector.shape_cast %92 : vector<16x1x16xf32> to vector<16x16xf32>
    %94 = vector.extract_strided_slice %91 {offsets = [0, 1, 0], sizes = [16, 1, 16], strides = [1, 1, 1]} : vector<16x4x16xf32> to vector<16x1x16xf32>
    %95 = vector.shape_cast %94 : vector<16x1x16xf32> to vector<16x16xf32>
    %96 = vector.extract_strided_slice %91 {offsets = [0, 2, 0], sizes = [16, 1, 16], strides = [1, 1, 1]} : vector<16x4x16xf32> to vector<16x1x16xf32>
    %97 = vector.shape_cast %96 : vector<16x1x16xf32> to vector<16x16xf32>
    %98 = vector.extract_strided_slice %91 {offsets = [0, 3, 0], sizes = [16, 1, 16], strides = [1, 1, 1]} : vector<16x4x16xf32> to vector<16x1x16xf32>
    %99 = vector.shape_cast %98 : vector<16x1x16xf32> to vector<16x16xf32>
    %100 = tpu.concatenate %93, %95, %97, %99 in 1 : vector<16x16xf32>, vector<16x16xf32>, vector<16x16xf32>, vector<16x16xf32> -> vector<16x64xf32>
    %101 = vector.extract_strided_slice %55 {offsets = [64, 0], sizes = [64, 16], strides = [1, 1]} : vector<128x48xf32> to vector<64x16xf32>
    %102 = vector.extract_strided_slice %55 {offsets = [64, 16], sizes = [64, 16], strides = [1, 1]} : vector<128x48xf32> to vector<64x16xf32>
    %103 = vector.extract_strided_slice %55 {offsets = [64, 32], sizes = [64, 16], strides = [1, 1]} : vector<128x48xf32> to vector<64x16xf32>
    %cst_106 = arith.constant dense<0.000000e+00> : vector<64x64xf32>
    %104 = tpu.matmul %102, %103, %cst_106 {dimension_numbers = #tpu.dot_dimension_numbers<[1], [1], [0], [0], [0, 0, 1, 0], [], []>} : vector<64x16xf32>, vector<64x16xf32>, vector<64x64xf32> -> vector<64x64xf32>
    %cst_107 = arith.constant dense<0xFF800000> : vector<64xf32>
    %105 = vector.multi_reduction <maximumf>, %104, %cst_107 [1] : vector<64x64xf32> to vector<64xf32>
    %106 = vector.shape_cast %105 : vector<64xf32> to vector<64x1xf32>
    %107 = vector.broadcast %106 : vector<64x1xf32> to vector<64x64xf32>
    %108 = arith.subf %104, %107 : vector<64x64xf32>
    %109 = math.exp %108 : vector<64x64xf32>
    %cst_108 = arith.constant dense<0.000000e+00> : vector<64xf32>
    %110 = vector.multi_reduction <add>, %109, %cst_108 [1] : vector<64x64xf32> to vector<64xf32>
    %111 = vector.shape_cast %110 : vector<64xf32> to vector<64x1xf32>
    %112 = vector.broadcast %111 : vector<64x1xf32> to vector<64x64xf32>
    %113 = arith.divf %109, %112 : vector<64x64xf32>
    %cst_109 = arith.constant dense<0.000000e+00> : vector<64x16xf32>
    %114 = tpu.matmul %113, %101, %cst_109 {dimension_numbers = #tpu.dot_dimension_numbers<[1], [0], [0], [1], [0, 0, 1, 1], [], []>} : vector<64x64xf32>, vector<64x16xf32>, vector<64x16xf32> -> vector<64x16xf32>
    %115 = vector.extract_strided_slice %62 {offsets = [64, 0], sizes = [64, 16], strides = [1, 1]} : vector<128x48xf32> to vector<64x16xf32>
    %116 = vector.extract_strided_slice %62 {offsets = [64, 16], sizes = [64, 16], strides = [1, 1]} : vector<128x48xf32> to vector<64x16xf32>
    %117 = vector.extract_strided_slice %62 {offsets = [64, 32], sizes = [64, 16], strides = [1, 1]} : vector<128x48xf32> to vector<64x16xf32>
    %cst_110 = arith.constant dense<0.000000e+00> : vector<16x16xf32>
    %118 = tpu.matmul %116, %117, %cst_110 {dimension_numbers = #tpu.dot_dimension_numbers<[0], [0], [1], [1], [0, 1, 1, 1], [], []>} : vector<64x16xf32>, vector<64x16xf32>, vector<16x16xf32> -> vector<16x16xf32>
    %cst_111 = arith.constant dense<0xFF800000> : vector<16xf32>
    %119 = vector.multi_reduction <maximumf>, %118, %cst_111 [1] : vector<16x16xf32> to vector<16xf32>
    %120 = vector.shape_cast %119 : vector<16xf32> to vector<16x1xf32>
    %121 = vector.broadcast %120 : vector<16x1xf32> to vector<16x16xf32>
    %122 = arith.subf %118, %121 : vector<16x16xf32>
    %123 = math.exp %122 : vector<16x16xf32>
    %cst_112 = arith.constant dense<0.000000e+00> : vector<16xf32>
    %124 = vector.multi_reduction <add>, %123, %cst_112 [1] : vector<16x16xf32> to vector<16xf32>
    %125 = vector.shape_cast %124 : vector<16xf32> to vector<16x1xf32>
    %126 = vector.broadcast %125 : vector<16x1xf32> to vector<16x16xf32>
    %127 = arith.divf %123, %126 : vector<16x16xf32>
    %cst_113 = arith.constant dense<0.000000e+00> : vector<64x16xf32>
    %128 = tpu.matmul %115, %127, %cst_113 {dimension_numbers = #tpu.dot_dimension_numbers<[1], [1], [0], [0], [0, 0, 1, 0], [], []>} : vector<64x16xf32>, vector<16x16xf32>, vector<64x16xf32> -> vector<64x16xf32>
    %129 = vector.shape_cast %128 : vector<64x16xf32> to vector<16x4x16xf32>
    %130 = vector.extract_strided_slice %129 {offsets = [0, 0, 0], sizes = [16, 1, 16], strides = [1, 1, 1]} : vector<16x4x16xf32> to vector<16x1x16xf32>
    %131 = vector.shape_cast %130 : vector<16x1x16xf32> to vector<16x16xf32>
    %132 = vector.extract_strided_slice %129 {offsets = [0, 1, 0], sizes = [16, 1, 16], strides = [1, 1, 1]} : vector<16x4x16xf32> to vector<16x1x16xf32>
    %133 = vector.shape_cast %132 : vector<16x1x16xf32> to vector<16x16xf32>
    %134 = vector.extract_strided_slice %129 {offsets = [0, 2, 0], sizes = [16, 1, 16], strides = [1, 1, 1]} : vector<16x4x16xf32> to vector<16x1x16xf32>
    %135 = vector.shape_cast %134 : vector<16x1x16xf32> to vector<16x16xf32>
    %136 = vector.extract_strided_slice %129 {offsets = [0, 3, 0], sizes = [16, 1, 16], strides = [1, 1, 1]} : vector<16x4x16xf32> to vector<16x1x16xf32>
    %137 = vector.shape_cast %136 : vector<16x1x16xf32> to vector<16x16xf32>
    %138 = tpu.concatenate %131, %133, %135, %137 in 1 : vector<16x16xf32>, vector<16x16xf32>, vector<16x16xf32>, vector<16x16xf32> -> vector<16x64xf32>
    %139 = tpu.concatenate %76, %114 in 0 : vector<64x16xf32>, vector<64x16xf32> -> vector<128x16xf32>
    %c0_114 = arith.constant 0 : index
    %c0_115 = arith.constant 0 : index
    %140 = vector.load %arg8[%c0_114, %c0_115] : memref<16x16xf32, #tpu.memory_space<vmem>>, vector<16x8xf32>
    %cst_116 = arith.constant dense<0.000000e+00> : vector<128x8xf32>
    %141 = tpu.matmul %139, %140, %cst_116 {dimension_numbers = #tpu.dot_dimension_numbers<[1], [0], [0], [1], [0, 0, 1, 1], [], []>} : vector<128x16xf32>, vector<16x8xf32>, vector<128x8xf32> -> vector<128x8xf32>
    %c0_117 = arith.constant 0 : index
    %c0_118 = arith.constant 0 : index
    %142 = vector.load %arg9[%c0_117, %c0_118] : memref<1x16xf32, #tpu.memory_space<vmem>>, vector<1x8xf32>
    %143 = vector.broadcast %142 : vector<1x8xf32> to vector<128x8xf32>
    %144 = arith.addf %141, %143 : vector<128x8xf32>
    %145 = arith.addf %144, %47 : vector<128x8xf32>
    %146 = tpu.concatenate %100, %138 in 1 : vector<16x64xf32>, vector<16x64xf32> -> vector<16x128xf32>
    %c0_119 = arith.constant 0 : index
    %c8 = arith.constant 8 : index
    %147 = vector.load %arg8[%c0_119, %c8] : memref<16x16xf32, #tpu.memory_space<vmem>>, vector<16x8xf32>
    %cst_120 = arith.constant dense<0.000000e+00> : vector<128x8xf32>
    %148 = tpu.matmul %146, %147, %cst_120 {dimension_numbers = #tpu.dot_dimension_numbers<[0], [0], [1], [1], [0, 1, 1, 1], [], []>} : vector<16x128xf32>, vector<16x8xf32>, vector<128x8xf32> -> vector<128x8xf32>
    %c0_121 = arith.constant 0 : index
    %c8_122 = arith.constant 8 : index
    %149 = vector.load %arg9[%c0_121, %c8_122] : memref<1x16xf32, #tpu.memory_space<vmem>>, vector<1x8xf32>
    %150 = vector.broadcast %149 : vector<1x8xf32> to vector<128x8xf32>
    %151 = arith.addf %148, %150 : vector<128x8xf32>
    %152 = arith.addf %151, %48 : vector<128x8xf32>
    %153 = vector.shape_cast %145 : vector<128x8xf32> to vector<2x8x8x8xf32>
    %154 = vector.shape_cast %152 : vector<128x8xf32> to vector<2x8x8x8xf32>
    %155 = tpu.concatenate %153, %154 in 3 : vector<2x8x8x8xf32>, vector<2x8x8x8xf32> -> vector<2x8x8x16xf32>
    %156 = vector.extract_strided_slice %155 {offsets = [0, 0, 0, 0], sizes = [1, 8, 8, 16], strides = [1, 1, 1, 1]} : vector<2x8x8x16xf32> to vector<1x8x8x16xf32>
    %157 = vector.shape_cast %156 : vector<1x8x8x16xf32> to vector<8x8x16xf32>
    %c1_123 = arith.constant 1 : index
    %c1_124 = arith.constant 1 : index
    %c0_125 = arith.constant 0 : index
    %158 = vector.load %arg11[%c1_123, %c1_124, %c0_125] : memref<20x10x16xf32, #tpu.memory_space<vmem>>, vector<8x8x16xf32>
    tpu.vector_store %arg11[%c1_123, %c1_124, %c0_125], %157 {strides = array<i32>} : memref<20x10x16xf32, #tpu.memory_space<vmem>>, vector<8x8x16xf32>,
    %c0_126 = arith.constant 0 : index
    %c0_127 = arith.constant 0 : index
    %c0_128 = arith.constant 0 : index
    %159 = vector.load %arg11[%c0_126, %c0_127, %c0_128] : memref<20x10x16xf32, #tpu.memory_space<vmem>>, vector<8x8x16xf32>
    %c0_129 = arith.constant 0 : index
    %c1_130 = arith.constant 1 : index
    %c0_131 = arith.constant 0 : index
    %160 = vector.load %arg11[%c0_129, %c1_130, %c0_131] : memref<20x10x16xf32, #tpu.memory_space<vmem>>, vector<8x8x16xf32>
    %c0_132 = arith.constant 0 : index
    %c2_133 = arith.constant 2 : index
    %c0_134 = arith.constant 0 : index
    %161 = vector.load %arg11[%c0_132, %c2_133, %c0_134] : memref<20x10x16xf32, #tpu.memory_space<vmem>>, vector<8x8x16xf32>
    %c1_135 = arith.constant 1 : index
    %c0_136 = arith.constant 0 : index
    %c0_137 = arith.constant 0 : index
    %162 = vector.load %arg11[%c1_135, %c0_136, %c0_137] : memref<20x10x16xf32, #tpu.memory_space<vmem>>, vector<8x8x16xf32>
    %c1_138 = arith.constant 1 : index
    %c1_139 = arith.constant 1 : index
    %c0_140 = arith.constant 0 : index
    %163 = vector.load %arg11[%c1_138, %c1_139, %c0_140] : memref<20x10x16xf32, #tpu.memory_space<vmem>>, vector<8x8x16xf32>
    %c1_141 = arith.constant 1 : index
    %c2_142 = arith.constant 2 : index
    %c0_143 = arith.constant 0 : index
    %164 = vector.load %arg11[%c1_141, %c2_142, %c0_143] : memref<20x10x16xf32, #tpu.memory_space<vmem>>, vector<8x8x16xf32>
    %c2_144 = arith.constant 2 : index
    %c0_145 = arith.constant 0 : index
    %c0_146 = arith.constant 0 : index
    %165 = vector.load %arg11[%c2_144, %c0_145, %c0_146] : memref<20x10x16xf32, #tpu.memory_space<vmem>>, vector<8x8x16xf32>
    %c2_147 = arith.constant 2 : index
    %c1_148 = arith.constant 1 : index
    %c0_149 = arith.constant 0 : index
    %166 = vector.load %arg11[%c2_147, %c1_148, %c0_149] : memref<20x10x16xf32, #tpu.memory_space<vmem>>, vector<8x8x16xf32>
    %c2_150 = arith.constant 2 : index
    %c2_151 = arith.constant 2 : index
    %c0_152 = arith.constant 0 : index
    %167 = vector.load %arg11[%c2_150, %c2_151, %c0_152] : memref<20x10x16xf32, #tpu.memory_space<vmem>>, vector<8x8x16xf32>
    %168 = tpu.concatenate %159, %160, %161, %162, %163, %164, %165, %166, %167 in 2 : vector<8x8x16xf32>, vector<8x8x16xf32>, vector<8x8x16xf32>, vector<8x8x16xf32>, vector<8x8x16xf32>, vector<8x8x16xf32>, vector<8x8x16xf32>, vector<8x8x16xf32>, vector<8x8x16xf32> -> vector<8x8x144xf32>
    %169 = vector.shape_cast %168 : vector<8x8x144xf32> to vector<64x144xf32>
    %170 = vector.extract_strided_slice %155 {offsets = [1, 0, 0, 0], sizes = [1, 8, 8, 16], strides = [1, 1, 1, 1]} : vector<2x8x8x16xf32> to vector<1x8x8x16xf32>
    %171 = vector.shape_cast %170 : vector<1x8x8x16xf32> to vector<8x8x16xf32>
    %c11_153 = arith.constant 11 : index
    %c1_154 = arith.constant 1 : index
    %c0_155 = arith.constant 0 : index
    %172 = vector.load %arg11[%c11_153, %c1_154, %c0_155] : memref<20x10x16xf32, #tpu.memory_space<vmem>>, vector<8x8x16xf32>
    tpu.vector_store %arg11[%c11_153, %c1_154, %c0_155], %171 {strides = array<i32>} : memref<20x10x16xf32, #tpu.memory_space<vmem>>, vector<8x8x16xf32>,
    %c10_156 = arith.constant 10 : index
    %c0_157 = arith.constant 0 : index
    %c0_158 = arith.constant 0 : index
    %173 = vector.load %arg11[%c10_156, %c0_157, %c0_158] : memref<20x10x16xf32, #tpu.memory_space<vmem>>, vector<8x8x16xf32>
    %c10_159 = arith.constant 10 : index
    %c1_160 = arith.constant 1 : index
    %c0_161 = arith.constant 0 : index
    %174 = vector.load %arg11[%c10_159, %c1_160, %c0_161] : memref<20x10x16xf32, #tpu.memory_space<vmem>>, vector<8x8x16xf32>
    %c10_162 = arith.constant 10 : index
    %c2_163 = arith.constant 2 : index
    %c0_164 = arith.constant 0 : index
    %175 = vector.load %arg11[%c10_162, %c2_163, %c0_164] : memref<20x10x16xf32, #tpu.memory_space<vmem>>, vector<8x8x16xf32>
    %c11_165 = arith.constant 11 : index
    %c0_166 = arith.constant 0 : index
    %c0_167 = arith.constant 0 : index
    %176 = vector.load %arg11[%c11_165, %c0_166, %c0_167] : memref<20x10x16xf32, #tpu.memory_space<vmem>>, vector<8x8x16xf32>
    %c11_168 = arith.constant 11 : index
    %c1_169 = arith.constant 1 : index
    %c0_170 = arith.constant 0 : index
    %177 = vector.load %arg11[%c11_168, %c1_169, %c0_170] : memref<20x10x16xf32, #tpu.memory_space<vmem>>, vector<8x8x16xf32>
    %c11_171 = arith.constant 11 : index
    %c2_172 = arith.constant 2 : index
    %c0_173 = arith.constant 0 : index
    %178 = vector.load %arg11[%c11_171, %c2_172, %c0_173] : memref<20x10x16xf32, #tpu.memory_space<vmem>>, vector<8x8x16xf32>
    %c12_174 = arith.constant 12 : index
    %c0_175 = arith.constant 0 : index
    %c0_176 = arith.constant 0 : index
    %179 = vector.load %arg11[%c12_174, %c0_175, %c0_176] : memref<20x10x16xf32, #tpu.memory_space<vmem>>, vector<8x8x16xf32>
    %c12_177 = arith.constant 12 : index
    %c1_178 = arith.constant 1 : index
    %c0_179 = arith.constant 0 : index
    %180 = vector.load %arg11[%c12_177, %c1_178, %c0_179] : memref<20x10x16xf32, #tpu.memory_space<vmem>>, vector<8x8x16xf32>
    %c12_180 = arith.constant 12 : index
    %c2_181 = arith.constant 2 : index
    %c0_182 = arith.constant 0 : index
    %181 = vector.load %arg11[%c12_180, %c2_181, %c0_182] : memref<20x10x16xf32, #tpu.memory_space<vmem>>, vector<8x8x16xf32>
    %182 = tpu.concatenate %173, %174, %175, %176, %177, %178, %179, %180, %181 in 2 : vector<8x8x16xf32>, vector<8x8x16xf32>, vector<8x8x16xf32>, vector<8x8x16xf32>, vector<8x8x16xf32>, vector<8x8x16xf32>, vector<8x8x16xf32>, vector<8x8x16xf32>, vector<8x8x16xf32> -> vector<8x8x144xf32>
    %183 = vector.shape_cast %182 : vector<8x8x144xf32> to vector<64x144xf32>
    %184 = tpu.concatenate %169, %183 in 0 : vector<64x144xf32>, vector<64x144xf32> -> vector<128x144xf32>
    %c0_183 = arith.constant 0 : index
    %c0_184 = arith.constant 0 : index
    %185 = vector.load %arg4[%c0_183, %c0_184] : memref<144x22xf32, #tpu.memory_space<vmem>>, vector<144x16xf32>
    %cst_185 = arith.constant dense<0.000000e+00> : vector<128x16xf32>
    %186 = tpu.matmul %184, %185, %cst_185 {dimension_numbers = #tpu.dot_dimension_numbers<[1], [0], [0], [1], [0, 0, 1, 1], [], []>} : vector<128x144xf32>, vector<144x16xf32>, vector<128x16xf32> -> vector<128x16xf32>
    %c0_186 = arith.constant 0 : index
    %c0_187 = arith.constant 0 : index
    %187 = vector.load %arg5[%c0_186, %c0_187] : memref<1x22xf32, #tpu.memory_space<vmem>>, vector<1x16xf32>
    %188 = vector.broadcast %187 : vector<1x16xf32> to vector<128x16xf32>
    %189 = arith.addf %186, %188 : vector<128x16xf32>
    %cst_188 = arith.constant 0.000000e+00 : f32
    %190 = vector.broadcast %cst_188 : f32 to vector<128x16xf32>
    %191 = arith.maximumf %189, %190 : vector<128x16xf32>
    %192 = vector.shape_cast %191 : vector<128x16xf32> to vector<2x8x8x16xf32>
    %193 = vector.extract_strided_slice %192 {offsets = [0, 0, 0, 0], sizes = [1, 8, 8, 16], strides = [1, 1, 1, 1]} : vector<2x8x8x16xf32> to vector<1x8x8x16xf32>
    %194 = vector.shape_cast %193 : vector<1x8x8x16xf32> to vector<8x8x16xf32>
    %c1_189 = arith.constant 1 : index
    %c1_190 = arith.constant 1 : index
    %c0_191 = arith.constant 0 : index
    %195 = vector.load %arg11[%c1_189, %c1_190, %c0_191] : memref<20x10x16xf32, #tpu.memory_space<vmem>>, vector<8x8x16xf32>
    tpu.vector_store %arg11[%c1_189, %c1_190, %c0_191], %194 {strides = array<i32>} : memref<20x10x16xf32, #tpu.memory_space<vmem>>, vector<8x8x16xf32>,
    %c0_192 = arith.constant 0 : index
    %c0_193 = arith.constant 0 : index
    %c0_194 = arith.constant 0 : index
    %196 = vector.load %arg11[%c0_192, %c0_193, %c0_194] : memref<20x10x16xf32, #tpu.memory_space<vmem>>, vector<8x8x16xf32>
    %c0_195 = arith.constant 0 : index
    %c1_196 = arith.constant 1 : index
    %c0_197 = arith.constant 0 : index
    %197 = vector.load %arg11[%c0_195, %c1_196, %c0_197] : memref<20x10x16xf32, #tpu.memory_space<vmem>>, vector<8x8x16xf32>
    %c0_198 = arith.constant 0 : index
    %c2_199 = arith.constant 2 : index
    %c0_200 = arith.constant 0 : index
    %198 = vector.load %arg11[%c0_198, %c2_199, %c0_200] : memref<20x10x16xf32, #tpu.memory_space<vmem>>, vector<8x8x16xf32>
    %c1_201 = arith.constant 1 : index
    %c0_202 = arith.constant 0 : index
    %c0_203 = arith.constant 0 : index
    %199 = vector.load %arg11[%c1_201, %c0_202, %c0_203] : memref<20x10x16xf32, #tpu.memory_space<vmem>>, vector<8x8x16xf32>
    %c1_204 = arith.constant 1 : index
    %c1_205 = arith.constant 1 : index
    %c0_206 = arith.constant 0 : index
    %200 = vector.load %arg11[%c1_204, %c1_205, %c0_206] : memref<20x10x16xf32, #tpu.memory_space<vmem>>, vector<8x8x16xf32>
    %c1_207 = arith.constant 1 : index
    %c2_208 = arith.constant 2 : index
    %c0_209 = arith.constant 0 : index
    %201 = vector.load %arg11[%c1_207, %c2_208, %c0_209] : memref<20x10x16xf32, #tpu.memory_space<vmem>>, vector<8x8x16xf32>
    %c2_210 = arith.constant 2 : index
    %c0_211 = arith.constant 0 : index
    %c0_212 = arith.constant 0 : index
    %202 = vector.load %arg11[%c2_210, %c0_211, %c0_212] : memref<20x10x16xf32, #tpu.memory_space<vmem>>, vector<8x8x16xf32>
    %c2_213 = arith.constant 2 : index
    %c1_214 = arith.constant 1 : index
    %c0_215 = arith.constant 0 : index
    %203 = vector.load %arg11[%c2_213, %c1_214, %c0_215] : memref<20x10x16xf32, #tpu.memory_space<vmem>>, vector<8x8x16xf32>
    %c2_216 = arith.constant 2 : index
    %c2_217 = arith.constant 2 : index
    %c0_218 = arith.constant 0 : index
    %204 = vector.load %arg11[%c2_216, %c2_217, %c0_218] : memref<20x10x16xf32, #tpu.memory_space<vmem>>, vector<8x8x16xf32>
    %205 = tpu.concatenate %196, %197, %198, %199, %200, %201, %202, %203, %204 in 2 : vector<8x8x16xf32>, vector<8x8x16xf32>, vector<8x8x16xf32>, vector<8x8x16xf32>, vector<8x8x16xf32>, vector<8x8x16xf32>, vector<8x8x16xf32>, vector<8x8x16xf32>, vector<8x8x16xf32> -> vector<8x8x144xf32>
    %206 = vector.shape_cast %205 : vector<8x8x144xf32> to vector<64x144xf32>
    %207 = vector.extract_strided_slice %192 {offsets = [1, 0, 0, 0], sizes = [1, 8, 8, 16], strides = [1, 1, 1, 1]} : vector<2x8x8x16xf32> to vector<1x8x8x16xf32>
    %208 = vector.shape_cast %207 : vector<1x8x8x16xf32> to vector<8x8x16xf32>
    %c11_219 = arith.constant 11 : index
    %c1_220 = arith.constant 1 : index
    %c0_221 = arith.constant 0 : index
    %209 = vector.load %arg11[%c11_219, %c1_220, %c0_221] : memref<20x10x16xf32, #tpu.memory_space<vmem>>, vector<8x8x16xf32>
    tpu.vector_store %arg11[%c11_219, %c1_220, %c0_221], %208 {strides = array<i32>} : memref<20x10x16xf32, #tpu.memory_space<vmem>>, vector<8x8x16xf32>,
    %c10_222 = arith.constant 10 : index
    %c0_223 = arith.constant 0 : index
    %c0_224 = arith.constant 0 : index
    %210 = vector.load %arg11[%c10_222, %c0_223, %c0_224] : memref<20x10x16xf32, #tpu.memory_space<vmem>>, vector<8x8x16xf32>
    %c10_225 = arith.constant 10 : index
    %c1_226 = arith.constant 1 : index
    %c0_227 = arith.constant 0 : index
    %211 = vector.load %arg11[%c10_225, %c1_226, %c0_227] : memref<20x10x16xf32, #tpu.memory_space<vmem>>, vector<8x8x16xf32>
    %c10_228 = arith.constant 10 : index
    %c2_229 = arith.constant 2 : index
    %c0_230 = arith.constant 0 : index
    %212 = vector.load %arg11[%c10_228, %c2_229, %c0_230] : memref<20x10x16xf32, #tpu.memory_space<vmem>>, vector<8x8x16xf32>
    %c11_231 = arith.constant 11 : index
    %c0_232 = arith.constant 0 : index
    %c0_233 = arith.constant 0 : index
    %213 = vector.load %arg11[%c11_231, %c0_232, %c0_233] : memref<20x10x16xf32, #tpu.memory_space<vmem>>, vector<8x8x16xf32>
    %c11_234 = arith.constant 11 : index
    %c1_235 = arith.constant 1 : index
    %c0_236 = arith.constant 0 : index
    %214 = vector.load %arg11[%c11_234, %c1_235, %c0_236] : memref<20x10x16xf32, #tpu.memory_space<vmem>>, vector<8x8x16xf32>
    %c11_237 = arith.constant 11 : index
    %c2_238 = arith.constant 2 : index
    %c0_239 = arith.constant 0 : index
    %215 = vector.load %arg11[%c11_237, %c2_238, %c0_239] : memref<20x10x16xf32, #tpu.memory_space<vmem>>, vector<8x8x16xf32>
    %c12_240 = arith.constant 12 : index
    %c0_241 = arith.constant 0 : index
    %c0_242 = arith.constant 0 : index
    %216 = vector.load %arg11[%c12_240, %c0_241, %c0_242] : memref<20x10x16xf32, #tpu.memory_space<vmem>>, vector<8x8x16xf32>
    %c12_243 = arith.constant 12 : index
    %c1_244 = arith.constant 1 : index
    %c0_245 = arith.constant 0 : index
    %217 = vector.load %arg11[%c12_243, %c1_244, %c0_245] : memref<20x10x16xf32, #tpu.memory_space<vmem>>, vector<8x8x16xf32>
    %c12_246 = arith.constant 12 : index
    %c2_247 = arith.constant 2 : index
    %c0_248 = arith.constant 0 : index
    %218 = vector.load %arg11[%c12_246, %c2_247, %c0_248] : memref<20x10x16xf32, #tpu.memory_space<vmem>>, vector<8x8x16xf32>
    %219 = tpu.concatenate %210, %211, %212, %213, %214, %215, %216, %217, %218 in 2 : vector<8x8x16xf32>, vector<8x8x16xf32>, vector<8x8x16xf32>, vector<8x8x16xf32>, vector<8x8x16xf32>, vector<8x8x16xf32>, vector<8x8x16xf32>, vector<8x8x16xf32>, vector<8x8x16xf32> -> vector<8x8x144xf32>
    %220 = vector.shape_cast %219 : vector<8x8x144xf32> to vector<64x144xf32>
    %221 = tpu.concatenate %206, %220 in 0 : vector<64x144xf32>, vector<64x144xf32> -> vector<128x144xf32>
    %c0_249 = arith.constant 0 : index
    %c16 = arith.constant 16 : index
    %222 = vector.load %arg4[%c0_249, %c16] : memref<144x22xf32, #tpu.memory_space<vmem>>, vector<144x6xf32>
    %cst_250 = arith.constant dense<0.000000e+00> : vector<128x6xf32>
    %223 = tpu.matmul %221, %222, %cst_250 {dimension_numbers = #tpu.dot_dimension_numbers<[1], [0], [0], [1], [0, 0, 1, 1], [], []>} : vector<128x144xf32>, vector<144x6xf32>, vector<128x6xf32> -> vector<128x6xf32>
    %c0_251 = arith.constant 0 : index
    %c16_252 = arith.constant 16 : index
    %224 = vector.load %arg5[%c0_251, %c16_252] : memref<1x22xf32, #tpu.memory_space<vmem>>, vector<1x6xf32>
    %225 = vector.broadcast %224 : vector<1x6xf32> to vector<128x6xf32>
    %226 = arith.addf %223, %225 : vector<128x6xf32>
    %227 = arith.negf %226 : vector<128x6xf32>
    %228 = math.exp %227 : vector<128x6xf32>
    %cst_253 = arith.constant 1.000000e+00 : f32
    %229 = vector.broadcast %cst_253 : f32 to vector<128x6xf32>
    %230 = arith.addf %229, %228 : vector<128x6xf32>
    %231 = arith.divf %229, %230 : vector<128x6xf32>
    %232 = tpu.transpose %231, [1, 0] : vector<128x6xf32> -> vector<6x128xf32>
    %c0_254 = arith.constant 0 : index
    %c0_255 = arith.constant 0 : index
    %c0_256 = arith.constant 0 : index
    %233 = vector.load %arg10[%c0_254, %c0_255, %c0_256] : memref<1x6x128xf32, #tpu.memory_space<vmem>>, vector<1x6x128xf32>
    %234 = vector.shape_cast %233 : vector<1x6x128xf32> to vector<6x128xf32>
    %235 = vector.shape_cast %232 : vector<6x128xf32> to vector<1x6x128xf32>
    tpu.vector_store %arg10[%c0_254, %c0_255, %c0_256], %235 {strides = array<i32>} : memref<1x6x128xf32, #tpu.memory_space<vmem>>, vector<1x6x128xf32>,
    return
  }
  func.func @transform_0(%arg0: i32) -> (i32, i32, i32, i32) {
    %c0_i32 = arith.constant 0 : i32
    %c0_i32_0 = arith.constant 0 : i32
    %c0_i32_1 = arith.constant 0 : i32
    %c0_i32_2 = arith.constant 0 : i32
    return %arg0, %c0_i32, %c0_i32_0, %c0_i32_1 : i32, i32, i32, i32
  }
  func.func @transform_1(%arg0: i32) -> (i32, i32) {
    %c0_i32 = arith.constant 0 : i32
    %c0_i32_0 = arith.constant 0 : i32
    %c0_i32_1 = arith.constant 0 : i32
    return %c0_i32, %c0_i32_0 : i32, i32
  }
  func.func @transform_2(%arg0: i32) -> (i32, i32) {
    %c0_i32 = arith.constant 0 : i32
    %c0_i32_0 = arith.constant 0 : i32
    %c0_i32_1 = arith.constant 0 : i32
    return %c0_i32, %c0_i32_0 : i32, i32
  }
  func.func @transform_3(%arg0: i32) -> (i32, i32) {
    %c0_i32 = arith.constant 0 : i32
    %c0_i32_0 = arith.constant 0 : i32
    %c0_i32_1 = arith.constant 0 : i32
    return %c0_i32, %c0_i32_0 : i32, i32
  }
  func.func @transform_4(%arg0: i32) -> (i32, i32) {
    %c0_i32 = arith.constant 0 : i32
    %c0_i32_0 = arith.constant 0 : i32
    %c0_i32_1 = arith.constant 0 : i32
    return %c0_i32, %c0_i32_0 : i32, i32
  }
  func.func @transform_5(%arg0: i32) -> (i32, i32) {
    %c0_i32 = arith.constant 0 : i32
    %c0_i32_0 = arith.constant 0 : i32
    %c0_i32_1 = arith.constant 0 : i32
    return %c0_i32, %c0_i32_0 : i32, i32
  }
  func.func @transform_6(%arg0: i32) -> (i32, i32) {
    %c0_i32 = arith.constant 0 : i32
    %c0_i32_0 = arith.constant 0 : i32
    %c0_i32_1 = arith.constant 0 : i32
    return %c0_i32, %c0_i32_0 : i32, i32
  }
  func.func @transform_7(%arg0: i32) -> (i32, i32) {
    %c0_i32 = arith.constant 0 : i32
    %c0_i32_0 = arith.constant 0 : i32
    %c0_i32_1 = arith.constant 0 : i32
    return %c0_i32, %c0_i32_0 : i32, i32
  }
  func.func @transform_8(%arg0: i32) -> (i32, i32) {
    %c0_i32 = arith.constant 0 : i32
    %c0_i32_0 = arith.constant 0 : i32
    %c0_i32_1 = arith.constant 0 : i32
    return %c0_i32, %c0_i32_0 : i32, i32
  }
  func.func @transform_9(%arg0: i32) -> (i32, i32, i32) {
    %c0_i32 = arith.constant 0 : i32
    %c0_i32_0 = arith.constant 0 : i32
    %c0_i32_1 = arith.constant 0 : i32
    return %arg0, %c0_i32, %c0_i32_0 : i32, i32, i32
  }
}

</mosaic_0001>

<llo_original>
// kernel: proposal_relation_block.1
$region0: #{proposal_relation_block.1}
  #allocation0 [shape = 'u32[]', space=smem, size = 0x4, offset = 0x4, fixed_abs, tag = 'smem constant byte address 0x4 - core index']
  #allocation1 [shape = 'u32[72,128]{1,0:T(1,128)}', space=vmem, size = 0x9000, scoped, tag = 'internal scratch']
  #allocation2 [shape = 'f32[20,10,16]{2,1,0:T(8,128)}', space=vmem, size = 0x28000, scoped, tag = 'scratch operand']
  %s0 = inlined_call_operand.vmem [shape: f32[4,8,8,8], index: 0, kind: input, shape index: {}]
  %s1 = inlined_call_operand.vmem [shape: f32[72,16], index: 1, kind: input, shape index: {}]
  %s2 = inlined_call_operand.vmem [shape: f32[1,16], index: 2, kind: input, shape index: {}]
  %s3 = inlined_call_operand.vmem [shape: f32[144,22], index: 3, kind: input, shape index: {}]
  %s4 = inlined_call_operand.vmem [shape: f32[1,22], index: 4, kind: input, shape index: {}]
  %s5 = inlined_call_operand.vmem [shape: f32[8,96], index: 5, kind: input, shape index: {}]
  %s6 = inlined_call_operand.vmem [shape: f32[1,96], index: 6, kind: input, shape index: {}]
  %s7 = inlined_call_operand.vmem [shape: f32[16,16], index: 7, kind: input, shape index: {}]
  %s8 = inlined_call_operand.vmem [shape: f32[1,16], index: 8, kind: input, shape index: {}]
  %s9 = inlined_call_operand.vmem [shape: f32[2,6,128], index: 9, kind: output, shape index: {}]
  %s10 = sld [smem:[#allocation0]]
  $region69: #{proposal_relation_block.1} parent=0
    _
  %s12 = ssub.s32 1, %s10
  %s13 = scalar_select 0, %s12, %s10
  loop: start=0, step=1, limit=4
  $region2: #{proposal_relation_block.1} parent=0 // loop_pre_header
    _
  $region3: #{proposal_relation_block.1} parent=0 // loop_header
    %s15 = sphi 0, %s19
    %p16 = scmp.ge.s32.totalorder %s15, 4
    %s25 = sphi 0, %s27
    %s28 = sphi 0, %s25
    %s29 = sphi 0, %s28
    %s45 = sphi 0, %s29
    %s49 = sphi 0, %s49
    %s51 = sphi 0, %s49
    %s52 = sphi 0, %s51
    %s66 = sphi 0, %s52
    %s70 = sphi 0, %s70
    %s72 = sphi 0, %s70
    %s73 = sphi 0, %s72
    %s87 = sphi 0, %s73
    %s91 = sphi 0, %s91
    %s93 = sphi 0, %s91
    %s94 = sphi 0, %s93
    %s108 = sphi 0, %s94
    %s112 = sphi 0, %s112
    %s114 = sphi 0, %s112
    %s115 = sphi 0, %s114
    %s129 = sphi 0, %s115
    %s133 = sphi 0, %s133
    %s135 = sphi 0, %s133
    %s136 = sphi 0, %s135
    %s150 = sphi 0, %s136
    %s154 = sphi 0, %s154
    %s156 = sphi 0, %s154
    %s157 = sphi 0, %s156
    %s171 = sphi 0, %s157
    %s175 = sphi 0, %s175
    %s177 = sphi 0, %s175
    %s178 = sphi 0, %s177
    %s192 = sphi 0, %s178
    %s196 = sphi 0, %s196
    %s198 = sphi 0, %s196
    %s199 = sphi 0, %s198
    %s213 = sphi 0, %s199
    %s219 = sphi 0, %s221
    %s222 = sphi 0, %s219
    %s223 = sphi 0, %s222
    %s239 = sphi 0, %s223
  $region4: #{proposal_relation_block.1} parent=0 // loop_header_branch
    %18 = sbr.rel (%p16) target = $region8
  $region5: #{proposal_relation_block.1} parent=0 // loop_body
    %s20 = ssub.s32 %s15, 1
    %s21 = ssub.s32 %s15, 2
    %s22 = sadd.s32 %s15, 1
    %s23 = ssub.s32 %s15, %s22
    %p24 = scmp.eq.s32.totalorder %s23, 0
    %s26 = sadd.s32 %s25, 1
    %s27 = scalar_select %p24, %s25, %s26
    %p30 = pneg %p24
    %p31 = scmp.eq.s32.totalorder %s15, 1
    %p32 = por %p30, %p31
    %p33 = scmp.ne.s32.totalorder %s25, %s28
    %p34 = scmp.eq.s32.totalorder %s15, 0
    %p35 = por %p33, %p34
    %p36 = scmp.ne.s32.totalorder %s25, %s28
    %p37 = scmp.eq.s32.totalorder %s20, 1
    %p38 = por %p36, %p37
    %p39 = scmp.ne.s32.totalorder %s28, %s29
    %p40 = scmp.eq.s32.totalorder %s20, 0
    %p41 = por %p39, %p40
    %p42 = scmp.ne.s32.totalorder %s28, %s29
    %p43 = scmp.eq.s32.totalorder %s21, 1
    %p44 = por %p42, %p43
    %p46 = scmp.ne.s32.totalorder %s29, %s45
    %p47 = scmp.eq.s32.totalorder %s21, 0
    %p48 = por %p46, %p47
    %s50 = sadd.s32 %s49, 1
    %p53 = scmp.eq.s32.totalorder %s15, 1
    %p54 = scmp.ne.s32.totalorder %s49, %s51
    %p55 = scmp.eq.s32.totalorder %s15, 0
    %p56 = por %p54, %p55
    %p57 = scmp.ne.s32.totalorder %s49, %s51
    %p58 = scmp.eq.s32.totalorder %s20, 1
    %p59 = por %p57, %p58
    %p60 = scmp.ne.s32.totalorder %s51, %s52
    %p61 = scmp.eq.s32.totalorder %s20, 0
    %p62 = por %p60, %p61
    %p63 = scmp.ne.s32.totalorder %s51, %s52
    %p64 = scmp.eq.s32.totalorder %s21, 1
    %p65 = por %p63, %p64
    %p67 = scmp.ne.s32.totalorder %s52, %s66
    %p68 = scmp.eq.s32.totalorder %s21, 0
    %p69 = por %p67, %p68
    %s71 = sadd.s32 %s70, 1
    %p74 = scmp.eq.s32.totalorder %s15, 1
    %p75 = scmp.ne.s32.totalorder %s70, %s72
    %p76 = scmp.eq.s32.totalorder %s15, 0
    %p77 = por %p75, %p76
    %p78 = scmp.ne.s32.totalorder %s70, %s72
    %p79 = scmp.eq.s32.totalorder %s20, 1
    %p80 = por %p78, %p79
    %p81 = scmp.ne.s32.totalorder %s72, %s73
    %p82 = scmp.eq.s32.totalorder %s20, 0
    %p83 = por %p81, %p82
    %p84 = scmp.ne.s32.totalorder %s72, %s73
    %p85 = scmp.eq.s32.totalorder %s21, 1
    %p86 = por %p84, %p85
    %p88 = scmp.ne.s32.totalorder %s73, %s87
    %p89 = scmp.eq.s32.totalorder %s21, 0
    %p90 = por %p88, %p89
    %s92 = sadd.s32 %s91, 1
    %p95 = scmp.eq.s32.totalorder %s15, 1
    %p96 = scmp.ne.s32.totalorder %s91, %s93
    %p97 = scmp.eq.s32.totalorder %s15, 0
    %p98 = por %p96, %p97
    %p99 = scmp.ne.s32.totalorder %s91, %s93
    %p100 = scmp.eq.s32.totalorder %s20, 1
    %p101 = por %p99, %p100
    %p102 = scmp.ne.s32.totalorder %s93, %s94
    %p103 = scmp.eq.s32.totalorder %s20, 0
    %p104 = por %p102, %p103
    %p105 = scmp.ne.s32.totalorder %s93, %s94
    %p106 = scmp.eq.s32.totalorder %s21, 1
    %p107 = por %p105, %p106
    %p109 = scmp.ne.s32.totalorder %s94, %s108
    %p110 = scmp.eq.s32.totalorder %s21, 0
    %p111 = por %p109, %p110
    %s113 = sadd.s32 %s112, 1
    %p116 = scmp.eq.s32.totalorder %s15, 1
    %p117 = scmp.ne.s32.totalorder %s112, %s114
    %p118 = scmp.eq.s32.totalorder %s15, 0
    %p119 = por %p117, %p118
    %p120 = scmp.ne.s32.totalorder %s112, %s114
    %p121 = scmp.eq.s32.totalorder %s20, 1
    %p122 = por %p120, %p121
    %p123 = scmp.ne.s32.totalorder %s114, %s115
    %p124 = scmp.eq.s32.totalorder %s20, 0
    %p125 = por %p123, %p124
    %p126 = scmp.ne.s32.totalorder %s114, %s115
    %p127 = scmp.eq.s32.totalorder %s21, 1
    %p128 = por %p126, %p127
    %p130 = scmp.ne.s32.totalorder %s115, %s129
    %p131 = scmp.eq.s32.totalorder %s21, 0
    %p132 = por %p130, %p131
    %s134 = sadd.s32 %s133, 1
    %p137 = scmp.eq.s32.totalorder %s15, 1
    %p138 = scmp.ne.s32.totalorder %s133, %s135
    %p139 = scmp.eq.s32.totalorder %s15, 0
    %p140 = por %p138, %p139
    %p141 = scmp.ne.s32.totalorder %s133, %s135
    %p142 = scmp.eq.s32.totalorder %s20, 1
    %p143 = por %p141, %p142
    %p144 = scmp.ne.s32.totalorder %s135, %s136
    %p145 = scmp.eq.s32.totalorder %s20, 0
    %p146 = por %p144, %p145
    %p147 = scmp.ne.s32.totalorder %s135, %s136
    %p148 = scmp.eq.s32.totalorder %s21, 1
    %p149 = por %p147, %p148
    %p151 = scmp.ne.s32.totalorder %s136, %s150
    %p152 = scmp.eq.s32.totalorder %s21, 0
    %p153 = por %p151, %p152
    %s155 = sadd.s32 %s154, 1
    %p158 = scmp.eq.s32.totalorder %s15, 1
    %p159 = scmp.ne.s32.totalorder %s154, %s156
    %p160 = scmp.eq.s32.totalorder %s15, 0
    %p161 = por %p159, %p160
    %p162 = scmp.ne.s32.totalorder %s154, %s156
    %p163 = scmp.eq.s32.totalorder %s20, 1
    %p164 = por %p162, %p163
    %p165 = scmp.ne.s32.totalorder %s156, %s157
    %p166 = scmp.eq.s32.totalorder %s20, 0
    %p167 = por %p165, %p166
    %p168 = scmp.ne.s32.totalorder %s156, %s157
    %p169 = scmp.eq.s32.totalorder %s21, 1
    %p170 = por %p168, %p169
    %p172 = scmp.ne.s32.totalorder %s157, %s171
    %p173 = scmp.eq.s32.totalorder %s21, 0
    %p174 = por %p172, %p173
    %s176 = sadd.s32 %s175, 1
    %p179 = scmp.eq.s32.totalorder %s15, 1
    %p180 = scmp.ne.s32.totalorder %s175, %s177
    %p181 = scmp.eq.s32.totalorder %s15, 0
    %p182 = por %p180, %p181
    %p183 = scmp.ne.s32.totalorder %s175, %s177
    %p184 = scmp.eq.s32.totalorder %s20, 1
    %p185 = por %p183, %p184
    %p186 = scmp.ne.s32.totalorder %s177, %s178
    %p187 = scmp.eq.s32.totalorder %s20, 0
    %p188 = por %p186, %p187
    %p189 = scmp.ne.s32.totalorder %s177, %s178
    %p190 = scmp.eq.s32.totalorder %s21, 1
    %p191 = por %p189, %p190
    %p193 = scmp.ne.s32.totalorder %s178, %s192
    %p194 = scmp.eq.s32.totalorder %s21, 0
    %p195 = por %p193, %p194
    %s197 = sadd.s32 %s196, 1
    %p200 = scmp.eq.s32.totalorder %s15, 1
    %p201 = scmp.ne.s32.totalorder %s196, %s198
    %p202 = scmp.eq.s32.totalorder %s15, 0
    %p203 = por %p201, %p202
    %p204 = scmp.ne.s32.totalorder %s196, %s198
    %p205 = scmp.eq.s32.totalorder %s20, 1
    %p206 = por %p204, %p205
    %p207 = scmp.ne.s32.totalorder %s198, %s199
    %p208 = scmp.eq.s32.totalorder %s20, 0
    %p209 = por %p207, %p208
    %p210 = scmp.ne.s32.totalorder %s198, %s199
    %p211 = scmp.eq.s32.totalorder %s21, 1
    %p212 = por %p210, %p211
    %p214 = scmp.ne.s32.totalorder %s199, %s213
    %p215 = scmp.eq.s32.totalorder %s21, 0
    %p216 = por %p214, %p215
    %s217 = ssub.s32 %s15, %s22
    %p218 = scmp.eq.s32.totalorder %s217, 0
    %s220 = sadd.s32 %s219, 1
    %s221 = scalar_select %p218, %s219, %s220
    %p224 = pneg %p218
    %p225 = scmp.eq.s32.totalorder %s15, 1
    %p226 = por %p224, %p225
    %p227 = scmp.ne.s32.totalorder %s219, %s222
    %p228 = scmp.eq.s32.totalorder %s15, 0
    %p229 = por %p227, %p228
    %p230 = scmp.ne.s32.totalorder %s219, %s222
    %p231 = scmp.eq.s32.totalorder %s20, 1
    %p232 = por %p230, %p231
    %p233 = scmp.ne.s32.totalorder %s222, %s223
    %p234 = scmp.eq.s32.totalorder %s20, 0
    %p235 = por %p233, %p234
    %p236 = scmp.ne.s32.totalorder %s222, %s223
    %p237 = scmp.eq.s32.totalorder %s21, 1
    %p238 = por %p236, %p237
    %p240 = scmp.ne.s32.totalorder %s223, %s239
    %p241 = scmp.eq.s32.totalorder %s21, 0
    %p242 = por %p240, %p241
    %p243 = scmp.le.s32.totalorder 1, %s15
    %p244 = scmp.lt.s32.totalorder %s15, 3
    %p245 = pnand %p243, %p244
    %p246 = pneg %p245
    // Predicated region
    $region9: #{proposal_relation_block.1} parent=5 // pred_check
      _
    $region10: #{proposal_relation_block.1} parent=5 // pred_check_branch
      %248 = sbr.rel (%p245) target = $region12
    $region11: #{proposal_relation_block.1} parent=5 // pred_region
      %s249 = ssub.s32 %s15, 1
      // Predicated region
      $region13: #{proposal_relation_block.1} parent=11 // pred_check
        %p250 = pneg %p62
      $region14: #{proposal_relation_block.1} parent=11 // pred_check_branch
        %252 = sbr.rel (%p250) target = $region16
      $region15: #{proposal_relation_block.1} parent=11 // pred_region
        _
      $region16: #{proposal_relation_block.1} parent=11 // pred_fallthru
        _
      // Predicated region
      $region17: #{proposal_relation_block.1} parent=11 // pred_check
        %p253 = pneg %p83
      $region18: #{proposal_relation_block.1} parent=11 // pred_check_branch
        %255 = sbr.rel (%p253) target = $region20
      $region19: #{proposal_relation_block.1} parent=11 // pred_region
        _
      $region20: #{proposal_relation_block.1} parent=11 // pred_fallthru
        _
      // Predicated region
      $region21: #{proposal_relation_block.1} parent=11 // pred_check
        %p256 = pneg %p104
      $region22: #{proposal_relation_block.1} parent=11 // pred_check_branch
        %258 = sbr.rel (%p256) target = $region24
      $region23: #{proposal_relation_block.1} parent=11 // pred_region
        _
      $region24: #{proposal_relation_block.1} parent=11 // pred_fallthru
        _
      // Predicated region
      $region25: #{proposal_relation_block.1} parent=11 // pred_check
        %p259 = pneg %p125
      $region26: #{proposal_relation_block.1} parent=11 // pred_check_branch
        %261 = sbr.rel (%p259) target = $region28
      $region27: #{proposal_relation_block.1} parent=11 // pred_region
        _
      $region28: #{proposal_relation_block.1} parent=11 // pred_fallthru
        _
      // Predicated region
      $region29: #{proposal_relation_block.1} parent=11 // pred_check
        %p262 = pneg %p146
      $region30: #{proposal_relation_block.1} parent=11 // pred_check_branch
        %264 = sbr.rel (%p262) target = $region32
      $region31: #{proposal_relation_block.1} parent=11 // pred_region
        _
      $region32: #{proposal_relation_block.1} parent=11 // pred_fallthru
        _
      // Predicated region
      $region33: #{proposal_relation_block.1} parent=11 // pred_check
        %p265 = pneg %p167
      $region34: #{proposal_relation_block.1} parent=11 // pred_check_branch
        %267 = sbr.rel (%p265) target = $region36
      $region35: #{proposal_relation_block.1} parent=11 // pred_region
        _
      $region36: #{proposal_relation_block.1} parent=11 // pred_fallthru
        _
      // Predicated region
      $region37: #{proposal_relation_block.1} parent=11 // pred_check
        %p268 = pneg %p188
      $region38: #{proposal_relation_block.1} parent=11 // pred_check_branch
        %270 = sbr.rel (%p268) target = $region40
      $region39: #{proposal_relation_block.1} parent=11 // pred_region
        _
      $region40: #{proposal_relation_block.1} parent=11 // pred_fallthru
        _
      // Predicated region
      $region41: #{proposal_relation_block.1} parent=11 // pred_check
        %p271 = pneg %p209
      $region42: #{proposal_relation_block.1} parent=11 // pred_check_branch
        %273 = sbr.rel (%p271) target = $region44
      $region43: #{proposal_relation_block.1} parent=11 // pred_region
        _
      $region44: #{proposal_relation_block.1} parent=11 // pred_fallthru
        _
    $region12: #{proposal_relation_block.1} parent=5 // pred_fallthru
      _
    %p274 = scmp.lt.s32.totalorder %s15, 2
    // Predicated region
    $region45: #{proposal_relation_block.1} parent=5 // pred_check
      %p275 = pneg %p274
    $region46: #{proposal_relation_block.1} parent=5 // pred_check_branch
      %277 = sbr.rel (%p275) target = $region48
    $region47: #{proposal_relation_block.1} parent=5 // pred_region
      // Predicated region
      $region49: #{proposal_relation_block.1} parent=47 // pred_check
        %p278 = pneg %p35
      $region50: #{proposal_relation_block.1} parent=47 // pred_check_branch
        %280 = sbr.rel (%p278) target = $region52
      $region51: #{proposal_relation_block.1} parent=47 // pred_region
        %s281 = smul.u32 2, %s15
        %p282 = scmp.lt.s32.totalorder %s281, 3
        %s283 = scalar_select %p282, %s281, 3
        %s284 = smul.addr %s283, 8
        %s285 = smul.addr %s284, 8
        %s286 = scalar_lea.vmem %s0, %s285
        %s287 = smul.u32 2, %s15
      $region52: #{proposal_relation_block.1} parent=47 // pred_fallthru
        _
    $region48: #{proposal_relation_block.1} parent=5 // pred_fallthru
      _
    %p288 = scmp.le.s32.totalorder 1, %s15
    %p289 = scmp.lt.s32.totalorder %s15, 3
    %p290 = pnand %p288, %p289
    %p291 = pneg %p290
    // Predicated region
    $region53: #{proposal_relation_block.1} parent=5 // pred_check
      _
    $region54: #{proposal_relation_block.1} parent=5 // pred_check_branch
      %293 = sbr.rel (%p290) target = $region56
    $region55: #{proposal_relation_block.1} parent=5 // pred_region
      %s294 = ssub.s32 %s15, 1
      %s295 = smul.u32 2, %s20
      %p296 = scmp.lt.s32.totalorder %s295, 3
      %s297 = scalar_select %p296, %s295, 3
      %s298 = smul.addr %s297, 8
      %s299 = smul.addr %s298, 8
      %s300 = scalar_lea.vmem %s0, %s299
      %p301 = pneg %p41
      %p302 = pneg %p38
      %p303 = pneg %p62
      %p304 = pneg %p59
      %p305 = pneg %p83
      %p306 = pneg %p80
      %p307 = pneg %p104
      %p308 = pneg %p101
      %p309 = pneg %p125
      %p310 = pneg %p122
      %p311 = pneg %p146
      %p312 = pneg %p143
      %p313 = pneg %p167
      %p314 = pneg %p164
      %p315 = pneg %p188
      %p316 = pneg %p185
      %p317 = pneg %p209
      %p318 = pneg %p206
      %p319 = pneg %p235
      %p320 = pneg %p232
      %p321 = scmp.lt.s32.totalorder %s20, 1
      %s322 = scalar_select %p321, %s20, 1
      %s323 = smul.addr %s322, 8
      %s324 = scalar_lea.vmem %s9, %s323
      %s325 = smul.u32 2, %s20
      %p326 = scmp.lt.s32.totalorder %s325, 3
      %s327 = scalar_select %p326, %s325, 3
      %s328 = smul.addr %s327, 8
      %s329 = smul.addr %s328, 8
      %s330 = scalar_lea.vmem %s0, %s329
      %s331 = smul.u32 2, %s20
      %p332 = scmp.lt.s32.totalorder %s20, 1
      %s333 = scalar_select %p332, %s20, 1
      %s334 = smul.addr %s333, 8
      %s335 = scalar_lea.vmem %s9, %s334
      %vm336 = vcmask 130048
      %337 = vst.msk [vmem:[#allocation2] sm:$0xff] %vm336, 0.0
      %vm338 = vcmask 123904
      %339 = vst.msk [vmem:[#allocation2 + $0x8] sm:$0x3] %vm338, 0.0
      %s340 = scalar_lea.vmem [#allocation2], 144
      %341 = vst.msk [vmem:[%s340] sm:$0xff] %vm336, 0.0
      %342 = vst.msk [vmem:[%s340 + $0x8] sm:$0x3] %vm338, 0.0
      %vm343 = vcmask 122880
      %344 = vst.msk [vmem:[#allocation2] sm:$0x1] %vm343, 0.0
      %345 = vst.msk [vmem:[#allocation2 + $0x10] sm:$0x1] %vm343, 0.0
      %346 = vst.msk [vmem:[#allocation2 + $0x20] sm:$0x1] %vm343, 0.0
      %347 = vst.msk [vmem:[#allocation2 + $0x30] sm:$0x1] %vm343, 0.0
      %348 = vst.msk [vmem:[#allocation2 + $0x40] sm:$0x1] %vm343, 0.0
      %349 = vst.msk [vmem:[#allocation2 + $0x50] sm:$0x1] %vm343, 0.0
      %350 = vst.msk [vmem:[#allocation2 + $0x60] sm:$0x1] %vm343, 0.0
      %351 = vst.msk [vmem:[#allocation2 + $0x70] sm:$0x1] %vm343, 0.0
      %352 = vst.msk [vmem:[#allocation2 + $0x80] sm:$0x1] %vm343, 0.0
      %353 = vst.msk [vmem:[#allocation2 + $0x90] sm:$0x1] %vm343, 0.0
      %354 = vst.msk [vmem:[#allocation2 + $0x9] sm:$0x1] %vm343, 0.0
      %355 = vst.msk [vmem:[#allocation2 + $0x19] sm:$0x1] %vm343, 0.0
      %356 = vst.msk [vmem:[#allocation2 + $0x29] sm:$0x1] %vm343, 0.0
      %357 = vst.msk [vmem:[#allocation2 + $0x39] sm:$0x1] %vm343, 0.0
      %358 = vst.msk [vmem:[#allocation2 + $0x49] sm:$0x1] %vm343, 0.0
      %359 = vst.msk [vmem:[#allocation2 + $0x59] sm:$0x1] %vm343, 0.0
      %360 = vst.msk [vmem:[#allocation2 + $0x69] sm:$0x1] %vm343, 0.0
      %361 = vst.msk [vmem:[#allocation2 + $0x79] sm:$0x1] %vm343, 0.0
      %362 = vst.msk [vmem:[#allocation2 + $0x89] sm:$0x1] %vm343, 0.0
      %363 = vst.msk [vmem:[#allocation2 + $0x99] sm:$0x1] %vm343, 0.0
      %s364 = scalar_lea.vmem [#allocation2], 160
      %365 = vst.msk [vmem:[%s364] sm:$0xff] %vm336, 0.0
      %366 = vst.msk [vmem:[%s364 + $0x8] sm:$0x3] %vm338, 0.0
      %s367 = scalar_lea.vmem [#allocation2], 304
      %368 = vst.msk [vmem:[%s367] sm:$0xff] %vm336, 0.0
      %369 = vst.msk [vmem:[%s367 + $0x8] sm:$0x3] %vm338, 0.0
      %370 = vst.msk [vmem:[%s364] sm:$0x1] %vm343, 0.0
      %371 = vst.msk [vmem:[%s364 + $0x10] sm:$0x1] %vm343, 0.0
      %372 = vst.msk [vmem:[%s364 + $0x20] sm:$0x1] %vm343, 0.0
      %373 = vst.msk [vmem:[%s364 + $0x30] sm:$0x1] %vm343, 0.0
      %374 = vst.msk [vmem:[%s364 + $0x40] sm:$0x1] %vm343, 0.0
      %375 = vst.msk [vmem:[%s364 + $0x50] sm:$0x1] %vm343, 0.0
      %376 = vst.msk [vmem:[%s364 + $0x60] sm:$0x1] %vm343, 0.0
      %377 = vst.msk [vmem:[%s364 + $0x70] sm:$0x1] %vm343, 0.0
      %378 = vst.msk [vmem:[%s364 + $0x80] sm:$0x1] %vm343, 0.0
      %379 = vst.msk [vmem:[%s364 + $0x90] sm:$0x1] %vm343, 0.0
      %380 = vst.msk [vmem:[%s364 + $0x9] sm:$0x1] %vm343, 0.0
      %381 = vst.msk [vmem:[%s364 + $0x19] sm:$0x1] %vm343, 0.0
      %382 = vst.msk [vmem:[%s364 + $0x29] sm:$0x1] %vm343, 0.0
      %383 = vst.msk [vmem:[%s364 + $0x39] sm:$0x1] %vm343, 0.0
      %384 = vst.msk [vmem:[%s364 + $0x49] sm:$0x1] %vm343, 0.0
      %385 = vst.msk [vmem:[%s364 + $0x59] sm:$0x1] %vm343, 0.0
      %386 = vst.msk [vmem:[%s364 + $0x69] sm:$0x1] %vm343, 0.0
      %387 = vst.msk [vmem:[%s364 + $0x79] sm:$0x1] %vm343, 0.0
      %388 = vst.msk [vmem:[%s364 + $0x89] sm:$0x1] %vm343, 0.0
      %389 = vst.msk [vmem:[%s364 + $0x99] sm:$0x1] %vm343, 0.0
      %v390 = vld [vmem:[%s330] sm:$0xff]
      %v391 = vld [vmem:[%s330 + $0x8] sm:$0xff]
      %v392 = vld [vmem:[%s330 + $0x10] sm:$0xff]
      %v393 = vld [vmem:[%s330 + $0x18] sm:$0xff]
      %v394 = vld [vmem:[%s330 + $0x20] sm:$0xff]
      %v395 = vld [vmem:[%s330 + $0x28] sm:$0xff]
      %v396 = vld [vmem:[%s330 + $0x30] sm:$0xff]
      %v397 = vld [vmem:[%s330 + $0x38] sm:$0xff]
      %v398 = vld [vmem:[%s330 + $0x40] sm:$0xff]
      %v399 = vld [vmem:[%s330 + $0x48] sm:$0xff]
      %v400 = vld [vmem:[%s330 + $0x50] sm:$0xff]
      %v401 = vld [vmem:[%s330 + $0x58] sm:$0xff]
      %v402 = vld [vmem:[%s330 + $0x60] sm:$0xff]
      %v403 = vld [vmem:[%s330 + $0x68] sm:$0xff]
      %v404 = vld [vmem:[%s330 + $0x70] sm:$0xff]
      %v405 = vld [vmem:[%s330 + $0x78] sm:$0xff]
      %s406 = scalar_lea.vmem [#allocation2], 16
      %vm407 = vcmask 64512
      %408 = vst.msk [vmem:[%s406 + $0x1] sm:$0xff] %vm407, %v390
      %409 = vst.msk [vmem:[%s406 + $0x11] sm:$0xff] %vm407, %v391
      %410 = vst.msk [vmem:[%s406 + $0x21] sm:$0xff] %vm407, %v392
      %411 = vst.msk [vmem:[%s406 + $0x31] sm:$0xff] %vm407, %v393
      %412 = vst.msk [vmem:[%s406 + $0x41] sm:$0xff] %vm407, %v394
      %413 = vst.msk [vmem:[%s406 + $0x51] sm:$0xff] %vm407, %v395
      %414 = vst.msk [vmem:[%s406 + $0x61] sm:$0xff] %vm407, %v396
      %415 = vst.msk [vmem:[%s406 + $0x71] sm:$0xff] %vm407, %v397
      %v416 = vld [vmem:[#allocation2] sm:$0xff]
      %v417 = vld [vmem:[#allocation2 + $0x10] sm:$0xff]
      %v418 = vld [vmem:[#allocation2 + $0x20] sm:$0xff]
      %v419 = vld [vmem:[#allocation2 + $0x30] sm:$0xff]
      %v420 = vld [vmem:[#allocation2 + $0x40] sm:$0xff]
      %v421 = vld [vmem:[#allocation2 + $0x50] sm:$0xff]
      %v422 = vld [vmem:[#allocation2 + $0x60] sm:$0xff]
      %v423 = vld [vmem:[#allocation2 + $0x70] sm:$0xff]
      %v424 = vld [vmem:[#allocation2 + $0x1] sm:$0xff]
      %v425 = vld [vmem:[#allocation2 + $0x11] sm:$0xff]
      %v426 = vld [vmem:[#allocation2 + $0x21] sm:$0xff]
      %v427 = vld [vmem:[#allocation2 + $0x31] sm:$0xff]
      %v428 = vld [vmem:[#allocation2 + $0x41] sm:$0xff]
      %v429 = vld [vmem:[#allocation2 + $0x51] sm:$0xff]
      %v430 = vld [vmem:[#allocation2 + $0x61] sm:$0xff]
      %v431 = vld [vmem:[#allocation2 + $0x71] sm:$0xff]
      %v432 = vld [vmem:[#allocation2 + $0x2] sm:$0xff]
      %v433 = vld [vmem:[#allocation2 + $0x12] sm:$0xff]
      %v434 = vld [vmem:[#allocation2 + $0x22] sm:$0xff]
      %v435 = vld [vmem:[#allocation2 + $0x32] sm:$0xff]
      %v436 = vld [vmem:[#allocation2 + $0x42] sm:$0xff]
      %v437 = vld [vmem:[#allocation2 + $0x52] sm:$0xff]
      %v438 = vld [vmem:[#allocation2 + $0x62] sm:$0xff]
      %v439 = vld [vmem:[#allocation2 + $0x72] sm:$0xff]
      %v440 = vld [vmem:[%s406] sm:$0xff]
      %v441 = vld [vmem:[%s406 + $0x10] sm:$0xff]
      %v442 = vld [vmem:[%s406 + $0x20] sm:$0xff]
      %v443 = vld [vmem:[%s406 + $0x30] sm:$0xff]
      %v444 = vld [vmem:[%s406 + $0x40] sm:$0xff]
      %v445 = vld [vmem:[%s406 + $0x50] sm:$0xff]
      %v446 = vld [vmem:[%s406 + $0x60] sm:$0xff]
      %v447 = vld [vmem:[%s406 + $0x70] sm:$0xff]
      %v448 = vld [vmem:[%s406 + $0x1] sm:$0xff]
      %v449 = vld [vmem:[%s406 + $0x11] sm:$0xff]
      %v450 = vld [vmem:[%s406 + $0x21] sm:$0xff]
      %v451 = vld [vmem:[%s406 + $0x31] sm:$0xff]
      %v452 = vld [vmem:[%s406 + $0x41] sm:$0xff]
      %v453 = vld [vmem:[%s406 + $0x51] sm:$0xff]
      %v454 = vld [vmem:[%s406 + $0x61] sm:$0xff]
      %v455 = vld [vmem:[%s406 + $0x71] sm:$0xff]
      %v456 = vld [vmem:[%s406 + $0x2] sm:$0xff]
      %v457 = vld [vmem:[%s406 + $0x12] sm:$0xff]
      %v458 = vld [vmem:[%s406 + $0x22] sm:$0xff]
      %v459 = vld [vmem:[%s406 + $0x32] sm:$0xff]
      %v460 = vld [vmem:[%s406 + $0x42] sm:$0xff]
      %v461 = vld [vmem:[%s406 + $0x52] sm:$0xff]
      %v462 = vld [vmem:[%s406 + $0x62] sm:$0xff]
      %v463 = vld [vmem:[%s406 + $0x72] sm:$0xff]
      %s464 = scalar_lea.vmem [#allocation2], 32
      %v465 = vld [vmem:[%s464] sm:$0xff]
      %v466 = vld [vmem:[%s464 + $0x10] sm:$0xff]
      %v467 = vld [vmem:[%s464 + $0x20] sm:$0xff]
      %v468 = vld [vmem:[%s464 + $0x30] sm:$0xff]
      %v469 = vld [vmem:[%s464 + $0x40] sm:$0xff]
      %v470 = vld [vmem:[%s464 + $0x50] sm:$0xff]
      %v471 = vld [vmem:[%s464 + $0x60] sm:$0xff]
      %v472 = vld [vmem:[%s464 + $0x70] sm:$0xff]
      %v473 = vld [vmem:[%s464 + $0x1] sm:$0xff]
      %v474 = vld [vmem:[%s464 + $0x11] sm:$0xff]
      %v475 = vld [vmem:[%s464 + $0x21] sm:$0xff]
      %v476 = vld [vmem:[%s464 + $0x31] sm:$0xff]
      %v477 = vld [vmem:[%s464 + $0x41] sm:$0xff]
      %v478 = vld [vmem:[%s464 + $0x51] sm:$0xff]
      %v479 = vld [vmem:[%s464 + $0x61] sm:$0xff]
      %v480 = vld [vmem:[%s464 + $0x71] sm:$0xff]
      %v481 = vld [vmem:[%s464 + $0x2] sm:$0xff]
      %v482 = vld [vmem:[%s464 + $0x12] sm:$0xff]
      %v483 = vld [vmem:[%s464 + $0x22] sm:$0xff]
      %v484 = vld [vmem:[%s464 + $0x32] sm:$0xff]
      %v485 = vld [vmem:[%s464 + $0x42] sm:$0xff]
      %v486 = vld [vmem:[%s464 + $0x52] sm:$0xff]
      %v487 = vld [vmem:[%s464 + $0x62] sm:$0xff]
      %v488 = vld [vmem:[%s464 + $0x72] sm:$0xff]
      %497 = vrot.lane.b32.xlu0 %v424, 8
      %v498 = vpop.permute.xlu0 %497
      %499 = vrot.lane.b32.xlu0 %v425, 8
      %v500 = vpop.permute.xlu0 %499
      %501 = vrot.lane.b32.xlu0 %v426, 8
      %v502 = vpop.permute.xlu0 %501
      %503 = vrot.lane.b32.xlu0 %v427, 8
      %v504 = vpop.permute.xlu0 %503
      %505 = vrot.lane.b32.xlu0 %v428, 8
      %v506 = vpop.permute.xlu0 %505
      %507 = vrot.lane.b32.xlu0 %v429, 8
      %v508 = vpop.permute.xlu0 %507
      %509 = vrot.lane.b32.xlu0 %v430, 8
      %v510 = vpop.permute.xlu0 %509
      %511 = vrot.lane.b32.xlu0 %v431, 8
      %v512 = vpop.permute.xlu0 %511
      %529 = vrot.lane.b32.xlu0 %v432, 16
      %v530 = vpop.permute.xlu0 %529
      %531 = vrot.lane.b32.xlu0 %v433, 16
      %v532 = vpop.permute.xlu0 %531
      %533 = vrot.lane.b32.xlu0 %v434, 16
      %v534 = vpop.permute.xlu0 %533
      %535 = vrot.lane.b32.xlu0 %v435, 16
      %v536 = vpop.permute.xlu0 %535
      %537 = vrot.lane.b32.xlu0 %v436, 16
      %v538 = vpop.permute.xlu0 %537
      %539 = vrot.lane.b32.xlu0 %v437, 16
      %v540 = vpop.permute.xlu0 %539
      %541 = vrot.lane.b32.xlu0 %v438, 16
      %v542 = vpop.permute.xlu0 %541
      %543 = vrot.lane.b32.xlu0 %v439, 16
      %v544 = vpop.permute.xlu0 %543
      %561 = vrot.lane.b32.xlu0 %v440, 24
      %v562 = vpop.permute.xlu0 %561
      %563 = vrot.lane.b32.xlu0 %v441, 24
      %v564 = vpop.permute.xlu0 %563
      %565 = vrot.lane.b32.xlu0 %v442, 24
      %v566 = vpop.permute.xlu0 %565
      %567 = vrot.lane.b32.xlu0 %v443, 24
      %v568 = vpop.permute.xlu0 %567
      %569 = vrot.lane.b32.xlu0 %v444, 24
      %v570 = vpop.permute.xlu0 %569
      %571 = vrot.lane.b32.xlu0 %v445, 24
      %v572 = vpop.permute.xlu0 %571
      %573 = vrot.lane.b32.xlu0 %v446, 24
      %v574 = vpop.permute.xlu0 %573
      %575 = vrot.lane.b32.xlu0 %v447, 24
      %v576 = vpop.permute.xlu0 %575
      %593 = vrot.lane.b32.xlu0 %v448, 32
      %v594 = vpop.permute.xlu0 %593
      %595 = vrot.lane.b32.xlu0 %v449, 32
      %v596 = vpop.permute.xlu0 %595
      %597 = vrot.lane.b32.xlu0 %v450, 32
      %v598 = vpop.permute.xlu0 %597
      %599 = vrot.lane.b32.xlu0 %v451, 32
      %v600 = vpop.permute.xlu0 %599
      %601 = vrot.lane.b32.xlu0 %v452, 32
      %v602 = vpop.permute.xlu0 %601
      %603 = vrot.lane.b32.xlu0 %v453, 32
      %v604 = vpop.permute.xlu0 %603
      %605 = vrot.lane.b32.xlu0 %v454, 32
      %v606 = vpop.permute.xlu0 %605
      %607 = vrot.lane.b32.xlu0 %v455, 32
      %v608 = vpop.permute.xlu0 %607
      %625 = vrot.lane.b32.xlu0 %v456, 40
      %v626 = vpop.permute.xlu0 %625
      %627 = vrot.lane.b32.xlu0 %v457, 40
      %v628 = vpop.permute.xlu0 %627
      %629 = vrot.lane.b32.xlu0 %v458, 40
      %v630 = vpop.permute.xlu0 %629
      %631 = vrot.lane.b32.xlu0 %v459, 40
      %v632 = vpop.permute.xlu0 %631
      %633 = vrot.lane.b32.xlu0 %v460, 40
      %v634 = vpop.permute.xlu0 %633
      %635 = vrot.lane.b32.xlu0 %v461, 40
      %v636 = vpop.permute.xlu0 %635
      %637 = vrot.lane.b32.xlu0 %v462, 40
      %v638 = vpop.permute.xlu0 %637
      %639 = vrot.lane.b32.xlu0 %v463, 40
      %v640 = vpop.permute.xlu0 %639
      %657 = vrot.lane.b32.xlu0 %v465, 48
      %v658 = vpop.permute.xlu0 %657
      %659 = vrot.lane.b32.xlu0 %v466, 48
      %v660 = vpop.permute.xlu0 %659
      %661 = vrot.lane.b32.xlu0 %v467, 48
      %v662 = vpop.permute.xlu0 %661
      %663 = vrot.lane.b32.xlu0 %v468, 48
      %v664 = vpop.permute.xlu0 %663
      %665 = vrot.lane.b32.xlu0 %v469, 48
      %v666 = vpop.permute.xlu0 %665
      %667 = vrot.lane.b32.xlu0 %v470, 48
      %v668 = vpop.permute.xlu0 %667
      %669 = vrot.lane.b32.xlu0 %v471, 48
      %v670 = vpop.permute.xlu0 %669
      %671 = vrot.lane.b32.xlu0 %v472, 48
      %v672 = vpop.permute.xlu0 %671
      %689 = vrot.lane.b32.xlu0 %v473, 56
      %v690 = vpop.permute.xlu0 %689
      %691 = vrot.lane.b32.xlu0 %v474, 56
      %v692 = vpop.permute.xlu0 %691
      %693 = vrot.lane.b32.xlu0 %v475, 56
      %v694 = vpop.permute.xlu0 %693
      %695 = vrot.lane.b32.xlu0 %v476, 56
      %v696 = vpop.permute.xlu0 %695
      %697 = vrot.lane.b32.xlu0 %v477, 56
      %v698 = vpop.permute.xlu0 %697
      %699 = vrot.lane.b32.xlu0 %v478, 56
      %v700 = vpop.permute.xlu0 %699
      %701 = vrot.lane.b32.xlu0 %v479, 56
      %v702 = vpop.permute.xlu0 %701
      %703 = vrot.lane.b32.xlu0 %v480, 56
      %v704 = vpop.permute.xlu0 %703
      %721 = vrot.lane.b32.xlu0 %v481, 64
      %v722 = vpop.permute.xlu0 %721
      %723 = vrot.lane.b32.xlu0 %v482, 64
      %v724 = vpop.permute.xlu0 %723
      %725 = vrot.lane.b32.xlu0 %v483, 64
      %v726 = vpop.permute.xlu0 %725
      %727 = vrot.lane.b32.xlu0 %v484, 64
      %v728 = vpop.permute.xlu0 %727
      %729 = vrot.lane.b32.xlu0 %v485, 64
      %v730 = vpop.permute.xlu0 %729
      %731 = vrot.lane.b32.xlu0 %v486, 64
      %v732 = vpop.permute.xlu0 %731
      %733 = vrot.lane.b32.xlu0 %v487, 64
      %v734 = vpop.permute.xlu0 %733
      %735 = vrot.lane.b32.xlu0 %v488, 64
      %v736 = vpop.permute.xlu0 %735
      %v745 = vsel %vm407, %v416, %v498
      %v746 = vsel %vm407, %v417, %v500
      %v747 = vsel %vm407, %v418, %v502
      %v748 = vsel %vm407, %v419, %v504
      %v749 = vsel %vm407, %v420, %v506
      %v750 = vsel %vm407, %v421, %v508
      %v751 = vsel %vm407, %v422, %v510
      %v752 = vsel %vm407, %v423, %v512
      %v753 = vsel %vm336, %v745, %v530
      %v754 = vsel %vm336, %v746, %v532
      %v755 = vsel %vm336, %v747, %v534
      %v756 = vsel %vm336, %v748, %v536
      %v757 = vsel %vm336, %v749, %v538
      %v758 = vsel %vm336, %v750, %v540
      %v759 = vsel %vm336, %v751, %v542
      %v760 = vsel %vm336, %v752, %v544
      %vm761 = vcmask 195584
      %v762 = vsel %vm761, %v753, %v562
      %v763 = vsel %vm761, %v754, %v564
      %v764 = vsel %vm761, %v755, %v566
      %v765 = vsel %vm761, %v756, %v568
      %v766 = vsel %vm761, %v757, %v570
      %v767 = vsel %vm761, %v758, %v572
      %v768 = vsel %vm761, %v759, %v574
      %v769 = vsel %vm761, %v760, %v576
      %vm770 = vcmask 261120
      %v771 = vsel %vm770, %v762, %v594
      %v772 = vsel %vm770, %v763, %v596
      %v773 = vsel %vm770, %v764, %v598
      %v774 = vsel %vm770, %v765, %v600
      %v775 = vsel %vm770, %v766, %v602
      %v776 = vsel %vm770, %v767, %v604
      %v777 = vsel %vm770, %v768, %v606
      %v778 = vsel %vm770, %v769, %v608
      %vm779 = vcmask 326656
      %v780 = vsel %vm779, %v771, %v626
      %v781 = vsel %vm779, %v772, %v628
      %v782 = vsel %vm779, %v773, %v630
      %v783 = vsel %vm779, %v774, %v632
      %v784 = vsel %vm779, %v775, %v634
      %v785 = vsel %vm779, %v776, %v636
      %v786 = vsel %vm779, %v777, %v638
      %v787 = vsel %vm779, %v778, %v640
      %vm788 = vcmask 392192
      %v789 = vsel %vm788, %v780, %v658
      %v790 = vsel %vm788, %v781, %v660
      %v791 = vsel %vm788, %v782, %v662
      %v792 = vsel %vm788, %v783, %v664
      %v793 = vsel %vm788, %v784, %v666
      %v794 = vsel %vm788, %v785, %v668
      %v795 = vsel %vm788, %v786, %v670
      %v796 = vsel %vm788, %v787, %v672
      %vm797 = vcmask 457728
      %v798 = vsel %vm797, %v789, %v690
      %v799 = vsel %vm797, %v790, %v692
      %v800 = vsel %vm797, %v791, %v694
      %v801 = vsel %vm797, %v792, %v696
      %v802 = vsel %vm797, %v793, %v698
      %v803 = vsel %vm797, %v794, %v700
      %v804 = vsel %vm797, %v795, %v702
      %v805 = vsel %vm797, %v796, %v704
      %vm806 = vcmask 523264
      %v807 = vsel %vm806, %v798, %v722
      %v808 = vsel %vm806, %v799, %v724
      %v809 = vsel %vm806, %v800, %v726
      %v810 = vsel %vm806, %v801, %v728
      %v811 = vsel %vm806, %v802, %v730
      %v812 = vsel %vm806, %v803, %v732
      %v813 = vsel %vm806, %v804, %v734
      %v814 = vsel %vm806, %v805, %v736
      %s815 = scalar_lea.vmem [#allocation2], 176
      %816 = vst.msk [vmem:[%s815 + $0x1] sm:$0xff] %vm407, %v398
      %817 = vst.msk [vmem:[%s815 + $0x11] sm:$0xff] %vm407, %v399
      %818 = vst.msk [vmem:[%s815 + $0x21] sm:$0xff] %vm407, %v400
      %819 = vst.msk [vmem:[%s815 + $0x31] sm:$0xff] %vm407, %v401
      %820 = vst.msk [vmem:[%s815 + $0x41] sm:$0xff] %vm407, %v402
      %821 = vst.msk [vmem:[%s815 + $0x51] sm:$0xff] %vm407, %v403
      %822 = vst.msk [vmem:[%s815 + $0x61] sm:$0xff] %vm407, %v404
      %823 = vst.msk [vmem:[%s815 + $0x71] sm:$0xff] %vm407, %v405
      %v824 = vld [vmem:[%s364] sm:$0xff]
      %v825 = vld [vmem:[%s364 + $0x10] sm:$0xff]
      %v826 = vld [vmem:[%s364 + $0x20] sm:$0xff]
      %v827 = vld [vmem:[%s364 + $0x30] sm:$0xff]
      %v828 = vld [vmem:[%s364 + $0x40] sm:$0xff]
      %v829 = vld [vmem:[%s364 + $0x50] sm:$0xff]
      %v830 = vld [vmem:[%s364 + $0x60] sm:$0xff]
      %v831 = vld [vmem:[%s364 + $0x70] sm:$0xff]
      %v832 = vld [vmem:[%s364 + $0x1] sm:$0xff]
      %v833 = vld [vmem:[%s364 + $0x11] sm:$0xff]
      %v834 = vld [vmem:[%s364 + $0x21] sm:$0xff]
      %v835 = vld [vmem:[%s364 + $0x31] sm:$0xff]
      %v836 = vld [vmem:[%s364 + $0x41] sm:$0xff]
      %v837 = vld [vmem:[%s364 + $0x51] sm:$0xff]
      %v838 = vld [vmem:[%s364 + $0x61] sm:$0xff]
      %v839 = vld [vmem:[%s364 + $0x71] sm:$0xff]
      %v840 = vld [vmem:[%s364 + $0x2] sm:$0xff]
      %v841 = vld [vmem:[%s364 + $0x12] sm:$0xff]
      %v842 = vld [vmem:[%s364 + $0x22] sm:$0xff]
      %v843 = vld [vmem:[%s364 + $0x32] sm:$0xff]
      %v844 = vld [vmem:[%s364 + $0x42] sm:$0xff]
      %v845 = vld [vmem:[%s364 + $0x52] sm:$0xff]
      %v846 = vld [vmem:[%s364 + $0x62] sm:$0xff]
      %v847 = vld [vmem:[%s364 + $0x72] sm:$0xff]
      %v848 = vld [vmem:[%s815] sm:$0xff]
      %v849 = vld [vmem:[%s815 + $0x10] sm:$0xff]
      %v850 = vld [vmem:[%s815 + $0x20] sm:$0xff]
      %v851 = vld [vmem:[%s815 + $0x30] sm:$0xff]
      %v852 = vld [vmem:[%s815 + $0x40] sm:$0xff]
      %v853 = vld [vmem:[%s815 + $0x50] sm:$0xff]
      %v854 = vld [vmem:[%s815 + $0x60] sm:$0xff]
      %v855 = vld [vmem:[%s815 + $0x70] sm:$0xff]
      %v856 = vld [vmem:[%s815 + $0x1] sm:$0xff]
      %v857 = vld [vmem:[%s815 + $0x11] sm:$0xff]
      %v858 = vld [vmem:[%s815 + $0x21] sm:$0xff]
      %v859 = vld [vmem:[%s815 + $0x31] sm:$0xff]
      %v860 = vld [vmem:[%s815 + $0x41] sm:$0xff]
      %v861 = vld [vmem:[%s815 + $0x51] sm:$0xff]
      %v862 = vld [vmem:[%s815 + $0x61] sm:$0xff]
      %v863 = vld [vmem:[%s815 + $0x71] sm:$0xff]
      %v864 = vld [vmem:[%s815 + $0x2] sm:$0xff]
      %v865 = vld [vmem:[%s815 + $0x12] sm:$0xff]
      %v866 = vld [vmem:[%s815 + $0x22] sm:$0xff]
      %v867 = vld [vmem:[%s815 + $0x32] sm:$0xff]
      %v868 = vld [vmem:[%s815 + $0x42] sm:$0xff]
      %v869 = vld [vmem:[%s815 + $0x52] sm:$0xff]
      %v870 = vld [vmem:[%s815 + $0x62] sm:$0xff]
      %v871 = vld [vmem:[%s815 + $0x72] sm:$0xff]
      %s872 = scalar_lea.vmem [#allocation2], 192
      %v873 = vld [vmem:[%s872] sm:$0xff]
      %v874 = vld [vmem:[%s872 + $0x10] sm:$0xff]
      %v875 = vld [vmem:[%s872 + $0x20] sm:$0xff]
      %v876 = vld [vmem:[%s872 + $0x30] sm:$0xff]
      %v877 = vld [vmem:[%s872 + $0x40] sm:$0xff]
      %v878 = vld [vmem:[%s872 + $0x50] sm:$0xff]
      %v879 = vld [vmem:[%s872 + $0x60] sm:$0xff]
      %v880 = vld [vmem:[%s872 + $0x70] sm:$0xff]
      %v881 = vld [vmem:[%s872 + $0x1] sm:$0xff]
      %v882 = vld [vmem:[%s872 + $0x11] sm:$0xff]
      %v883 = vld [vmem:[%s872 + $0x21] sm:$0xff]
      %v884 = vld [vmem:[%s872 + $0x31] sm:$0xff]
      %v885 = vld [vmem:[%s872 + $0x41] sm:$0xff]
      %v886 = vld [vmem:[%s872 + $0x51] sm:$0xff]
      %v887 = vld [vmem:[%s872 + $0x61] sm:$0xff]
      %v888 = vld [vmem:[%s872 + $0x71] sm:$0xff]
      %v889 = vld [vmem:[%s872 + $0x2] sm:$0xff]
      %v890 = vld [vmem:[%s872 + $0x12] sm:$0xff]
      %v891 = vld [vmem:[%s872 + $0x22] sm:$0xff]
      %v892 = vld [vmem:[%s872 + $0x32] sm:$0xff]
      %v893 = vld [vmem:[%s872 + $0x42] sm:$0xff]
      %v894 = vld [vmem:[%s872 + $0x52] sm:$0xff]
      %v895 = vld [vmem:[%s872 + $0x62] sm:$0xff]
      %v896 = vld [vmem:[%s872 + $0x72] sm:$0xff]
      %905 = vrot.lane.b32.xlu0 %v832, 8
      %v906 = vpop.permute.xlu0 %905
      %907 = vrot.lane.b32.xlu0 %v833, 8
      %v908 = vpop.permute.xlu0 %907
      %909 = vrot.lane.b32.xlu0 %v834, 8
      %v910 = vpop.permute.xlu0 %909
      %911 = vrot.lane.b32.xlu0 %v835, 8
      %v912 = vpop.permute.xlu0 %911
      %913 = vrot.lane.b32.xlu0 %v836, 8
      %v914 = vpop.permute.xlu0 %913
      %915 = vrot.lane.b32.xlu0 %v837, 8
      %v916 = vpop.permute.xlu0 %915
      %917 = vrot.lane.b32.xlu0 %v838, 8
      %v918 = vpop.permute.xlu0 %917
      %919 = vrot.lane.b32.xlu0 %v839, 8
      %v920 = vpop.permute.xlu0 %919
      %937 = vrot.lane.b32.xlu0 %v840, 16
      %v938 = vpop.permute.xlu0 %937
      %939 = vrot.lane.b32.xlu0 %v841, 16
      %v940 = vpop.permute.xlu0 %939
      %941 = vrot.lane.b32.xlu0 %v842, 16
      %v942 = vpop.permute.xlu0 %941
      %943 = vrot.lane.b32.xlu0 %v843, 16
      %v944 = vpop.permute.xlu0 %943
      %945 = vrot.lane.b32.xlu0 %v844, 16
      %v946 = vpop.permute.xlu0 %945
      %947 = vrot.lane.b32.xlu0 %v845, 16
      %v948 = vpop.permute.xlu0 %947
      %949 = vrot.lane.b32.xlu0 %v846, 16
      %v950 = vpop.permute.xlu0 %949
      %951 = vrot.lane.b32.xlu0 %v847, 16
      %v952 = vpop.permute.xlu0 %951
      %969 = vrot.lane.b32.xlu0 %v848, 24
      %v970 = vpop.permute.xlu0 %969
      %971 = vrot.lane.b32.xlu0 %v849, 24
      %v972 = vpop.permute.xlu0 %971
      %973 = vrot.lane.b32.xlu0 %v850, 24
      %v974 = vpop.permute.xlu0 %973
      %975 = vrot.lane.b32.xlu0 %v851, 24
      %v976 = vpop.permute.xlu0 %975
      %977 = vrot.lane.b32.xlu0 %v852, 24
      %v978 = vpop.permute.xlu0 %977
      %979 = vrot.lane.b32.xlu0 %v853, 24
      %v980 = vpop.permute.xlu0 %979
      %981 = vrot.lane.b32.xlu0 %v854, 24
      %v982 = vpop.permute.xlu0 %981
      %983 = vrot.lane.b32.xlu0 %v855, 24
      %v984 = vpop.permute.xlu0 %983
      %1001 = vrot.lane.b32.xlu0 %v856, 32
      %v1002 = vpop.permute.xlu0 %1001
      %1003 = vrot.lane.b32.xlu0 %v857, 32
      %v1004 = vpop.permute.xlu0 %1003
      %1005 = vrot.lane.b32.xlu0 %v858, 32
      %v1006 = vpop.permute.xlu0 %1005
      %1007 = vrot.lane.b32.xlu0 %v859, 32
      %v1008 = vpop.permute.xlu0 %1007
      %1009 = vrot.lane.b32.xlu0 %v860, 32
      %v1010 = vpop.permute.xlu0 %1009
      %1011 = vrot.lane.b32.xlu0 %v861, 32
      %v1012 = vpop.permute.xlu0 %1011
      %1013 = vrot.lane.b32.xlu0 %v862, 32
      %v1014 = vpop.permute.xlu0 %1013
      %1015 = vrot.lane.b32.xlu0 %v863, 32
      %v1016 = vpop.permute.xlu0 %1015
      %1033 = vrot.lane.b32.xlu0 %v864, 40
      %v1034 = vpop.permute.xlu0 %1033
      %1035 = vrot.lane.b32.xlu0 %v865, 40
      %v1036 = vpop.permute.xlu0 %1035
      %1037 = vrot.lane.b32.xlu0 %v866, 40
      %v1038 = vpop.permute.xlu0 %1037
      %1039 = vrot.lane.b32.xlu0 %v867, 40
      %v1040 = vpop.permute.xlu0 %1039
      %1041 = vrot.lane.b32.xlu0 %v868, 40
      %v1042 = vpop.permute.xlu0 %1041
      %1043 = vrot.lane.b32.xlu0 %v869, 40
      %v1044 = vpop.permute.xlu0 %1043
      %1045 = vrot.lane.b32.xlu0 %v870, 40
      %v1046 = vpop.permute.xlu0 %1045
      %1047 = vrot.lane.b32.xlu0 %v871, 40
      %v1048 = vpop.permute.xlu0 %1047
      %1065 = vrot.lane.b32.xlu0 %v873, 48
      %v1066 = vpop.permute.xlu0 %1065
      %1067 = vrot.lane.b32.xlu0 %v874, 48
      %v1068 = vpop.permute.xlu0 %1067
      %1069 = vrot.lane.b32.xlu0 %v875, 48
      %v1070 = vpop.permute.xlu0 %1069
      %1071 = vrot.lane.b32.xlu0 %v876, 48
      %v1072 = vpop.permute.xlu0 %1071
      %1073 = vrot.lane.b32.xlu0 %v877, 48
      %v1074 = vpop.permute.xlu0 %1073
      %1075 = vrot.lane.b32.xlu0 %v878, 48
      %v1076 = vpop.permute.xlu0 %1075
      %1077 = vrot.lane.b32.xlu0 %v879, 48
      %v1078 = vpop.permute.xlu0 %1077
      %1079 = vrot.lane.b32.xlu0 %v880, 48
      %v1080 = vpop.permute.xlu0 %1079
      %1097 = vrot.lane.b32.xlu0 %v881, 56
      %v1098 = vpop.permute.xlu0 %1097
      %1099 = vrot.lane.b32.xlu0 %v882, 56
      %v1100 = vpop.permute.xlu0 %1099
      %1101 = vrot.lane.b32.xlu0 %v883, 56
      %v1102 = vpop.permute.xlu0 %1101
      %1103 = vrot.lane.b32.xlu0 %v884, 56
      %v1104 = vpop.permute.xlu0 %1103
      %1105 = vrot.lane.b32.xlu0 %v885, 56
      %v1106 = vpop.permute.xlu0 %1105
      %1107 = vrot.lane.b32.xlu0 %v886, 56
      %v1108 = vpop.permute.xlu0 %1107
      %1109 = vrot.lane.b32.xlu0 %v887, 56
      %v1110 = vpop.permute.xlu0 %1109
      %1111 = vrot.lane.b32.xlu0 %v888, 56
      %v1112 = vpop.permute.xlu0 %1111
      %1129 = vrot.lane.b32.xlu0 %v889, 64
      %v1130 = vpop.permute.xlu0 %1129
      %1131 = vrot.lane.b32.xlu0 %v890, 64
      %v1132 = vpop.permute.xlu0 %1131
      %1133 = vrot.lane.b32.xlu0 %v891, 64
      %v1134 = vpop.permute.xlu0 %1133
      %1135 = vrot.lane.b32.xlu0 %v892, 64
      %v1136 = vpop.permute.xlu0 %1135
      %1137 = vrot.lane.b32.xlu0 %v893, 64
      %v1138 = vpop.permute.xlu0 %1137
      %1139 = vrot.lane.b32.xlu0 %v894, 64
      %v1140 = vpop.permute.xlu0 %1139
      %1141 = vrot.lane.b32.xlu0 %v895, 64
      %v1142 = vpop.permute.xlu0 %1141
      %1143 = vrot.lane.b32.xlu0 %v896, 64
      %v1144 = vpop.permute.xlu0 %1143
      %v1153 = vsel %vm407, %v824, %v906
      %v1154 = vsel %vm407, %v825, %v908
      %v1155 = vsel %vm407, %v826, %v910
      %v1156 = vsel %vm407, %v827, %v912
      %v1157 = vsel %vm407, %v828, %v914
      %v1158 = vsel %vm407, %v829, %v916
      %v1159 = vsel %vm407, %v830, %v918
      %v1160 = vsel %vm407, %v831, %v920
      %v1161 = vsel %vm336, %v1153, %v938
      %v1162 = vsel %vm336, %v1154, %v940
      %v1163 = vsel %vm336, %v1155, %v942
      %v1164 = vsel %vm336, %v1156, %v944
      %v1165 = vsel %vm336, %v1157, %v946
      %v1166 = vsel %vm336, %v1158, %v948
      %v1167 = vsel %vm336, %v1159, %v950
      %v1168 = vsel %vm336, %v1160, %v952
      %v1169 = vsel %vm761, %v1161, %v970
      %v1170 = vsel %vm761, %v1162, %v972
      %v1171 = vsel %vm761, %v1163, %v974
      %v1172 = vsel %vm761, %v1164, %v976
      %v1173 = vsel %vm761, %v1165, %v978
      %v1174 = vsel %vm761, %v1166, %v980
      %v1175 = vsel %vm761, %v1167, %v982
      %v1176 = vsel %vm761, %v1168, %v984
      %v1177 = vsel %vm770, %v1169, %v1002
      %v1178 = vsel %vm770, %v1170, %v1004
      %v1179 = vsel %vm770, %v1171, %v1006
      %v1180 = vsel %vm770, %v1172, %v1008
      %v1181 = vsel %vm770, %v1173, %v1010
      %v1182 = vsel %vm770, %v1174, %v1012
      %v1183 = vsel %vm770, %v1175, %v1014
      %v1184 = vsel %vm770, %v1176, %v1016
      %v1185 = vsel %vm779, %v1177, %v1034
      %v1186 = vsel %vm779, %v1178, %v1036
      %v1187 = vsel %vm779, %v1179, %v1038
      %v1188 = vsel %vm779, %v1180, %v1040
      %v1189 = vsel %vm779, %v1181, %v1042
      %v1190 = vsel %vm779, %v1182, %v1044
      %v1191 = vsel %vm779, %v1183, %v1046
      %v1192 = vsel %vm779, %v1184, %v1048
      %v1193 = vsel %vm788, %v1185, %v1066
      %v1194 = vsel %vm788, %v1186, %v1068
      %v1195 = vsel %vm788, %v1187, %v1070
      %v1196 = vsel %vm788, %v1188, %v1072
      %v1197 = vsel %vm788, %v1189, %v1074
      %v1198 = vsel %vm788, %v1190, %v1076
      %v1199 = vsel %vm788, %v1191, %v1078
      %v1200 = vsel %vm788, %v1192, %v1080
      %v1201 = vsel %vm797, %v1193, %v1098
      %v1202 = vsel %vm797, %v1194, %v1100
      %v1203 = vsel %vm797, %v1195, %v1102
      %v1204 = vsel %vm797, %v1196, %v1104
      %v1205 = vsel %vm797, %v1197, %v1106
      %v1206 = vsel %vm797, %v1198, %v1108
      %v1207 = vsel %vm797, %v1199, %v1110
      %v1208 = vsel %vm797, %v1200, %v1112
      %v1209 = vsel %vm806, %v1201, %v1130
      %v1210 = vsel %vm806, %v1202, %v1132
      %v1211 = vsel %vm806, %v1203, %v1134
      %v1212 = vsel %vm806, %v1204, %v1136
      %v1213 = vsel %vm806, %v1205, %v1138
      %v1214 = vsel %vm806, %v1206, %v1140
      %v1215 = vsel %vm806, %v1207, %v1142
      %v1216 = vsel %vm806, %v1208, %v1144
      %v1217 = vld [vmem:[%s1] sm:$0xff]
      %v1218 = vld [vmem:[%s1 + $0x8] sm:$0xff]
      %v1219 = vld [vmem:[%s1 + $0x10] sm:$0xff]
      %v1220 = vld [vmem:[%s1 + $0x18] sm:$0xff]
      %v1221 = vld [vmem:[%s1 + $0x20] sm:$0xff]
      %v1222 = vld [vmem:[%s1 + $0x28] sm:$0xff]
      %v1223 = vld [vmem:[%s1 + $0x30] sm:$0xff]
      %v1224 = vld [vmem:[%s1 + $0x38] sm:$0xff]
      %v1225 = vld [vmem:[%s1 + $0x40] sm:$0xff]
      %v1226 = vld [vmem:[%s2] sm:$0x1]
      %v1228 = vperm.slane %v1226, 0
      %vm1230 = vcmask 588800
      %v1232 = vsel %vm1230, %v807, 0
      %v1235 = vsel %vm1230, %v808, 0
      %v1238 = vsel %vm1230, %v809, 0
      %v1241 = vsel %vm1230, %v810, 0
      %v1244 = vsel %vm1230, %v811, 0
      %v1247 = vsel %vm1230, %v812, 0
      %v1250 = vsel %vm1230, %v813, 0
      %v1253 = vsel %vm1230, %v814, 0
      %v1256 = vsel %vm1230, %v1209, 0
      %v1259 = vsel %vm1230, %v1210, 0
      %v1262 = vsel %vm1230, %v1211, 0
      %v1265 = vsel %vm1230, %v1212, 0
      %v1268 = vsel %vm1230, %v1213, 0
      %v1271 = vsel %vm1230, %v1214, 0
      %v1274 = vsel %vm1230, %v1215, 0
      %v1277 = vsel %vm1230, %v1216, 0
      %1279 = vmatpush.msra.mxu0 0.0
      %1280 = vmatpush.msra.mxu0 0.0
      %1281 = vmatpush.msra.mxu0 0.0
      %1282 = vmatpush.msra.mxu0 0.0
      %1283 = vmatpush.msra.mxu0 0.0
      %1284 = vmatpush.msra.mxu0 0.0
      %1285 = vmatpush.msra.mxu0 0.0
      %1286 = vmatpush.msra.mxu0 %v1225
      %1287 = vmatpush.msra.mxu0 %v1224
      %1288 = vmatpush.msra.mxu0 %v1223
      %1289 = vmatpush.msra.mxu0 %v1222
      %1290 = vmatpush.msra.mxu0 %v1221
      %1291 = vmatpush.msra.mxu0 %v1220
      %1292 = vmatpush.msra.mxu0 %v1219
      %1293 = vmatpush.msra.mxu0 %v1218
      %1294 = vmatpush.msra.mxu0 %v1217
      %1295 = vmatmul.f32.gmra.mxu0 %v1232
      %v1296 = vpop.f32.mrf.mxu0
      %v1297 = vadd.f32 %v1228, %v1296
      %1298 = vmatmul.f32.gmra.mxu0 %v1235
      %v1299 = vpop.f32.mrf.mxu0
      %v1300 = vadd.f32 %v1228, %v1299
      %1301 = vmatmul.f32.gmra.mxu0 %v1238
      %v1302 = vpop.f32.mrf.mxu0
      %v1303 = vadd.f32 %v1228, %v1302
      %1304 = vmatmul.f32.gmra.mxu0 %v1241
      %v1305 = vpop.f32.mrf.mxu0
      %v1306 = vadd.f32 %v1228, %v1305
      %1307 = vmatmul.f32.gmra.mxu0 %v1244
      %v1308 = vpop.f32.mrf.mxu0
      %v1309 = vadd.f32 %v1228, %v1308
      %1310 = vmatmul.f32.gmra.mxu0 %v1247
      %v1311 = vpop.f32.mrf.mxu0
      %v1312 = vadd.f32 %v1228, %v1311
      %1313 = vmatmul.f32.gmra.mxu0 %v1250
      %v1314 = vpop.f32.mrf.mxu0
      %v1315 = vadd.f32 %v1228, %v1314
      %1316 = vmatmul.f32.gmra.mxu0 %v1253
      %v1317 = vpop.f32.mrf.mxu0
      %v1318 = vadd.f32 %v1228, %v1317
      %1319 = vmatmul.f32.gmra.mxu0 %v1256
      %v1320 = vpop.f32.mrf.mxu0
      %v1321 = vadd.f32 %v1228, %v1320
      %1322 = vmatmul.f32.gmra.mxu0 %v1259
      %v1323 = vpop.f32.mrf.mxu0
      %v1324 = vadd.f32 %v1228, %v1323
      %1325 = vmatmul.f32.gmra.mxu0 %v1262
      %v1326 = vpop.f32.mrf.mxu0
      %v1327 = vadd.f32 %v1228, %v1326
      %1328 = vmatmul.f32.gmra.mxu0 %v1265
      %v1329 = vpop.f32.mrf.mxu0
      %v1330 = vadd.f32 %v1228, %v1329
      %1331 = vmatmul.f32.gmra.mxu0 %v1268
      %v1332 = vpop.f32.mrf.mxu0
      %v1333 = vadd.f32 %v1228, %v1332
      %1334 = vmatmul.f32.gmra.mxu0 %v1271
      %v1335 = vpop.f32.mrf.mxu0
      %v1336 = vadd.f32 %v1228, %v1335
      %1337 = vmatmul.f32.gmra.mxu0 %v1274
      %v1338 = vpop.f32.mrf.mxu0
      %v1339 = vadd.f32 %v1228, %v1338
      %1340 = vmatmul.f32.gmra.mxu0 %v1277
      %v1341 = vpop.f32.mrf.mxu0
      %v1342 = vadd.f32 %v1228, %v1341
      %1343 = vdwg.mxu0
      %v1344 = vmax.f32 %v1297, 0.0
      %v1345 = vmax.f32 %v1300, 0.0
      %v1346 = vmax.f32 %v1303, 0.0
      %v1347 = vmax.f32 %v1306, 0.0
      %v1348 = vmax.f32 %v1309, 0.0
      %v1349 = vmax.f32 %v1312, 0.0
      %v1350 = vmax.f32 %v1315, 0.0
      %v1351 = vmax.f32 %v1318, 0.0
      %v1352 = vmax.f32 %v1321, 0.0
      %v1353 = vmax.f32 %v1324, 0.0
      %v1354 = vmax.f32 %v1327, 0.0
      %v1355 = vmax.f32 %v1330, 0.0
      %v1356 = vmax.f32 %v1333, 0.0
      %v1357 = vmax.f32 %v1336, 0.0
      %v1358 = vmax.f32 %v1339, 0.0
      %v1359 = vmax.f32 %v1342, 0.0
      %v1360 = vld [vmem:[%s5] sm:$0xff]
      %v1361 = vld [vmem:[%s6] sm:$0x1]
      %v1363 = vperm.slane %v1361, 0
      %v1366 = vsel %vm407, %v1344, 0
      %v1369 = vsel %vm407, %v1345, 0
      %v1372 = vsel %vm407, %v1346, 0
      %v1375 = vsel %vm407, %v1347, 0
      %v1378 = vsel %vm407, %v1348, 0
      %v1381 = vsel %vm407, %v1349, 0
      %v1384 = vsel %vm407, %v1350, 0
      %v1387 = vsel %vm407, %v1351, 0
      %v1390 = vsel %vm407, %v1352, 0
      %v1393 = vsel %vm407, %v1353, 0
      %v1396 = vsel %vm407, %v1354, 0
      %v1399 = vsel %vm407, %v1355, 0
      %v1402 = vsel %vm407, %v1356, 0
      %v1405 = vsel %vm407, %v1357, 0
      %v1408 = vsel %vm407, %v1358, 0
      %v1411 = vsel %vm407, %v1359, 0
      %1413 = vmatpush.msra.mxu0 0.0
      %1414 = vmatpush.msra.mxu0 0.0
      %1415 = vmatpush.msra.mxu0 0.0
      %1416 = vmatpush.msra.mxu0 0.0
      %1417 = vmatpush.msra.mxu0 0.0
      %1418 = vmatpush.msra.mxu0 0.0
      %1419 = vmatpush.msra.mxu0 0.0
      %1420 = vmatpush.msra.mxu0 0.0
      %1421 = vmatpush.msra.mxu0 0.0
      %1422 = vmatpush.msra.mxu0 0.0
      %1423 = vmatpush.msra.mxu0 0.0
      %1424 = vmatpush.msra.mxu0 0.0
      %1425 = vmatpush.msra.mxu0 0.0
      %1426 = vmatpush.msra.mxu0 0.0
      %1427 = vmatpush.msra.mxu0 0.0
      %1428 = vmatpush.msra.mxu0 %v1360
      %1429 = vmatmul.f32.gmra.mxu0 %v1366
      %v1430 = vpop.f32.mrf.mxu0
      %v1431 = vadd.f32 %v1363, %v1430
      %1432 = vmatmul.f32.gmra.mxu0 %v1369
      %v1433 = vpop.f32.mrf.mxu0
      %v1434 = vadd.f32 %v1363, %v1433
      %1435 = vmatmul.f32.gmra.mxu0 %v1372
      %v1436 = vpop.f32.mrf.mxu0
      %v1437 = vadd.f32 %v1363, %v1436
      %1438 = vmatmul.f32.gmra.mxu0 %v1375
      %v1439 = vpop.f32.mrf.mxu0
      %v1440 = vadd.f32 %v1363, %v1439
      %1441 = vmatmul.f32.gmra.mxu0 %v1378
      %v1442 = vpop.f32.mrf.mxu0
      %v1443 = vadd.f32 %v1363, %v1442
      %1444 = vmatmul.f32.gmra.mxu0 %v1381
      %v1445 = vpop.f32.mrf.mxu0
      %v1446 = vadd.f32 %v1363, %v1445
      %1447 = vmatmul.f32.gmra.mxu0 %v1384
      %v1448 = vpop.f32.mrf.mxu0
      %v1449 = vadd.f32 %v1363, %v1448
      %1450 = vmatmul.f32.gmra.mxu0 %v1387
      %v1451 = vpop.f32.mrf.mxu0
      %v1452 = vadd.f32 %v1363, %v1451
      %1453 = vmatmul.f32.gmra.mxu0 %v1390
      %v1454 = vpop.f32.mrf.mxu0
      %v1455 = vadd.f32 %v1363, %v1454
      %1456 = vmatmul.f32.gmra.mxu0 %v1393
      %v1457 = vpop.f32.mrf.mxu0
      %v1458 = vadd.f32 %v1363, %v1457
      %1459 = vmatmul.f32.gmra.mxu0 %v1396
      %v1460 = vpop.f32.mrf.mxu0
      %v1461 = vadd.f32 %v1363, %v1460
      %1462 = vmatmul.f32.gmra.mxu0 %v1399
      %v1463 = vpop.f32.mrf.mxu0
      %v1464 = vadd.f32 %v1363, %v1463
      %1465 = vmatmul.f32.gmra.mxu0 %v1402
      %v1466 = vpop.f32.mrf.mxu0
      %v1467 = vadd.f32 %v1363, %v1466
      %1468 = vmatmul.f32.gmra.mxu0 %v1405
      %v1469 = vpop.f32.mrf.mxu0
      %v1470 = vadd.f32 %v1363, %v1469
      %1471 = vmatmul.f32.gmra.mxu0 %v1408
      %v1472 = vpop.f32.mrf.mxu0
      %v1473 = vadd.f32 %v1363, %v1472
      %1474 = vmatmul.f32.gmra.mxu0 %v1411
      %v1475 = vpop.f32.mrf.mxu0
      %v1476 = vadd.f32 %v1363, %v1475
      %1477 = vdwg.mxu0
      %v1478 = vmax.f32 %v1431, 0.0
      %v1479 = vmax.f32 %v1434, 0.0
      %v1480 = vmax.f32 %v1437, 0.0
      %v1481 = vmax.f32 %v1440, 0.0
      %v1482 = vmax.f32 %v1443, 0.0
      %v1483 = vmax.f32 %v1446, 0.0
      %v1484 = vmax.f32 %v1449, 0.0
      %v1485 = vmax.f32 %v1452, 0.0
      %v1486 = vmax.f32 %v1455, 0.0
      %v1487 = vmax.f32 %v1458, 0.0
      %v1488 = vmax.f32 %v1461, 0.0
      %v1489 = vmax.f32 %v1464, 0.0
      %v1490 = vmax.f32 %v1467, 0.0
      %v1491 = vmax.f32 %v1470, 0.0
      %v1492 = vmax.f32 %v1473, 0.0
      %v1493 = vmax.f32 %v1476, 0.0
      %1494 = vrot.lane.b32.xlu0 %v1344, 120
      %v1495 = vpop.permute.xlu0 %1494
      %1496 = vrot.lane.b32.xlu0 %v1345, 120
      %v1497 = vpop.permute.xlu0 %1496
      %1498 = vrot.lane.b32.xlu0 %v1346, 120
      %v1499 = vpop.permute.xlu0 %1498
      %1500 = vrot.lane.b32.xlu0 %v1347, 120
      %v1501 = vpop.permute.xlu0 %1500
      %1502 = vrot.lane.b32.xlu0 %v1348, 120
      %v1503 = vpop.permute.xlu0 %1502
      %1504 = vrot.lane.b32.xlu0 %v1349, 120
      %v1505 = vpop.permute.xlu0 %1504
      %1506 = vrot.lane.b32.xlu0 %v1350, 120
      %v1507 = vpop.permute.xlu0 %1506
      %1508 = vrot.lane.b32.xlu0 %v1351, 120
      %v1509 = vpop.permute.xlu0 %1508
      %1510 = vrot.lane.b32.xlu0 %v1352, 120
      %v1511 = vpop.permute.xlu0 %1510
      %1512 = vrot.lane.b32.xlu0 %v1353, 120
      %v1513 = vpop.permute.xlu0 %1512
      %1514 = vrot.lane.b32.xlu0 %v1354, 120
      %v1515 = vpop.permute.xlu0 %1514
      %1516 = vrot.lane.b32.xlu0 %v1355, 120
      %v1517 = vpop.permute.xlu0 %1516
      %1518 = vrot.lane.b32.xlu0 %v1356, 120
      %v1519 = vpop.permute.xlu0 %1518
      %1520 = vrot.lane.b32.xlu0 %v1357, 120
      %v1521 = vpop.permute.xlu0 %1520
      %1522 = vrot.lane.b32.xlu0 %v1358, 120
      %v1523 = vpop.permute.xlu0 %1522
      %1524 = vrot.lane.b32.xlu0 %v1359, 120
      %v1525 = vpop.permute.xlu0 %1524
      %1527 = vrot.lane.b32.xlu0 %v1360, 80
      %v1528 = vpop.permute.xlu0 %1527
      %1530 = vrot.lane.b32.xlu0 %v1363, 80
      %v1531 = vpop.permute.xlu0 %1530
      %v1533 = vsel %vm407, %v1495, 0
      %v1535 = vsel %vm407, %v1497, 0
      %v1537 = vsel %vm407, %v1499, 0
      %v1539 = vsel %vm407, %v1501, 0
      %v1541 = vsel %vm407, %v1503, 0
      %v1543 = vsel %vm407, %v1505, 0
      %v1545 = vsel %vm407, %v1507, 0
      %v1547 = vsel %vm407, %v1509, 0
      %v1549 = vsel %vm407, %v1511, 0
      %v1551 = vsel %vm407, %v1513, 0
      %v1553 = vsel %vm407, %v1515, 0
      %v1555 = vsel %vm407, %v1517, 0
      %v1557 = vsel %vm407, %v1519, 0
      %v1559 = vsel %vm407, %v1521, 0
      %v1561 = vsel %vm407, %v1523, 0
      %v1563 = vsel %vm407, %v1525, 0
      %1565 = vmatpush.msra.mxu0 0.0
      %1566 = vmatpush.msra.mxu0 0.0
      %1567 = vmatpush.msra.mxu0 0.0
      %1568 = vmatpush.msra.mxu0 0.0
      %1569 = vmatpush.msra.mxu0 0.0
      %1570 = vmatpush.msra.mxu0 0.0
      %1571 = vmatpush.msra.mxu0 0.0
      %1572 = vmatpush.msra.mxu0 0.0
      %1573 = vmatpush.msra.mxu0 0.0
      %1574 = vmatpush.msra.mxu0 0.0
      %1575 = vmatpush.msra.mxu0 0.0
      %1576 = vmatpush.msra.mxu0 0.0
      %1577 = vmatpush.msra.mxu0 0.0
      %1578 = vmatpush.msra.mxu0 0.0
      %1579 = vmatpush.msra.mxu0 0.0
      %1580 = vmatpush.msra.mxu0 %v1528
      %1581 = vmatmul.f32.gmra.mxu0 %v1533
      %v1582 = vpop.f32.mrf.mxu0
      %v1583 = vadd.f32 %v1531, %v1582
      %1584 = vmatmul.f32.gmra.mxu0 %v1535
      %v1585 = vpop.f32.mrf.mxu0
      %v1586 = vadd.f32 %v1531, %v1585
      %1587 = vmatmul.f32.gmra.mxu0 %v1537
      %v1588 = vpop.f32.mrf.mxu0
      %v1589 = vadd.f32 %v1531, %v1588
      %1590 = vmatmul.f32.gmra.mxu0 %v1539
      %v1591 = vpop.f32.mrf.mxu0
      %v1592 = vadd.f32 %v1531, %v1591
      %1593 = vmatmul.f32.gmra.mxu0 %v1541
      %v1594 = vpop.f32.mrf.mxu0
      %v1595 = vadd.f32 %v1531, %v1594
      %1596 = vmatmul.f32.gmra.mxu0 %v1543
      %v1597 = vpop.f32.mrf.mxu0
      %v1598 = vadd.f32 %v1531, %v1597
      %1599 = vmatmul.f32.gmra.mxu0 %v1545
      %v1600 = vpop.f32.mrf.mxu0
      %v1601 = vadd.f32 %v1531, %v1600
      %1602 = vmatmul.f32.gmra.mxu0 %v1547
      %v1603 = vpop.f32.mrf.mxu0
      %v1604 = vadd.f32 %v1531, %v1603
      %1605 = vmatmul.f32.gmra.mxu0 %v1549
      %v1606 = vpop.f32.mrf.mxu0
      %v1607 = vadd.f32 %v1531, %v1606
      %1608 = vmatmul.f32.gmra.mxu0 %v1551
      %v1609 = vpop.f32.mrf.mxu0
      %v1610 = vadd.f32 %v1531, %v1609
      %1611 = vmatmul.f32.gmra.mxu0 %v1553
      %v1612 = vpop.f32.mrf.mxu0
      %v1613 = vadd.f32 %v1531, %v1612
      %1614 = vmatmul.f32.gmra.mxu0 %v1555
      %v1615 = vpop.f32.mrf.mxu0
      %v1616 = vadd.f32 %v1531, %v1615
      %1617 = vmatmul.f32.gmra.mxu0 %v1557
      %v1618 = vpop.f32.mrf.mxu0
      %v1619 = vadd.f32 %v1531, %v1618
      %1620 = vmatmul.f32.gmra.mxu0 %v1559
      %v1621 = vpop.f32.mrf.mxu0
      %v1622 = vadd.f32 %v1531, %v1621
      %1623 = vmatmul.f32.gmra.mxu0 %v1561
      %v1624 = vpop.f32.mrf.mxu0
      %v1625 = vadd.f32 %v1531, %v1624
      %1626 = vmatmul.f32.gmra.mxu0 %v1563
      %v1627 = vpop.f32.mrf.mxu0
      %v1628 = vadd.f32 %v1531, %v1627
      %1629 = vdwg.mxu0
      %v1630 = vmax.f32 %v1583, 0.0
      %v1631 = vmax.f32 %v1586, 0.0
      %v1632 = vmax.f32 %v1589, 0.0
      %v1633 = vmax.f32 %v1592, 0.0
      %v1634 = vmax.f32 %v1595, 0.0
      %v1635 = vmax.f32 %v1598, 0.0
      %v1636 = vmax.f32 %v1601, 0.0
      %v1637 = vmax.f32 %v1604, 0.0
      %v1638 = vmax.f32 %v1607, 0.0
      %v1639 = vmax.f32 %v1610, 0.0
      %v1640 = vmax.f32 %v1613, 0.0
      %v1641 = vmax.f32 %v1616, 0.0
      %v1642 = vmax.f32 %v1619, 0.0
      %v1643 = vmax.f32 %v1622, 0.0
      %v1644 = vmax.f32 %v1625, 0.0
      %v1645 = vmax.f32 %v1628, 0.0
      %1654 = vrot.lane.b32.xlu0 %v1478, 112
      %v1655 = vpop.permute.xlu0 %1654
      %1656 = vrot.lane.b32.xlu0 %v1479, 112
      %v1657 = vpop.permute.xlu0 %1656
      %1658 = vrot.lane.b32.xlu0 %v1480, 112
      %v1659 = vpop.permute.xlu0 %1658
      %1660 = vrot.lane.b32.xlu0 %v1481, 112
      %v1661 = vpop.permute.xlu0 %1660
      %1662 = vrot.lane.b32.xlu0 %v1482, 112
      %v1663 = vpop.permute.xlu0 %1662
      %1664 = vrot.lane.b32.xlu0 %v1483, 112
      %v1665 = vpop.permute.xlu0 %1664
      %1666 = vrot.lane.b32.xlu0 %v1484, 112
      %v1667 = vpop.permute.xlu0 %1666
      %1668 = vrot.lane.b32.xlu0 %v1485, 112
      %v1669 = vpop.permute.xlu0 %1668
      %1670 = vrot.lane.b32.xlu0 %v1478, 96
      %v1671 = vpop.permute.xlu0 %1670
      %1672 = vrot.lane.b32.xlu0 %v1479, 96
      %v1673 = vpop.permute.xlu0 %1672
      %1674 = vrot.lane.b32.xlu0 %v1480, 96
      %v1675 = vpop.permute.xlu0 %1674
      %1676 = vrot.lane.b32.xlu0 %v1481, 96
      %v1677 = vpop.permute.xlu0 %1676
      %1678 = vrot.lane.b32.xlu0 %v1482, 96
      %v1679 = vpop.permute.xlu0 %1678
      %1680 = vrot.lane.b32.xlu0 %v1483, 96
      %v1681 = vpop.permute.xlu0 %1680
      %1682 = vrot.lane.b32.xlu0 %v1484, 96
      %v1683 = vpop.permute.xlu0 %1682
      %1684 = vrot.lane.b32.xlu0 %v1485, 96
      %v1685 = vpop.permute.xlu0 %1684
      %v1686 = vsel %vm336, %v1655, 0
      %v1688 = vsel %vm336, %v1657, 0
      %v1690 = vsel %vm336, %v1659, 0
      %v1692 = vsel %vm336, %v1661, 0
      %v1694 = vsel %vm336, %v1663, 0
      %v1696 = vsel %vm336, %v1665, 0
      %v1698 = vsel %vm336, %v1667, 0
      %v1700 = vsel %vm336, %v1669, 0
      %v1702 = vsel %vm336, %v1671, 0
      %v1704 = vsel %vm336, %v1673, 0
      %v1706 = vsel %vm336, %v1675, 0
      %v1708 = vsel %vm336, %v1677, 0
      %v1710 = vsel %vm336, %v1679, 0
      %v1712 = vsel %vm336, %v1681, 0
      %v1714 = vsel %vm336, %v1683, 0
      %v1716 = vsel %vm336, %v1685, 0
      %1718 = vmatpush.xpose.msra.mxu0 0.0
      %1719 = vmatpush.xpose.msra.mxu0 0.0
      %1720 = vmatpush.xpose.msra.mxu0 0.0
      %1721 = vmatpush.xpose.msra.mxu0 0.0
      %1722 = vmatpush.xpose.msra.mxu0 0.0
      %1723 = vmatpush.xpose.msra.mxu0 0.0
      %1724 = vmatpush.xpose.msra.mxu0 0.0
      %1725 = vmatpush.xpose.msra.mxu0 0.0
      %1726 = vmatpush.xpose.msra.mxu0 %v1716
      %1727 = vmatpush.xpose.msra.mxu0 %v1714
      %1728 = vmatpush.xpose.msra.mxu0 %v1712
      %1729 = vmatpush.xpose.msra.mxu0 %v1710
      %1730 = vmatpush.xpose.msra.mxu0 %v1708
      %1731 = vmatpush.xpose.msra.mxu0 %v1706
      %1732 = vmatpush.xpose.msra.mxu0 %v1704
      %1733 = vmatpush.xpose.msra.mxu0 %v1702
      %1734 = vmatmul.f32.gmra.mxu0 %v1686
      %v1735 = vpop.f32.mrf.mxu0
      %v1736 = vadd.f32 0.0, %v1735
      %1737 = vmatmul.f32.gmra.mxu0 %v1688
      %v1738 = vpop.f32.mrf.mxu0
      %v1739 = vadd.f32 0.0, %v1738
      %1740 = vmatmul.f32.gmra.mxu0 %v1690
      %v1741 = vpop.f32.mrf.mxu0
      %v1742 = vadd.f32 0.0, %v1741
      %1743 = vmatmul.f32.gmra.mxu0 %v1692
      %v1744 = vpop.f32.mrf.mxu0
      %v1745 = vadd.f32 0.0, %v1744
      %1746 = vmatmul.f32.gmra.mxu0 %v1694
      %v1747 = vpop.f32.mrf.mxu0
      %v1748 = vadd.f32 0.0, %v1747
      %1749 = vmatmul.f32.gmra.mxu0 %v1696
      %v1750 = vpop.f32.mrf.mxu0
      %v1751 = vadd.f32 0.0, %v1750
      %1752 = vmatmul.f32.gmra.mxu0 %v1698
      %v1753 = vpop.f32.mrf.mxu0
      %v1754 = vadd.f32 0.0, %v1753
      %1755 = vmatmul.f32.gmra.mxu0 %v1700
      %v1756 = vpop.f32.mrf.mxu0
      %v1757 = vadd.f32 0.0, %v1756
      %1758 = vdwg.mxu0
      %v1759 = vsel %vm806, %v1736, -inf
      %1760 = vmax.xlane.f32.xlu0 %v1759
      %v1761 = vpop.xlane.xlu0 %1760
      %v1762 = vsel %vm806, %v1739, -inf
      %1763 = vmax.xlane.f32.xlu0 %v1762
      %v1764 = vpop.xlane.xlu0 %1763
      %v1765 = vsel %vm806, %v1742, -inf
      %1766 = vmax.xlane.f32.xlu0 %v1765
      %v1767 = vpop.xlane.xlu0 %1766
      %v1768 = vsel %vm806, %v1745, -inf
      %1769 = vmax.xlane.f32.xlu0 %v1768
      %v1770 = vpop.xlane.xlu0 %1769
      %v1771 = vsel %vm806, %v1748, -inf
      %1772 = vmax.xlane.f32.xlu0 %v1771
      %v1773 = vpop.xlane.xlu0 %1772
      %v1774 = vsel %vm806, %v1751, -inf
      %1775 = vmax.xlane.f32.xlu0 %v1774
      %v1776 = vpop.xlane.xlu0 %1775
      %v1777 = vsel %vm806, %v1754, -inf
      %1778 = vmax.xlane.f32.xlu0 %v1777
      %v1779 = vpop.xlane.xlu0 %1778
      %v1780 = vsel %vm806, %v1757, -inf
      %1781 = vmax.xlane.f32.xlu0 %v1780
      %v1782 = vpop.xlane.xlu0 %1781
      %v1783 = vsub.f32 %v1736, %v1761
      %v1784 = vsub.f32 %v1739, %v1764
      %v1785 = vsub.f32 %v1742, %v1767
      %v1786 = vsub.f32 %v1745, %v1770
      %v1787 = vsub.f32 %v1748, %v1773
      %v1788 = vsub.f32 %v1751, %v1776
      %v1789 = vsub.f32 %v1754, %v1779
      %v1790 = vsub.f32 %v1757, %v1782
      %v1791 = vmul.f32 %v1783, 1.442695
      %v1792 = vpow.pop %v1791
      %v1793 = vmul.f32 %v1784, 1.442695
      %v1794 = vpow.pop %v1793
      %v1795 = vmul.f32 %v1785, 1.442695
      %v1796 = vpow.pop %v1795
      %v1797 = vmul.f32 %v1786, 1.442695
      %v1798 = vpow.pop %v1797
      %v1799 = vmul.f32 %v1787, 1.442695
      %v1800 = vpow.pop %v1799
      %v1801 = vmul.f32 %v1788, 1.442695
      %v1802 = vpow.pop %v1801
      %v1803 = vmul.f32 %v1789, 1.442695
      %v1804 = vpow.pop %v1803
      %v1805 = vmul.f32 %v1790, 1.442695
      %v1806 = vpow.pop %v1805
      %v1807 = vsel %vm806, %v1792, 0.0
      %1808 = vadd.xlane.f32.xlu0 %v1807
      %v1809 = vpop.xlane.xlu0 %1808
      %v1810 = vsel %vm806, %v1794, 0.0
      %1811 = vadd.xlane.f32.xlu0 %v1810
      %v1812 = vpop.xlane.xlu0 %1811
      %v1813 = vsel %vm806, %v1796, 0.0
      %1814 = vadd.xlane.f32.xlu0 %v1813
      %v1815 = vpop.xlane.xlu0 %1814
      %v1816 = vsel %vm806, %v1798, 0.0
      %1817 = vadd.xlane.f32.xlu0 %v1816
      %v1818 = vpop.xlane.xlu0 %1817
      %v1819 = vsel %vm806, %v1800, 0.0
      %1820 = vadd.xlane.f32.xlu0 %v1819
      %v1821 = vpop.xlane.xlu0 %1820
      %v1822 = vsel %vm806, %v1802, 0.0
      %1823 = vadd.xlane.f32.xlu0 %v1822
      %v1824 = vpop.xlane.xlu0 %1823
      %v1825 = vsel %vm806, %v1804, 0.0
      %1826 = vadd.xlane.f32.xlu0 %v1825
      %v1827 = vpop.xlane.xlu0 %1826
      %v1828 = vsel %vm806, %v1806, 0.0
      %1829 = vadd.xlane.f32.xlu0 %v1828
      %v1830 = vpop.xlane.xlu0 %1829
      %v1831 = vrcp.pop %v1809
      %v1832 = vmul.f32 %v1809, %v1831
      %v1833 = vsub.f32 1.0, %v1832
      %v1834 = vmul.f32 %v1831, %v1833
      %v1835 = vadd.f32 %v1831, %v1834
      %vm1836 = vweird.f32 %v1809
      %vm1837 = vweird.f32 %v1831
      %vm1838 = vmor %vm1836, %vm1837
      %v1839 = vsel %vm1838, %v1831, %v1835
      %v1840 = vand.u32 2147483647, %v1809
      %vm1841 = vcmp.eq.f32.partialorder %v1840, 8.507059e+37
      %v1842 = vand.u32 %v1809, 2147483648
      %v1843 = vor.u32 1.1754944e-38, %v1842
      %v1844 = vsel %vm1841, %v1843, %v1839
      %v1845 = vmul.f32 %v1792, %v1844
      %v1846 = vrcp.pop %v1812
      %v1847 = vmul.f32 %v1812, %v1846
      %v1848 = vsub.f32 1.0, %v1847
      %v1849 = vmul.f32 %v1846, %v1848
      %v1850 = vadd.f32 %v1846, %v1849
      %vm1851 = vweird.f32 %v1812
      %vm1852 = vweird.f32 %v1846
      %vm1853 = vmor %vm1851, %vm1852
      %v1854 = vsel %vm1853, %v1846, %v1850
      %v1855 = vand.u32 2147483647, %v1812
      %vm1856 = vcmp.eq.f32.partialorder %v1855, 8.507059e+37
      %v1857 = vand.u32 %v1812, 2147483648
      %v1858 = vor.u32 1.1754944e-38, %v1857
      %v1859 = vsel %vm1856, %v1858, %v1854
      %v1860 = vmul.f32 %v1794, %v1859
      %v1861 = vrcp.pop %v1815
      %v1862 = vmul.f32 %v1815, %v1861
      %v1863 = vsub.f32 1.0, %v1862
      %v1864 = vmul.f32 %v1861, %v1863
      %v1865 = vadd.f32 %v1861, %v1864
      %vm1866 = vweird.f32 %v1815
      %vm1867 = vweird.f32 %v1861
      %vm1868 = vmor %vm1866, %vm1867
      %v1869 = vsel %vm1868, %v1861, %v1865
      %v1870 = vand.u32 2147483647, %v1815
      %vm1871 = vcmp.eq.f32.partialorder %v1870, 8.507059e+37
      %v1872 = vand.u32 %v1815, 2147483648
      %v1873 = vor.u32 1.1754944e-38, %v1872
      %v1874 = vsel %vm1871, %v1873, %v1869
      %v1875 = vmul.f32 %v1796, %v1874
      %v1876 = vrcp.pop %v1818
      %v1877 = vmul.f32 %v1818, %v1876
      %v1878 = vsub.f32 1.0, %v1877
      %v1879 = vmul.f32 %v1876, %v1878
      %v1880 = vadd.f32 %v1876, %v1879
      %vm1881 = vweird.f32 %v1818
      %vm1882 = vweird.f32 %v1876
      %vm1883 = vmor %vm1881, %vm1882
      %v1884 = vsel %vm1883, %v1876, %v1880
      %v1885 = vand.u32 2147483647, %v1818
      %vm1886 = vcmp.eq.f32.partialorder %v1885, 8.507059e+37
      %v1887 = vand.u32 %v1818, 2147483648
      %v1888 = vor.u32 1.1754944e-38, %v1887
      %v1889 = vsel %vm1886, %v1888, %v1884
      %v1890 = vmul.f32 %v1798, %v1889
      %v1891 = vrcp.pop %v1821
      %v1892 = vmul.f32 %v1821, %v1891
      %v1893 = vsub.f32 1.0, %v1892
      %v1894 = vmul.f32 %v1891, %v1893
      %v1895 = vadd.f32 %v1891, %v1894
      %vm1896 = vweird.f32 %v1821
      %vm1897 = vweird.f32 %v1891
      %vm1898 = vmor %vm1896, %vm1897
      %v1899 = vsel %vm1898, %v1891, %v1895
      %v1900 = vand.u32 2147483647, %v1821
      %vm1901 = vcmp.eq.f32.partialorder %v1900, 8.507059e+37
      %v1902 = vand.u32 %v1821, 2147483648
      %v1903 = vor.u32 1.1754944e-38, %v1902
      %v1904 = vsel %vm1901, %v1903, %v1899
      %v1905 = vmul.f32 %v1800, %v1904
      %v1906 = vrcp.pop %v1824
      %v1907 = vmul.f32 %v1824, %v1906
      %v1908 = vsub.f32 1.0, %v1907
      %v1909 = vmul.f32 %v1906, %v1908
      %v1910 = vadd.f32 %v1906, %v1909
      %vm1911 = vweird.f32 %v1824
      %vm1912 = vweird.f32 %v1906
      %vm1913 = vmor %vm1911, %vm1912
      %v1914 = vsel %vm1913, %v1906, %v1910
      %v1915 = vand.u32 2147483647, %v1824
      %vm1916 = vcmp.eq.f32.partialorder %v1915, 8.507059e+37
      %v1917 = vand.u32 %v1824, 2147483648
      %v1918 = vor.u32 1.1754944e-38, %v1917
      %v1919 = vsel %vm1916, %v1918, %v1914
      %v1920 = vmul.f32 %v1802, %v1919
      %v1921 = vrcp.pop %v1827
      %v1922 = vmul.f32 %v1827, %v1921
      %v1923 = vsub.f32 1.0, %v1922
      %v1924 = vmul.f32 %v1921, %v1923
      %v1925 = vadd.f32 %v1921, %v1924
      %vm1926 = vweird.f32 %v1827
      %vm1927 = vweird.f32 %v1921
      %vm1928 = vmor %vm1926, %vm1927
      %v1929 = vsel %vm1928, %v1921, %v1925
      %v1930 = vand.u32 2147483647, %v1827
      %vm1931 = vcmp.eq.f32.partialorder %v1930, 8.507059e+37
      %v1932 = vand.u32 %v1827, 2147483648
      %v1933 = vor.u32 1.1754944e-38, %v1932
      %v1934 = vsel %vm1931, %v1933, %v1929
      %v1935 = vmul.f32 %v1804, %v1934
      %v1936 = vrcp.pop %v1830
      %v1937 = vmul.f32 %v1830, %v1936
      %v1938 = vsub.f32 1.0, %v1937
      %v1939 = vmul.f32 %v1936, %v1938
      %v1940 = vadd.f32 %v1936, %v1939
      %vm1941 = vweird.f32 %v1830
      %vm1942 = vweird.f32 %v1936
      %vm1943 = vmor %vm1941, %vm1942
      %v1944 = vsel %vm1943, %v1936, %v1940
      %v1945 = vand.u32 2147483647, %v1830
      %vm1946 = vcmp.eq.f32.partialorder %v1945, 8.507059e+37
      %v1947 = vand.u32 %v1830, 2147483648
      %v1948 = vor.u32 1.1754944e-38, %v1947
      %v1949 = vsel %vm1946, %v1948, %v1944
      %v1950 = vmul.f32 %v1806, %v1949
      %v1952 = vsel %vm806, %v1845, 0
      %v1955 = vsel %vm806, %v1860, 0
      %v1958 = vsel %vm806, %v1875, 0
      %v1961 = vsel %vm806, %v1890, 0
      %v1964 = vsel %vm806, %v1905, 0
      %v1967 = vsel %vm806, %v1920, 0
      %v1970 = vsel %vm806, %v1935, 0
      %v1973 = vsel %vm806, %v1950, 0
      %1975 = vmatpush.msra.mxu0 0.0
      %1976 = vmatpush.msra.mxu0 0.0
      %1977 = vmatpush.msra.mxu0 0.0
      %1978 = vmatpush.msra.mxu0 0.0
      %1979 = vmatpush.msra.mxu0 0.0
      %1980 = vmatpush.msra.mxu0 0.0
      %1981 = vmatpush.msra.mxu0 0.0
      %1982 = vmatpush.msra.mxu0 0.0
      %1983 = vmatpush.msra.mxu0 %v1485
      %1984 = vmatpush.msra.mxu0 %v1484
      %1985 = vmatpush.msra.mxu0 %v1483
      %1986 = vmatpush.msra.mxu0 %v1482
      %1987 = vmatpush.msra.mxu0 %v1481
      %1988 = vmatpush.msra.mxu0 %v1480
      %1989 = vmatpush.msra.mxu0 %v1479
      %1990 = vmatpush.msra.mxu0 %v1478
      %1991 = vmatmul.f32.gmra.mxu0 %v1952
      %v1992 = vpop.f32.mrf.mxu0
      %v1993 = vadd.f32 0.0, %v1992
      %1994 = vmatmul.f32.gmra.mxu0 %v1955
      %v1995 = vpop.f32.mrf.mxu0
      %v1996 = vadd.f32 0.0, %v1995
      %1997 = vmatmul.f32.gmra.mxu0 %v1958
      %v1998 = vpop.f32.mrf.mxu0
      %v1999 = vadd.f32 0.0, %v1998
      %2000 = vmatmul.f32.gmra.mxu0 %v1961
      %v2001 = vpop.f32.mrf.mxu0
      %v2002 = vadd.f32 0.0, %v2001
      %2003 = vmatmul.f32.gmra.mxu0 %v1964
      %v2004 = vpop.f32.mrf.mxu0
      %v2005 = vadd.f32 0.0, %v2004
      %2006 = vmatmul.f32.gmra.mxu0 %v1967
      %v2007 = vpop.f32.mrf.mxu0
      %v2008 = vadd.f32 0.0, %v2007
      %2009 = vmatmul.f32.gmra.mxu0 %v1970
      %v2010 = vpop.f32.mrf.mxu0
      %v2011 = vadd.f32 0.0, %v2010
      %2012 = vmatmul.f32.gmra.mxu0 %v1973
      %v2013 = vpop.f32.mrf.mxu0
      %v2014 = vadd.f32 0.0, %v2013
      %2015 = vdwg.mxu0
      %2024 = vrot.lane.b32.xlu0 %v1630, 112
      %v2025 = vpop.permute.xlu0 %2024
      %2026 = vrot.lane.b32.xlu0 %v1631, 112
      %v2027 = vpop.permute.xlu0 %2026
      %2028 = vrot.lane.b32.xlu0 %v1632, 112
      %v2029 = vpop.permute.xlu0 %2028
      %2030 = vrot.lane.b32.xlu0 %v1633, 112
      %v2031 = vpop.permute.xlu0 %2030
      %2032 = vrot.lane.b32.xlu0 %v1634, 112
      %v2033 = vpop.permute.xlu0 %2032
      %2034 = vrot.lane.b32.xlu0 %v1635, 112
      %v2035 = vpop.permute.xlu0 %2034
      %2036 = vrot.lane.b32.xlu0 %v1636, 112
      %v2037 = vpop.permute.xlu0 %2036
      %2038 = vrot.lane.b32.xlu0 %v1637, 112
      %v2039 = vpop.permute.xlu0 %2038
      %2048 = vxpose.xlu0.b32.start [1/16] %v2025, 128
      %2049 = vxpose.xlu0.b32.cont [2/16] %v2027, 128
      %2050 = vxpose.xlu0.b32.cont [3/16] %v2029, 128
      %2051 = vxpose.xlu0.b32.cont [4/16] %v2031, 128
      %2052 = vxpose.xlu0.b32.cont [5/16] %v2033, 128
      %2053 = vxpose.xlu0.b32.cont [6/16] %v2035, 128
      %2054 = vxpose.xlu0.b32.cont [7/16] %v2037, 128
      %2055 = vxpose.xlu0.b32.cont [8/16] %v2039, 128
      %2056 = vxpose.xlu0.b32.cont [9/16] 0.0, 128
      %2057 = vxpose.xlu0.b32.cont [10/16] 0.0, 128
      %2058 = vxpose.xlu0.b32.cont [11/16] 0.0, 128
      %2059 = vxpose.xlu0.b32.cont [12/16] 0.0, 128
      %2060 = vxpose.xlu0.b32.cont [13/16] 0.0, 128
      %2061 = vxpose.xlu0.b32.cont [14/16] 0.0, 128
      %2062 = vxpose.xlu0.b32.cont [15/16] 0.0, 128
      %2063 = vxpose.xlu0.b32.end [16/16] 0.0, 128
      %v2064 = vpop.trf.xlu0
      %v2065 = vpop.trf.xlu0
      %v2066 = vpop.trf.xlu0
      %v2067 = vpop.trf.xlu0
      %v2068 = vpop.trf.xlu0
      %v2069 = vpop.trf.xlu0
      %v2070 = vpop.trf.xlu0
      %v2071 = vpop.trf.xlu0
      %v2072 = vpop.trf.xlu0
      %v2073 = vpop.trf.xlu0
      %v2074 = vpop.trf.xlu0
      %v2075 = vpop.trf.xlu0
      %v2076 = vpop.trf.xlu0
      %v2077 = vpop.trf.xlu0
      %v2078 = vpop.trf.xlu0
      %v2079 = vpop.trf.xlu0
      %2080 = vrot.lane.b32.xlu0 %v1630, 96
      %v2081 = vpop.permute.xlu0 %2080
      %2082 = vrot.lane.b32.xlu0 %v1631, 96
      %v2083 = vpop.permute.xlu0 %2082
      %2084 = vrot.lane.b32.xlu0 %v1632, 96
      %v2085 = vpop.permute.xlu0 %2084
      %2086 = vrot.lane.b32.xlu0 %v1633, 96
      %v2087 = vpop.permute.xlu0 %2086
      %2088 = vrot.lane.b32.xlu0 %v1634, 96
      %v2089 = vpop.permute.xlu0 %2088
      %2090 = vrot.lane.b32.xlu0 %v1635, 96
      %v2091 = vpop.permute.xlu0 %2090
      %2092 = vrot.lane.b32.xlu0 %v1636, 96
      %v2093 = vpop.permute.xlu0 %2092
      %2094 = vrot.lane.b32.xlu0 %v1637, 96
      %v2095 = vpop.permute.xlu0 %2094
      %v2105 = vsel %vm806, %v2064, 0
      %v2108 = vsel %vm806, %v2065, 0
      %2110 = vmatpush.msra.mxu0 0.0
      %2111 = vmatpush.msra.mxu0 0.0
      %2112 = vmatpush.msra.mxu0 0.0
      %2113 = vmatpush.msra.mxu0 0.0
      %2114 = vmatpush.msra.mxu0 0.0
      %2115 = vmatpush.msra.mxu0 0.0
      %2116 = vmatpush.msra.mxu0 0.0
      %2117 = vmatpush.msra.mxu0 0.0
      %2118 = vmatpush.msra.mxu0 %v2095
      %2119 = vmatpush.msra.mxu0 %v2093
      %2120 = vmatpush.msra.mxu0 %v2091
      %2121 = vmatpush.msra.mxu0 %v2089
      %2122 = vmatpush.msra.mxu0 %v2087
      %2123 = vmatpush.msra.mxu0 %v2085
      %2124 = vmatpush.msra.mxu0 %v2083
      %2125 = vmatpush.msra.mxu0 %v2081
      %2126 = vmatmul.f32.gmra.mxu0 %v2105
      %v2127 = vpop.f32.mrf.mxu0
      %v2128 = vadd.f32 0.0, %v2127
      %2129 = vmatmul.f32.gmra.mxu0 %v2108
      %v2130 = vpop.f32.mrf.mxu0
      %v2131 = vadd.f32 0.0, %v2130
      %2132 = vdwg.mxu0
      %v2133 = vsel %vm336, %v2128, -inf
      %2134 = vmax.xlane.f32.xlu0 %v2133
      %v2135 = vpop.xlane.xlu0 %2134
      %v2136 = vsel %vm336, %v2131, -inf
      %2137 = vmax.xlane.f32.xlu0 %v2136
      %v2138 = vpop.xlane.xlu0 %2137
      %v2139 = vsub.f32 %v2128, %v2135
      %v2140 = vsub.f32 %v2131, %v2138
      %v2141 = vmul.f32 %v2139, 1.442695
      %v2142 = vpow.pop %v2141
      %v2143 = vmul.f32 %v2140, 1.442695
      %v2144 = vpow.pop %v2143
      %v2145 = vsel %vm336, %v2142, 0.0
      %2146 = vadd.xlane.f32.xlu0 %v2145
      %v2147 = vpop.xlane.xlu0 %2146
      %v2148 = vsel %vm336, %v2144, 0.0
      %2149 = vadd.xlane.f32.xlu0 %v2148
      %v2150 = vpop.xlane.xlu0 %2149
      %v2151 = vrcp.pop %v2147
      %v2152 = vmul.f32 %v2147, %v2151
      %v2153 = vsub.f32 1.0, %v2152
      %v2154 = vmul.f32 %v2151, %v2153
      %v2155 = vadd.f32 %v2151, %v2154
      %vm2156 = vweird.f32 %v2147
      %vm2157 = vweird.f32 %v2151
      %vm2158 = vmor %vm2156, %vm2157
      %v2159 = vsel %vm2158, %v2151, %v2155
      %v2160 = vand.u32 2147483647, %v2147
      %vm2161 = vcmp.eq.f32.partialorder %v2160, 8.507059e+37
      %v2162 = vand.u32 %v2147, 2147483648
      %v2163 = vor.u32 1.1754944e-38, %v2162
      %v2164 = vsel %vm2161, %v2163, %v2159
      %v2165 = vmul.f32 %v2142, %v2164
      %v2166 = vrcp.pop %v2150
      %v2167 = vmul.f32 %v2150, %v2166
      %v2168 = vsub.f32 1.0, %v2167
      %v2169 = vmul.f32 %v2166, %v2168
      %v2170 = vadd.f32 %v2166, %v2169
      %vm2171 = vweird.f32 %v2150
      %vm2172 = vweird.f32 %v2166
      %vm2173 = vmor %vm2171, %vm2172
      %v2174 = vsel %vm2173, %v2166, %v2170
      %v2175 = vand.u32 2147483647, %v2150
      %vm2176 = vcmp.eq.f32.partialorder %v2175, 8.507059e+37
      %v2177 = vand.u32 %v2150, 2147483648
      %v2178 = vor.u32 1.1754944e-38, %v2177
      %v2179 = vsel %vm2176, %v2178, %v2174
      %v2180 = vmul.f32 %v2144, %v2179
      %v2181 = vsel %vm336, %v1630, 0
      %v2183 = vsel %vm336, %v1631, 0
      %v2185 = vsel %vm336, %v1632, 0
      %v2187 = vsel %vm336, %v1633, 0
      %v2189 = vsel %vm336, %v1634, 0
      %v2191 = vsel %vm336, %v1635, 0
      %v2193 = vsel %vm336, %v1636, 0
      %v2195 = vsel %vm336, %v1637, 0
      %v2198 = vsel %vm336, %v2165, 0
      %v2201 = vsel %vm336, %v2180, 0
      %2203 = vmatpush.xpose.msra.mxu0 0.0
      %2204 = vmatpush.xpose.msra.mxu0 0.0
      %2205 = vmatpush.xpose.msra.mxu0 0.0
      %2206 = vmatpush.xpose.msra.mxu0 0.0
      %2207 = vmatpush.xpose.msra.mxu0 0.0
      %2208 = vmatpush.xpose.msra.mxu0 0.0
      %2209 = vmatpush.xpose.msra.mxu0 0.0
      %2210 = vmatpush.xpose.msra.mxu0 0.0
      %2211 = vmatpush.xpose.msra.mxu0 0.0
      %2212 = vmatpush.xpose.msra.mxu0 0.0
      %2213 = vmatpush.xpose.msra.mxu0 0.0
      %2214 = vmatpush.xpose.msra.mxu0 0.0
      %2215 = vmatpush.xpose.msra.mxu0 0.0
      %2216 = vmatpush.xpose.msra.mxu0 0.0
      %2217 = vmatpush.xpose.msra.mxu0 %v2201
      %2218 = vmatpush.xpose.msra.mxu0 %v2198
      %2219 = vmatmul.f32.gmra.mxu0 %v2181
      %v2220 = vpop.f32.mrf.mxu0
      %v2221 = vadd.f32 0.0, %v2220
      %2222 = vmatmul.f32.gmra.mxu0 %v2183
      %v2223 = vpop.f32.mrf.mxu0
      %v2224 = vadd.f32 0.0, %v2223
      %2225 = vmatmul.f32.gmra.mxu0 %v2185
      %v2226 = vpop.f32.mrf.mxu0
      %v2227 = vadd.f32 0.0, %v2226
      %2228 = vmatmul.f32.gmra.mxu0 %v2187
      %v2229 = vpop.f32.mrf.mxu0
      %v2230 = vadd.f32 0.0, %v2229
      %2231 = vmatmul.f32.gmra.mxu0 %v2189
      %v2232 = vpop.f32.mrf.mxu0
      %v2233 = vadd.f32 0.0, %v2232
      %2234 = vmatmul.f32.gmra.mxu0 %v2191
      %v2235 = vpop.f32.mrf.mxu0
      %v2236 = vadd.f32 0.0, %v2235
      %2237 = vmatmul.f32.gmra.mxu0 %v2193
      %v2238 = vpop.f32.mrf.mxu0
      %v2239 = vadd.f32 0.0, %v2238
      %2240 = vmatmul.f32.gmra.mxu0 %v2195
      %v2241 = vpop.f32.mrf.mxu0
      %v2242 = vadd.f32 0.0, %v2241
      %2243 = vdwg.mxu0
      %v2252 = vrot.slane %v2221, 4
      %v2253 = vrot.slane %v2224, 4
      %v2254 = vrot.slane %v2227, 4
      %v2255 = vrot.slane %v2230, 4
      %v2256 = vrot.slane %v2233, 4
      %v2257 = vrot.slane %v2236, 4
      %v2258 = vrot.slane %v2239, 4
      %v2259 = vrot.slane %v2242, 4
      %v2260 = vperm.slane %v2221, 0
      %v2261 = vperm.slane %v2252, 0
      %v2262 = vperm.slane %v2224, 0
      %v2263 = vperm.slane %v2253, 0
      %v2264 = vperm.slane %v2227, 0
      %v2265 = vperm.slane %v2254, 0
      %v2266 = vperm.slane %v2230, 0
      %v2267 = vperm.slane %v2255, 0
      %v2268 = vperm.slane %v2233, 0
      %v2269 = vperm.slane %v2256, 0
      %v2270 = vperm.slane %v2236, 0
      %v2271 = vperm.slane %v2257, 0
      %v2272 = vperm.slane %v2239, 0
      %v2273 = vperm.slane %v2258, 0
      %v2274 = vperm.slane %v2242, 0
      %v2275 = vperm.slane %v2259, 0
      %vm2276 = vcmask 1041409
      %v2277 = vsel %vm2276, %v2261, %v2260
      %vm2278 = vcmask 1042434
      %v2279 = vsel %vm2278, %v2262, %v2277
      %vm2280 = vcmask 1043459
      %v2281 = vsel %vm2280, %v2263, %v2279
      %vm2282 = vcmask 1044484
      %v2283 = vsel %vm2282, %v2264, %v2281
      %vm2284 = vcmask 1045509
      %v2285 = vsel %vm2284, %v2265, %v2283
      %vm2286 = vcmask 1046534
      %v2287 = vsel %vm2286, %v2266, %v2285
      %vm2288 = vcmask 1047559
      %v2289 = vsel %vm2288, %v2267, %v2287
      %v2290 = vsel %vm2276, %v2269, %v2268
      %v2291 = vsel %vm2278, %v2270, %v2290
      %v2292 = vsel %vm2280, %v2271, %v2291
      %v2293 = vsel %vm2282, %v2272, %v2292
      %v2294 = vsel %vm2284, %v2273, %v2293
      %v2295 = vsel %vm2286, %v2274, %v2294
      %v2296 = vsel %vm2288, %v2275, %v2295
      %v2299 = vperm.slane %v2221, 1
      %v2300 = vperm.slane %v2252, 1
      %v2301 = vperm.slane %v2224, 1
      %v2302 = vperm.slane %v2253, 1
      %v2303 = vperm.slane %v2227, 1
      %v2304 = vperm.slane %v2254, 1
      %v2305 = vperm.slane %v2230, 1
      %v2306 = vperm.slane %v2255, 1
      %v2307 = vperm.slane %v2233, 1
      %v2308 = vperm.slane %v2256, 1
      %v2309 = vperm.slane %v2236, 1
      %v2310 = vperm.slane %v2257, 1
      %v2311 = vperm.slane %v2239, 1
      %v2312 = vperm.slane %v2258, 1
      %v2313 = vperm.slane %v2242, 1
      %v2314 = vperm.slane %v2259, 1
      %v2315 = vsel %vm2276, %v2300, %v2299
      %v2316 = vsel %vm2278, %v2301, %v2315
      %v2317 = vsel %vm2280, %v2302, %v2316
      %v2318 = vsel %vm2282, %v2303, %v2317
      %v2319 = vsel %vm2284, %v2304, %v2318
      %v2320 = vsel %vm2286, %v2305, %v2319
      %v2321 = vsel %vm2288, %v2306, %v2320
      %v2322 = vsel %vm2276, %v2308, %v2307
      %v2323 = vsel %vm2278, %v2309, %v2322
      %v2324 = vsel %vm2280, %v2310, %v2323
      %v2325 = vsel %vm2282, %v2311, %v2324
      %v2326 = vsel %vm2284, %v2312, %v2325
      %v2327 = vsel %vm2286, %v2313, %v2326
      %v2328 = vsel %vm2288, %v2314, %v2327
      %2329 = vrot.lane.b32.xlu0 %v2321, 16
      %v2330 = vpop.permute.xlu0 %2329
      %2331 = vrot.lane.b32.xlu0 %v2328, 16
      %v2332 = vpop.permute.xlu0 %2331
      %v2335 = vperm.slane %v2221, 2
      %v2336 = vperm.slane %v2252, 2
      %v2337 = vperm.slane %v2224, 2
      %v2338 = vperm.slane %v2253, 2
      %v2339 = vperm.slane %v2227, 2
      %v2340 = vperm.slane %v2254, 2
      %v2341 = vperm.slane %v2230, 2
      %v2342 = vperm.slane %v2255, 2
      %v2343 = vperm.slane %v2233, 2
      %v2344 = vperm.slane %v2256, 2
      %v2345 = vperm.slane %v2236, 2
      %v2346 = vperm.slane %v2257, 2
      %v2347 = vperm.slane %v2239, 2
      %v2348 = vperm.slane %v2258, 2
      %v2349 = vperm.slane %v2242, 2
      %v2350 = vperm.slane %v2259, 2
      %v2351 = vsel %vm2276, %v2336, %v2335
      %v2352 = vsel %vm2278, %v2337, %v2351
      %v2353 = vsel %vm2280, %v2338, %v2352
      %v2354 = vsel %vm2282, %v2339, %v2353
      %v2355 = vsel %vm2284, %v2340, %v2354
      %v2356 = vsel %vm2286, %v2341, %v2355
      %v2357 = vsel %vm2288, %v2342, %v2356
      %v2358 = vsel %vm2276, %v2344, %v2343
      %v2359 = vsel %vm2278, %v2345, %v2358
      %v2360 = vsel %vm2280, %v2346, %v2359
      %v2361 = vsel %vm2282, %v2347, %v2360
      %v2362 = vsel %vm2284, %v2348, %v2361
      %v2363 = vsel %vm2286, %v2349, %v2362
      %v2364 = vsel %vm2288, %v2350, %v2363
      %2365 = vrot.lane.b32.xlu0 %v2357, 32
      %v2366 = vpop.permute.xlu0 %2365
      %2367 = vrot.lane.b32.xlu0 %v2364, 32
      %v2368 = vpop.permute.xlu0 %2367
      %v2371 = vperm.slane %v2221, 3
      %v2372 = vperm.slane %v2252, 3
      %v2373 = vperm.slane %v2224, 3
      %v2374 = vperm.slane %v2253, 3
      %v2375 = vperm.slane %v2227, 3
      %v2376 = vperm.slane %v2254, 3
      %v2377 = vperm.slane %v2230, 3
      %v2378 = vperm.slane %v2255, 3
      %v2379 = vperm.slane %v2233, 3
      %v2380 = vperm.slane %v2256, 3
      %v2381 = vperm.slane %v2236, 3
      %v2382 = vperm.slane %v2257, 3
      %v2383 = vperm.slane %v2239, 3
      %v2384 = vperm.slane %v2258, 3
      %v2385 = vperm.slane %v2242, 3
      %v2386 = vperm.slane %v2259, 3
      %v2387 = vsel %vm2276, %v2372, %v2371
      %v2388 = vsel %vm2278, %v2373, %v2387
      %v2389 = vsel %vm2280, %v2374, %v2388
      %v2390 = vsel %vm2282, %v2375, %v2389
      %v2391 = vsel %vm2284, %v2376, %v2390
      %v2392 = vsel %vm2286, %v2377, %v2391
      %v2393 = vsel %vm2288, %v2378, %v2392
      %v2394 = vsel %vm2276, %v2380, %v2379
      %v2395 = vsel %vm2278, %v2381, %v2394
      %v2396 = vsel %vm2280, %v2382, %v2395
      %v2397 = vsel %vm2282, %v2383, %v2396
      %v2398 = vsel %vm2284, %v2384, %v2397
      %v2399 = vsel %vm2286, %v2385, %v2398
      %v2400 = vsel %vm2288, %v2386, %v2399
      %2401 = vrot.lane.b32.xlu0 %v2393, 48
      %v2402 = vpop.permute.xlu0 %2401
      %2403 = vrot.lane.b32.xlu0 %v2400, 48
      %v2404 = vpop.permute.xlu0 %2403
      %v2407 = vsel %vm336, %v2289, %v2330
      %v2408 = vsel %vm336, %v2296, %v2332
      %v2409 = vsel %vm770, %v2407, %v2366
      %v2410 = vsel %vm770, %v2408, %v2368
      %v2411 = vsel %vm788, %v2409, %v2402
      %v2412 = vsel %vm788, %v2410, %v2404
      %2421 = vrot.lane.b32.xlu0 %v1486, 112
      %v2422 = vpop.permute.xlu0 %2421
      %2423 = vrot.lane.b32.xlu0 %v1487, 112
      %v2424 = vpop.permute.xlu0 %2423
      %2425 = vrot.lane.b32.xlu0 %v1488, 112
      %v2426 = vpop.permute.xlu0 %2425
      %2427 = vrot.lane.b32.xlu0 %v1489, 112
      %v2428 = vpop.permute.xlu0 %2427
      %2429 = vrot.lane.b32.xlu0 %v1490, 112
      %v2430 = vpop.permute.xlu0 %2429
      %2431 = vrot.lane.b32.xlu0 %v1491, 112
      %v2432 = vpop.permute.xlu0 %2431
      %2433 = vrot.lane.b32.xlu0 %v1492, 112
      %v2434 = vpop.permute.xlu0 %2433
      %2435 = vrot.lane.b32.xlu0 %v1493, 112
      %v2436 = vpop.permute.xlu0 %2435
      %2437 = vrot.lane.b32.xlu0 %v1486, 96
      %v2438 = vpop.permute.xlu0 %2437
      %2439 = vrot.lane.b32.xlu0 %v1487, 96
      %v2440 = vpop.permute.xlu0 %2439
      %2441 = vrot.lane.b32.xlu0 %v1488, 96
      %v2442 = vpop.permute.xlu0 %2441
      %2443 = vrot.lane.b32.xlu0 %v1489, 96
      %v2444 = vpop.permute.xlu0 %2443
      %2445 = vrot.lane.b32.xlu0 %v1490, 96
      %v2446 = vpop.permute.xlu0 %2445
      %2447 = vrot.lane.b32.xlu0 %v1491, 96
      %v2448 = vpop.permute.xlu0 %2447
      %2449 = vrot.lane.b32.xlu0 %v1492, 96
      %v2450 = vpop.permute.xlu0 %2449
      %2451 = vrot.lane.b32.xlu0 %v1493, 96
      %v2452 = vpop.permute.xlu0 %2451
      %v2453 = vsel %vm336, %v2422, 0
      %v2455 = vsel %vm336, %v2424, 0
      %v2457 = vsel %vm336, %v2426, 0
      %v2459 = vsel %vm336, %v2428, 0
      %v2461 = vsel %vm336, %v2430, 0
      %v2463 = vsel %vm336, %v2432, 0
      %v2465 = vsel %vm336, %v2434, 0
      %v2467 = vsel %vm336, %v2436, 0
      %v2469 = vsel %vm336, %v2438, 0
      %v2471 = vsel %vm336, %v2440, 0
      %v2473 = vsel %vm336, %v2442, 0
      %v2475 = vsel %vm336, %v2444, 0
      %v2477 = vsel %vm336, %v2446, 0
      %v2479 = vsel %vm336, %v2448, 0
      %v2481 = vsel %vm336, %v2450, 0
      %v2483 = vsel %vm336, %v2452, 0
      %2485 = vmatpush.xpose.msra.mxu0 0.0
      %2486 = vmatpush.xpose.msra.mxu0 0.0
      %2487 = vmatpush.xpose.msra.mxu0 0.0
      %2488 = vmatpush.xpose.msra.mxu0 0.0
      %2489 = vmatpush.xpose.msra.mxu0 0.0
      %2490 = vmatpush.xpose.msra.mxu0 0.0
      %2491 = vmatpush.xpose.msra.mxu0 0.0
      %2492 = vmatpush.xpose.msra.mxu0 0.0
      %2493 = vmatpush.xpose.msra.mxu0 %v2483
      %2494 = vmatpush.xpose.msra.mxu0 %v2481
      %2495 = vmatpush.xpose.msra.mxu0 %v2479
      %2496 = vmatpush.xpose.msra.mxu0 %v2477
      %2497 = vmatpush.xpose.msra.mxu0 %v2475
      %2498 = vmatpush.xpose.msra.mxu0 %v2473
      %2499 = vmatpush.xpose.msra.mxu0 %v2471
      %2500 = vmatpush.xpose.msra.mxu0 %v2469
      %2501 = vmatmul.f32.gmra.mxu0 %v2453
      %v2502 = vpop.f32.mrf.mxu0
      %v2503 = vadd.f32 0.0, %v2502
      %2504 = vmatmul.f32.gmra.mxu0 %v2455
      %v2505 = vpop.f32.mrf.mxu0
      %v2506 = vadd.f32 0.0, %v2505
      %2507 = vmatmul.f32.gmra.mxu0 %v2457
      %v2508 = vpop.f32.mrf.mxu0
      %v2509 = vadd.f32 0.0, %v2508
      %2510 = vmatmul.f32.gmra.mxu0 %v2459
      %v2511 = vpop.f32.mrf.mxu0
      %v2512 = vadd.f32 0.0, %v2511
      %2513 = vmatmul.f32.gmra.mxu0 %v2461
      %v2514 = vpop.f32.mrf.mxu0
      %v2515 = vadd.f32 0.0, %v2514
      %2516 = vmatmul.f32.gmra.mxu0 %v2463
      %v2517 = vpop.f32.mrf.mxu0
      %v2518 = vadd.f32 0.0, %v2517
      %2519 = vmatmul.f32.gmra.mxu0 %v2465
      %v2520 = vpop.f32.mrf.mxu0
      %v2521 = vadd.f32 0.0, %v2520
      %2522 = vmatmul.f32.gmra.mxu0 %v2467
      %v2523 = vpop.f32.mrf.mxu0
      %v2524 = vadd.f32 0.0, %v2523
      %2525 = vdwg.mxu0
      %v2526 = vsel %vm806, %v2503, -inf
      %2527 = vmax.xlane.f32.xlu0 %v2526
      %v2528 = vpop.xlane.xlu0 %2527
      %v2529 = vsel %vm806, %v2506, -inf
      %2530 = vmax.xlane.f32.xlu0 %v2529
      %v2531 = vpop.xlane.xlu0 %2530
      %v2532 = vsel %vm806, %v2509, -inf
      %2533 = vmax.xlane.f32.xlu0 %v2532
      %v2534 = vpop.xlane.xlu0 %2533
      %v2535 = vsel %vm806, %v2512, -inf
      %2536 = vmax.xlane.f32.xlu0 %v2535
      %v2537 = vpop.xlane.xlu0 %2536
      %v2538 = vsel %vm806, %v2515, -inf
      %2539 = vmax.xlane.f32.xlu0 %v2538
      %v2540 = vpop.xlane.xlu0 %2539
      %v2541 = vsel %vm806, %v2518, -inf
      %2542 = vmax.xlane.f32.xlu0 %v2541
      %v2543 = vpop.xlane.xlu0 %2542
      %v2544 = vsel %vm806, %v2521, -inf
      %2545 = vmax.xlane.f32.xlu0 %v2544
      %v2546 = vpop.xlane.xlu0 %2545
      %v2547 = vsel %vm806, %v2524, -inf
      %2548 = vmax.xlane.f32.xlu0 %v2547
      %v2549 = vpop.xlane.xlu0 %2548
      %v2550 = vsub.f32 %v2503, %v2528
      %v2551 = vsub.f32 %v2506, %v2531
      %v2552 = vsub.f32 %v2509, %v2534
      %v2553 = vsub.f32 %v2512, %v2537
      %v2554 = vsub.f32 %v2515, %v2540
      %v2555 = vsub.f32 %v2518, %v2543
      %v2556 = vsub.f32 %v2521, %v2546
      %v2557 = vsub.f32 %v2524, %v2549
      %v2558 = vmul.f32 %v2550, 1.442695
      %v2559 = vpow.pop %v2558
      %v2560 = vmul.f32 %v2551, 1.442695
      %v2561 = vpow.pop %v2560
      %v2562 = vmul.f32 %v2552, 1.442695
      %v2563 = vpow.pop %v2562
      %v2564 = vmul.f32 %v2553, 1.442695
      %v2565 = vpow.pop %v2564
      %v2566 = vmul.f32 %v2554, 1.442695
      %v2567 = vpow.pop %v2566
      %v2568 = vmul.f32 %v2555, 1.442695
      %v2569 = vpow.pop %v2568
      %v2570 = vmul.f32 %v2556, 1.442695
      %v2571 = vpow.pop %v2570
      %v2572 = vmul.f32 %v2557, 1.442695
      %v2573 = vpow.pop %v2572
      %v2574 = vsel %vm806, %v2559, 0.0
      %2575 = vadd.xlane.f32.xlu0 %v2574
      %v2576 = vpop.xlane.xlu0 %2575
      %v2577 = vsel %vm806, %v2561, 0.0
      %2578 = vadd.xlane.f32.xlu0 %v2577
      %v2579 = vpop.xlane.xlu0 %2578
      %v2580 = vsel %vm806, %v2563, 0.0
      %2581 = vadd.xlane.f32.xlu0 %v2580
      %v2582 = vpop.xlane.xlu0 %2581
      %v2583 = vsel %vm806, %v2565, 0.0
      %2584 = vadd.xlane.f32.xlu0 %v2583
      %v2585 = vpop.xlane.xlu0 %2584
      %v2586 = vsel %vm806, %v2567, 0.0
      %2587 = vadd.xlane.f32.xlu0 %v2586
      %v2588 = vpop.xlane.xlu0 %2587
      %v2589 = vsel %vm806, %v2569, 0.0
      %2590 = vadd.xlane.f32.xlu0 %v2589
      %v2591 = vpop.xlane.xlu0 %2590
      %v2592 = vsel %vm806, %v2571, 0.0
      %2593 = vadd.xlane.f32.xlu0 %v2592
      %v2594 = vpop.xlane.xlu0 %2593
      %v2595 = vsel %vm806, %v2573, 0.0
      %2596 = vadd.xlane.f32.xlu0 %v2595
      %v2597 = vpop.xlane.xlu0 %2596
      %v2598 = vrcp.pop %v2576
      %v2599 = vmul.f32 %v2576, %v2598
      %v2600 = vsub.f32 1.0, %v2599
      %v2601 = vmul.f32 %v2598, %v2600
      %v2602 = vadd.f32 %v2598, %v2601
      %vm2603 = vweird.f32 %v2576
      %vm2604 = vweird.f32 %v2598
      %vm2605 = vmor %vm2603, %vm2604
      %v2606 = vsel %vm2605, %v2598, %v2602
      %v2607 = vand.u32 2147483647, %v2576
      %vm2608 = vcmp.eq.f32.partialorder %v2607, 8.507059e+37
      %v2609 = vand.u32 %v2576, 2147483648
      %v2610 = vor.u32 1.1754944e-38, %v2609
      %v2611 = vsel %vm2608, %v2610, %v2606
      %v2612 = vmul.f32 %v2559, %v2611
      %v2613 = vrcp.pop %v2579
      %v2614 = vmul.f32 %v2579, %v2613
      %v2615 = vsub.f32 1.0, %v2614
      %v2616 = vmul.f32 %v2613, %v2615
      %v2617 = vadd.f32 %v2613, %v2616
      %vm2618 = vweird.f32 %v2579
      %vm2619 = vweird.f32 %v2613
      %vm2620 = vmor %vm2618, %vm2619
      %v2621 = vsel %vm2620, %v2613, %v2617
      %v2622 = vand.u32 2147483647, %v2579
      %vm2623 = vcmp.eq.f32.partialorder %v2622, 8.507059e+37
      %v2624 = vand.u32 %v2579, 2147483648
      %v2625 = vor.u32 1.1754944e-38, %v2624
      %v2626 = vsel %vm2623, %v2625, %v2621
      %v2627 = vmul.f32 %v2561, %v2626
      %v2628 = vrcp.pop %v2582
      %v2629 = vmul.f32 %v2582, %v2628
      %v2630 = vsub.f32 1.0, %v2629
      %v2631 = vmul.f32 %v2628, %v2630
      %v2632 = vadd.f32 %v2628, %v2631
      %vm2633 = vweird.f32 %v2582
      %vm2634 = vweird.f32 %v2628
      %vm2635 = vmor %vm2633, %vm2634
      %v2636 = vsel %vm2635, %v2628, %v2632
      %v2637 = vand.u32 2147483647, %v2582
      %vm2638 = vcmp.eq.f32.partialorder %v2637, 8.507059e+37
      %v2639 = vand.u32 %v2582, 2147483648
      %v2640 = vor.u32 1.1754944e-38, %v2639
      %v2641 = vsel %vm2638, %v2640, %v2636
      %v2642 = vmul.f32 %v2563, %v2641
      %v2643 = vrcp.pop %v2585
      %v2644 = vmul.f32 %v2585, %v2643
      %v2645 = vsub.f32 1.0, %v2644
      %v2646 = vmul.f32 %v2643, %v2645
      %v2647 = vadd.f32 %v2643, %v2646
      %vm2648 = vweird.f32 %v2585
      %vm2649 = vweird.f32 %v2643
      %vm2650 = vmor %vm2648, %vm2649
      %v2651 = vsel %vm2650, %v2643, %v2647
      %v2652 = vand.u32 2147483647, %v2585
      %vm2653 = vcmp.eq.f32.partialorder %v2652, 8.507059e+37
      %v2654 = vand.u32 %v2585, 2147483648
      %v2655 = vor.u32 1.1754944e-38, %v2654
      %v2656 = vsel %vm2653, %v2655, %v2651
      %v2657 = vmul.f32 %v2565, %v2656
      %v2658 = vrcp.pop %v2588
      %v2659 = vmul.f32 %v2588, %v2658
      %v2660 = vsub.f32 1.0, %v2659
      %v2661 = vmul.f32 %v2658, %v2660
      %v2662 = vadd.f32 %v2658, %v2661
      %vm2663 = vweird.f32 %v2588
      %vm2664 = vweird.f32 %v2658
      %vm2665 = vmor %vm2663, %vm2664
      %v2666 = vsel %vm2665, %v2658, %v2662
      %v2667 = vand.u32 2147483647, %v2588
      %vm2668 = vcmp.eq.f32.partialorder %v2667, 8.507059e+37
      %v2669 = vand.u32 %v2588, 2147483648
      %v2670 = vor.u32 1.1754944e-38, %v2669
      %v2671 = vsel %vm2668, %v2670, %v2666
      %v2672 = vmul.f32 %v2567, %v2671
      %v2673 = vrcp.pop %v2591
      %v2674 = vmul.f32 %v2591, %v2673
      %v2675 = vsub.f32 1.0, %v2674
      %v2676 = vmul.f32 %v2673, %v2675
      %v2677 = vadd.f32 %v2673, %v2676
      %vm2678 = vweird.f32 %v2591
      %vm2679 = vweird.f32 %v2673
      %vm2680 = vmor %vm2678, %vm2679
      %v2681 = vsel %vm2680, %v2673, %v2677
      %v2682 = vand.u32 2147483647, %v2591
      %vm2683 = vcmp.eq.f32.partialorder %v2682, 8.507059e+37
      %v2684 = vand.u32 %v2591, 2147483648
      %v2685 = vor.u32 1.1754944e-38, %v2684
      %v2686 = vsel %vm2683, %v2685, %v2681
      %v2687 = vmul.f32 %v2569, %v2686
      %v2688 = vrcp.pop %v2594
      %v2689 = vmul.f32 %v2594, %v2688
      %v2690 = vsub.f32 1.0, %v2689
      %v2691 = vmul.f32 %v2688, %v2690
      %v2692 = vadd.f32 %v2688, %v2691
      %vm2693 = vweird.f32 %v2594
      %vm2694 = vweird.f32 %v2688
      %vm2695 = vmor %vm2693, %vm2694
      %v2696 = vsel %vm2695, %v2688, %v2692
      %v2697 = vand.u32 2147483647, %v2594
      %vm2698 = vcmp.eq.f32.partialorder %v2697, 8.507059e+37
      %v2699 = vand.u32 %v2594, 2147483648
      %v2700 = vor.u32 1.1754944e-38, %v2699
      %v2701 = vsel %vm2698, %v2700, %v2696
      %v2702 = vmul.f32 %v2571, %v2701
      %v2703 = vrcp.pop %v2597
      %v2704 = vmul.f32 %v2597, %v2703
      %v2705 = vsub.f32 1.0, %v2704
      %v2706 = vmul.f32 %v2703, %v2705
      %v2707 = vadd.f32 %v2703, %v2706
      %vm2708 = vweird.f32 %v2597
      %vm2709 = vweird.f32 %v2703
      %vm2710 = vmor %vm2708, %vm2709
      %v2711 = vsel %vm2710, %v2703, %v2707
      %v2712 = vand.u32 2147483647, %v2597
      %vm2713 = vcmp.eq.f32.partialorder %v2712, 8.507059e+37
      %v2714 = vand.u32 %v2597, 2147483648
      %v2715 = vor.u32 1.1754944e-38, %v2714
      %v2716 = vsel %vm2713, %v2715, %v2711
      %v2717 = vmul.f32 %v2573, %v2716
      %v2719 = vsel %vm806, %v2612, 0
      %v2722 = vsel %vm806, %v2627, 0
      %v2725 = vsel %vm806, %v2642, 0
      %v2728 = vsel %vm806, %v2657, 0
      %v2731 = vsel %vm806, %v2672, 0
      %v2734 = vsel %vm806, %v2687, 0
      %v2737 = vsel %vm806, %v2702, 0
      %v2740 = vsel %vm806, %v2717, 0
      %2742 = vmatpush.msra.mxu0 0.0
      %2743 = vmatpush.msra.mxu0 0.0
      %2744 = vmatpush.msra.mxu0 0.0
      %2745 = vmatpush.msra.mxu0 0.0
      %2746 = vmatpush.msra.mxu0 0.0
      %2747 = vmatpush.msra.mxu0 0.0
      %2748 = vmatpush.msra.mxu0 0.0
      %2749 = vmatpush.msra.mxu0 0.0
      %2750 = vmatpush.msra.mxu0 %v1493
      %2751 = vmatpush.msra.mxu0 %v1492
      %2752 = vmatpush.msra.mxu0 %v1491
      %2753 = vmatpush.msra.mxu0 %v1490
      %2754 = vmatpush.msra.mxu0 %v1489
      %2755 = vmatpush.msra.mxu0 %v1488
      %2756 = vmatpush.msra.mxu0 %v1487
      %2757 = vmatpush.msra.mxu0 %v1486
      %2758 = vmatmul.f32.gmra.mxu0 %v2719
      %v2759 = vpop.f32.mrf.mxu0
      %v2760 = vadd.f32 0.0, %v2759
      %2761 = vmatmul.f32.gmra.mxu0 %v2722
      %v2762 = vpop.f32.mrf.mxu0
      %v2763 = vadd.f32 0.0, %v2762
      %2764 = vmatmul.f32.gmra.mxu0 %v2725
      %v2765 = vpop.f32.mrf.mxu0
      %v2766 = vadd.f32 0.0, %v2765
      %2767 = vmatmul.f32.gmra.mxu0 %v2728
      %v2768 = vpop.f32.mrf.mxu0
      %v2769 = vadd.f32 0.0, %v2768
      %2770 = vmatmul.f32.gmra.mxu0 %v2731
      %v2771 = vpop.f32.mrf.mxu0
      %v2772 = vadd.f32 0.0, %v2771
      %2773 = vmatmul.f32.gmra.mxu0 %v2734
      %v2774 = vpop.f32.mrf.mxu0
      %v2775 = vadd.f32 0.0, %v2774
      %2776 = vmatmul.f32.gmra.mxu0 %v2737
      %v2777 = vpop.f32.mrf.mxu0
      %v2778 = vadd.f32 0.0, %v2777
      %2779 = vmatmul.f32.gmra.mxu0 %v2740
      %v2780 = vpop.f32.mrf.mxu0
      %v2781 = vadd.f32 0.0, %v2780
      %2782 = vdwg.mxu0
      %2791 = vrot.lane.b32.xlu0 %v1638, 112
      %v2792 = vpop.permute.xlu0 %2791
      %2793 = vrot.lane.b32.xlu0 %v1639, 112
      %v2794 = vpop.permute.xlu0 %2793
      %2795 = vrot.lane.b32.xlu0 %v1640, 112
      %v2796 = vpop.permute.xlu0 %2795
      %2797 = vrot.lane.b32.xlu0 %v1641, 112
      %v2798 = vpop.permute.xlu0 %2797
      %2799 = vrot.lane.b32.xlu0 %v1642, 112
      %v2800 = vpop.permute.xlu0 %2799
      %2801 = vrot.lane.b32.xlu0 %v1643, 112
      %v2802 = vpop.permute.xlu0 %2801
      %2803 = vrot.lane.b32.xlu0 %v1644, 112
      %v2804 = vpop.permute.xlu0 %2803
      %2805 = vrot.lane.b32.xlu0 %v1645, 112
      %v2806 = vpop.permute.xlu0 %2805
      %2815 = vxpose.xlu0.b32.start [1/16] %v2792, 128
      %2816 = vxpose.xlu0.b32.cont [2/16] %v2794, 128
      %2817 = vxpose.xlu0.b32.cont [3/16] %v2796, 128
      %2818 = vxpose.xlu0.b32.cont [4/16] %v2798, 128
      %2819 = vxpose.xlu0.b32.cont [5/16] %v2800, 128
      %2820 = vxpose.xlu0.b32.cont [6/16] %v2802, 128
      %2821 = vxpose.xlu0.b32.cont [7/16] %v2804, 128
      %2822 = vxpose.xlu0.b32.cont [8/16] %v2806, 128
      %2823 = vxpose.xlu0.b32.cont [9/16] 0.0, 128
      %2824 = vxpose.xlu0.b32.cont [10/16] 0.0, 128
      %2825 = vxpose.xlu0.b32.cont [11/16] 0.0, 128
      %2826 = vxpose.xlu0.b32.cont [12/16] 0.0, 128
      %2827 = vxpose.xlu0.b32.cont [13/16] 0.0, 128
      %2828 = vxpose.xlu0.b32.cont [14/16] 0.0, 128
      %2829 = vxpose.xlu0.b32.cont [15/16] 0.0, 128
      %2830 = vxpose.xlu0.b32.end [16/16] 0.0, 128
      %v2831 = vpop.trf.xlu0
      %v2832 = vpop.trf.xlu0
      %v2833 = vpop.trf.xlu0
      %v2834 = vpop.trf.xlu0
      %v2835 = vpop.trf.xlu0
      %v2836 = vpop.trf.xlu0
      %v2837 = vpop.trf.xlu0
      %v2838 = vpop.trf.xlu0
      %v2839 = vpop.trf.xlu0
      %v2840 = vpop.trf.xlu0
      %v2841 = vpop.trf.xlu0
      %v2842 = vpop.trf.xlu0
      %v2843 = vpop.trf.xlu0
      %v2844 = vpop.trf.xlu0
      %v2845 = vpop.trf.xlu0
      %v2846 = vpop.trf.xlu0
      %2847 = vrot.lane.b32.xlu0 %v1638, 96
      %v2848 = vpop.permute.xlu0 %2847
      %2849 = vrot.lane.b32.xlu0 %v1639, 96
      %v2850 = vpop.permute.xlu0 %2849
      %2851 = vrot.lane.b32.xlu0 %v1640, 96
      %v2852 = vpop.permute.xlu0 %2851
      %2853 = vrot.lane.b32.xlu0 %v1641, 96
      %v2854 = vpop.permute.xlu0 %2853
      %2855 = vrot.lane.b32.xlu0 %v1642, 96
      %v2856 = vpop.permute.xlu0 %2855
      %2857 = vrot.lane.b32.xlu0 %v1643, 96
      %v2858 = vpop.permute.xlu0 %2857
      %2859 = vrot.lane.b32.xlu0 %v1644, 96
      %v2860 = vpop.permute.xlu0 %2859
      %2861 = vrot.lane.b32.xlu0 %v1645, 96
      %v2862 = vpop.permute.xlu0 %2861
      %v2872 = vsel %vm806, %v2831, 0
      %v2875 = vsel %vm806, %v2832, 0
      %2877 = vmatpush.msra.mxu0 0.0
      %2878 = vmatpush.msra.mxu0 0.0
      %2879 = vmatpush.msra.mxu0 0.0
      %2880 = vmatpush.msra.mxu0 0.0
      %2881 = vmatpush.msra.mxu0 0.0
      %2882 = vmatpush.msra.mxu0 0.0
      %2883 = vmatpush.msra.mxu0 0.0
      %2884 = vmatpush.msra.mxu0 0.0
      %2885 = vmatpush.msra.mxu0 %v2862
      %2886 = vmatpush.msra.mxu0 %v2860
      %2887 = vmatpush.msra.mxu0 %v2858
      %2888 = vmatpush.msra.mxu0 %v2856
      %2889 = vmatpush.msra.mxu0 %v2854
      %2890 = vmatpush.msra.mxu0 %v2852
      %2891 = vmatpush.msra.mxu0 %v2850
      %2892 = vmatpush.msra.mxu0 %v2848
      %2893 = vmatmul.f32.gmra.mxu0 %v2872
      %v2894 = vpop.f32.mrf.mxu0
      %v2895 = vadd.f32 0.0, %v2894
      %2896 = vmatmul.f32.gmra.mxu0 %v2875
      %v2897 = vpop.f32.mrf.mxu0
      %v2898 = vadd.f32 0.0, %v2897
      %2899 = vdwg.mxu0
      %v2900 = vsel %vm336, %v2895, -inf
      %2901 = vmax.xlane.f32.xlu0 %v2900
      %v2902 = vpop.xlane.xlu0 %2901
      %v2903 = vsel %vm336, %v2898, -inf
      %2904 = vmax.xlane.f32.xlu0 %v2903
      %v2905 = vpop.xlane.xlu0 %2904
      %v2906 = vsub.f32 %v2895, %v2902
      %v2907 = vsub.f32 %v2898, %v2905
      %v2908 = vmul.f32 %v2906, 1.442695
      %v2909 = vpow.pop %v2908
      %v2910 = vmul.f32 %v2907, 1.442695
      %v2911 = vpow.pop %v2910
      %v2912 = vsel %vm336, %v2909, 0.0
      %2913 = vadd.xlane.f32.xlu0 %v2912
      %v2914 = vpop.xlane.xlu0 %2913
      %v2915 = vsel %vm336, %v2911, 0.0
      %2916 = vadd.xlane.f32.xlu0 %v2915
      %v2917 = vpop.xlane.xlu0 %2916
      %v2918 = vrcp.pop %v2914
      %v2919 = vmul.f32 %v2914, %v2918
      %v2920 = vsub.f32 1.0, %v2919
      %v2921 = vmul.f32 %v2918, %v2920
      %v2922 = vadd.f32 %v2918, %v2921
      %vm2923 = vweird.f32 %v2914
      %vm2924 = vweird.f32 %v2918
      %vm2925 = vmor %vm2923, %vm2924
      %v2926 = vsel %vm2925, %v2918, %v2922
      %v2927 = vand.u32 2147483647, %v2914
      %vm2928 = vcmp.eq.f32.partialorder %v2927, 8.507059e+37
      %v2929 = vand.u32 %v2914, 2147483648
      %v2930 = vor.u32 1.1754944e-38, %v2929
      %v2931 = vsel %vm2928, %v2930, %v2926
      %v2932 = vmul.f32 %v2909, %v2931
      %v2933 = vrcp.pop %v2917
      %v2934 = vmul.f32 %v2917, %v2933
      %v2935 = vsub.f32 1.0, %v2934
      %v2936 = vmul.f32 %v2933, %v2935
      %v2937 = vadd.f32 %v2933, %v2936
      %vm2938 = vweird.f32 %v2917
      %vm2939 = vweird.f32 %v2933
      %vm2940 = vmor %vm2938, %vm2939
      %v2941 = vsel %vm2940, %v2933, %v2937
      %v2942 = vand.u32 2147483647, %v2917
      %vm2943 = vcmp.eq.f32.partialorder %v2942, 8.507059e+37
      %v2944 = vand.u32 %v2917, 2147483648
      %v2945 = vor.u32 1.1754944e-38, %v2944
      %v2946 = vsel %vm2943, %v2945, %v2941
      %v2947 = vmul.f32 %v2911, %v2946
      %v2948 = vsel %vm336, %v1638, 0
      %v2950 = vsel %vm336, %v1639, 0
      %v2952 = vsel %vm336, %v1640, 0
      %v2954 = vsel %vm336, %v1641, 0
      %v2956 = vsel %vm336, %v1642, 0
      %v2958 = vsel %vm336, %v1643, 0
      %v2960 = vsel %vm336, %v1644, 0
      %v2962 = vsel %vm336, %v1645, 0
      %v2965 = vsel %vm336, %v2932, 0
      %v2968 = vsel %vm336, %v2947, 0
      %2970 = vmatpush.xpose.msra.mxu0 0.0
      %2971 = vmatpush.xpose.msra.mxu0 0.0
      %2972 = vmatpush.xpose.msra.mxu0 0.0
      %2973 = vmatpush.xpose.msra.mxu0 0.0
      %2974 = vmatpush.xpose.msra.mxu0 0.0
      %2975 = vmatpush.xpose.msra.mxu0 0.0
      %2976 = vmatpush.xpose.msra.mxu0 0.0
      %2977 = vmatpush.xpose.msra.mxu0 0.0
      %2978 = vmatpush.xpose.msra.mxu0 0.0
      %2979 = vmatpush.xpose.msra.mxu0 0.0
      %2980 = vmatpush.xpose.msra.mxu0 0.0
      %2981 = vmatpush.xpose.msra.mxu0 0.0
      %2982 = vmatpush.xpose.msra.mxu0 0.0
      %2983 = vmatpush.xpose.msra.mxu0 0.0
      %2984 = vmatpush.xpose.msra.mxu0 %v2968
      %2985 = vmatpush.xpose.msra.mxu0 %v2965
      %2986 = vmatmul.f32.gmra.mxu0 %v2948
      %v2987 = vpop.f32.mrf.mxu0
      %v2988 = vadd.f32 0.0, %v2987
      %2989 = vmatmul.f32.gmra.mxu0 %v2950
      %v2990 = vpop.f32.mrf.mxu0
      %v2991 = vadd.f32 0.0, %v2990
      %2992 = vmatmul.f32.gmra.mxu0 %v2952
      %v2993 = vpop.f32.mrf.mxu0
      %v2994 = vadd.f32 0.0, %v2993
      %2995 = vmatmul.f32.gmra.mxu0 %v2954
      %v2996 = vpop.f32.mrf.mxu0
      %v2997 = vadd.f32 0.0, %v2996
      %2998 = vmatmul.f32.gmra.mxu0 %v2956
      %v2999 = vpop.f32.mrf.mxu0
      %v3000 = vadd.f32 0.0, %v2999
      %3001 = vmatmul.f32.gmra.mxu0 %v2958
      %v3002 = vpop.f32.mrf.mxu0
      %v3003 = vadd.f32 0.0, %v3002
      %3004 = vmatmul.f32.gmra.mxu0 %v2960
      %v3005 = vpop.f32.mrf.mxu0
      %v3006 = vadd.f32 0.0, %v3005
      %3007 = vmatmul.f32.gmra.mxu0 %v2962
      %v3008 = vpop.f32.mrf.mxu0
      %v3009 = vadd.f32 0.0, %v3008
      %3010 = vdwg.mxu0
      %v3019 = vrot.slane %v2988, 4
      %v3020 = vrot.slane %v2991, 4
      %v3021 = vrot.slane %v2994, 4
      %v3022 = vrot.slane %v2997, 4
      %v3023 = vrot.slane %v3000, 4
      %v3024 = vrot.slane %v3003, 4
      %v3025 = vrot.slane %v3006, 4
      %v3026 = vrot.slane %v3009, 4
      %v3027 = vperm.slane %v2988, 0
      %v3028 = vperm.slane %v3019, 0
      %v3029 = vperm.slane %v2991, 0
      %v3030 = vperm.slane %v3020, 0
      %v3031 = vperm.slane %v2994, 0
      %v3032 = vperm.slane %v3021, 0
      %v3033 = vperm.slane %v2997, 0
      %v3034 = vperm.slane %v3022, 0
      %v3035 = vperm.slane %v3000, 0
      %v3036 = vperm.slane %v3023, 0
      %v3037 = vperm.slane %v3003, 0
      %v3038 = vperm.slane %v3024, 0
      %v3039 = vperm.slane %v3006, 0
      %v3040 = vperm.slane %v3025, 0
      %v3041 = vperm.slane %v3009, 0
      %v3042 = vperm.slane %v3026, 0
      %v3043 = vsel %vm2276, %v3028, %v3027
      %v3044 = vsel %vm2278, %v3029, %v3043
      %v3045 = vsel %vm2280, %v3030, %v3044
      %v3046 = vsel %vm2282, %v3031, %v3045
      %v3047 = vsel %vm2284, %v3032, %v3046
      %v3048 = vsel %vm2286, %v3033, %v3047
      %v3049 = vsel %vm2288, %v3034, %v3048
      %v3050 = vsel %vm2276, %v3036, %v3035
      %v3051 = vsel %vm2278, %v3037, %v3050
      %v3052 = vsel %vm2280, %v3038, %v3051
      %v3053 = vsel %vm2282, %v3039, %v3052
      %v3054 = vsel %vm2284, %v3040, %v3053
      %v3055 = vsel %vm2286, %v3041, %v3054
      %v3056 = vsel %vm2288, %v3042, %v3055
      %v3059 = vperm.slane %v2988, 1
      %v3060 = vperm.slane %v3019, 1
      %v3061 = vperm.slane %v2991, 1
      %v3062 = vperm.slane %v3020, 1
      %v3063 = vperm.slane %v2994, 1
      %v3064 = vperm.slane %v3021, 1
      %v3065 = vperm.slane %v2997, 1
      %v3066 = vperm.slane %v3022, 1
      %v3067 = vperm.slane %v3000, 1
      %v3068 = vperm.slane %v3023, 1
      %v3069 = vperm.slane %v3003, 1
      %v3070 = vperm.slane %v3024, 1
      %v3071 = vperm.slane %v3006, 1
      %v3072 = vperm.slane %v3025, 1
      %v3073 = vperm.slane %v3009, 1
      %v3074 = vperm.slane %v3026, 1
      %v3075 = vsel %vm2276, %v3060, %v3059
      %v3076 = vsel %vm2278, %v3061, %v3075
      %v3077 = vsel %vm2280, %v3062, %v3076
      %v3078 = vsel %vm2282, %v3063, %v3077
      %v3079 = vsel %vm2284, %v3064, %v3078
      %v3080 = vsel %vm2286, %v3065, %v3079
      %v3081 = vsel %vm2288, %v3066, %v3080
      %v3082 = vsel %vm2276, %v3068, %v3067
      %v3083 = vsel %vm2278, %v3069, %v3082
      %v3084 = vsel %vm2280, %v3070, %v3083
      %v3085 = vsel %vm2282, %v3071, %v3084
      %v3086 = vsel %vm2284, %v3072, %v3085
      %v3087 = vsel %vm2286, %v3073, %v3086
      %v3088 = vsel %vm2288, %v3074, %v3087
      %3089 = vrot.lane.b32.xlu0 %v3081, 16
      %v3090 = vpop.permute.xlu0 %3089
      %3091 = vrot.lane.b32.xlu0 %v3088, 16
      %v3092 = vpop.permute.xlu0 %3091
      %v3095 = vperm.slane %v2988, 2
      %v3096 = vperm.slane %v3019, 2
      %v3097 = vperm.slane %v2991, 2
      %v3098 = vperm.slane %v3020, 2
      %v3099 = vperm.slane %v2994, 2
      %v3100 = vperm.slane %v3021, 2
      %v3101 = vperm.slane %v2997, 2
      %v3102 = vperm.slane %v3022, 2
      %v3103 = vperm.slane %v3000, 2
      %v3104 = vperm.slane %v3023, 2
      %v3105 = vperm.slane %v3003, 2
      %v3106 = vperm.slane %v3024, 2
      %v3107 = vperm.slane %v3006, 2
      %v3108 = vperm.slane %v3025, 2
      %v3109 = vperm.slane %v3009, 2
      %v3110 = vperm.slane %v3026, 2
      %v3111 = vsel %vm2276, %v3096, %v3095
      %v3112 = vsel %vm2278, %v3097, %v3111
      %v3113 = vsel %vm2280, %v3098, %v3112
      %v3114 = vsel %vm2282, %v3099, %v3113
      %v3115 = vsel %vm2284, %v3100, %v3114
      %v3116 = vsel %vm2286, %v3101, %v3115
      %v3117 = vsel %vm2288, %v3102, %v3116
      %v3118 = vsel %vm2276, %v3104, %v3103
      %v3119 = vsel %vm2278, %v3105, %v3118
      %v3120 = vsel %vm2280, %v3106, %v3119
      %v3121 = vsel %vm2282, %v3107, %v3120
      %v3122 = vsel %vm2284, %v3108, %v3121
      %v3123 = vsel %vm2286, %v3109, %v3122
      %v3124 = vsel %vm2288, %v3110, %v3123
      %3125 = vrot.lane.b32.xlu0 %v3117, 32
      %v3126 = vpop.permute.xlu0 %3125
      %3127 = vrot.lane.b32.xlu0 %v3124, 32
      %v3128 = vpop.permute.xlu0 %3127
      %v3131 = vperm.slane %v2988, 3
      %v3132 = vperm.slane %v3019, 3
      %v3133 = vperm.slane %v2991, 3
      %v3134 = vperm.slane %v3020, 3
      %v3135 = vperm.slane %v2994, 3
      %v3136 = vperm.slane %v3021, 3
      %v3137 = vperm.slane %v2997, 3
      %v3138 = vperm.slane %v3022, 3
      %v3139 = vperm.slane %v3000, 3
      %v3140 = vperm.slane %v3023, 3
      %v3141 = vperm.slane %v3003, 3
      %v3142 = vperm.slane %v3024, 3
      %v3143 = vperm.slane %v3006, 3
      %v3144 = vperm.slane %v3025, 3
      %v3145 = vperm.slane %v3009, 3
      %v3146 = vperm.slane %v3026, 3
      %v3147 = vsel %vm2276, %v3132, %v3131
      %v3148 = vsel %vm2278, %v3133, %v3147
      %v3149 = vsel %vm2280, %v3134, %v3148
      %v3150 = vsel %vm2282, %v3135, %v3149
      %v3151 = vsel %vm2284, %v3136, %v3150
      %v3152 = vsel %vm2286, %v3137, %v3151
      %v3153 = vsel %vm2288, %v3138, %v3152
      %v3154 = vsel %vm2276, %v3140, %v3139
      %v3155 = vsel %vm2278, %v3141, %v3154
      %v3156 = vsel %vm2280, %v3142, %v3155
      %v3157 = vsel %vm2282, %v3143, %v3156
      %v3158 = vsel %vm2284, %v3144, %v3157
      %v3159 = vsel %vm2286, %v3145, %v3158
      %v3160 = vsel %vm2288, %v3146, %v3159
      %3161 = vrot.lane.b32.xlu0 %v3153, 48
      %v3162 = vpop.permute.xlu0 %3161
      %3163 = vrot.lane.b32.xlu0 %v3160, 48
      %v3164 = vpop.permute.xlu0 %3163
      %v3167 = vsel %vm336, %v3049, %v3090
      %v3168 = vsel %vm336, %v3056, %v3092
      %v3169 = vsel %vm770, %v3167, %v3126
      %v3170 = vsel %vm770, %v3168, %v3128
      %v3171 = vsel %vm788, %v3169, %v3162
      %v3172 = vsel %vm788, %v3170, %v3164
      %v3173 = vld [vmem:[%s7] sm:$0xff]
      %v3174 = vld [vmem:[%s7 + $0x8] sm:$0xff]
      %v3175 = vld [vmem:[%s8] sm:$0x1]
      %v3177 = vperm.slane %v3175, 0
      %v3180 = vsel %vm336, %v1993, 0
      %v3183 = vsel %vm336, %v1996, 0
      %v3186 = vsel %vm336, %v1999, 0
      %v3189 = vsel %vm336, %v2002, 0
      %v3192 = vsel %vm336, %v2005, 0
      %v3195 = vsel %vm336, %v2008, 0
      %v3198 = vsel %vm336, %v2011, 0
      %v3201 = vsel %vm336, %v2014, 0
      %v3204 = vsel %vm336, %v2760, 0
      %v3207 = vsel %vm336, %v2763, 0
      %v3210 = vsel %vm336, %v2766, 0
      %v3213 = vsel %vm336, %v2769, 0
      %v3216 = vsel %vm336, %v2772, 0
      %v3219 = vsel %vm336, %v2775, 0
      %v3222 = vsel %vm336, %v2778, 0
      %v3225 = vsel %vm336, %v2781, 0
      %3227 = vmatpush.msra.mxu0 0.0
      %3228 = vmatpush.msra.mxu0 0.0
      %3229 = vmatpush.msra.mxu0 0.0
      %3230 = vmatpush.msra.mxu0 0.0
      %3231 = vmatpush.msra.mxu0 0.0
      %3232 = vmatpush.msra.mxu0 0.0
      %3233 = vmatpush.msra.mxu0 0.0
      %3234 = vmatpush.msra.mxu0 0.0
      %3235 = vmatpush.msra.mxu0 0.0
      %3236 = vmatpush.msra.mxu0 0.0
      %3237 = vmatpush.msra.mxu0 0.0
      %3238 = vmatpush.msra.mxu0 0.0
      %3239 = vmatpush.msra.mxu0 0.0
      %3240 = vmatpush.msra.mxu0 0.0
      %3241 = vmatpush.msra.mxu0 %v3174
      %3242 = vmatpush.msra.mxu0 %v3173
      %3243 = vmatmul.f32.gmra.mxu0 %v3180
      %v3244 = vpop.f32.mrf.mxu0
      %v3245 = vadd.f32 %v3177, %v3244
      %3246 = vmatmul.f32.gmra.mxu0 %v3183
      %v3247 = vpop.f32.mrf.mxu0
      %v3248 = vadd.f32 %v3177, %v3247
      %3249 = vmatmul.f32.gmra.mxu0 %v3186
      %v3250 = vpop.f32.mrf.mxu0
      %v3251 = vadd.f32 %v3177, %v3250
      %3252 = vmatmul.f32.gmra.mxu0 %v3189
      %v3253 = vpop.f32.mrf.mxu0
      %v3254 = vadd.f32 %v3177, %v3253
      %3255 = vmatmul.f32.gmra.mxu0 %v3192
      %v3256 = vpop.f32.mrf.mxu0
      %v3257 = vadd.f32 %v3177, %v3256
      %3258 = vmatmul.f32.gmra.mxu0 %v3195
      %v3259 = vpop.f32.mrf.mxu0
      %v3260 = vadd.f32 %v3177, %v3259
      %3261 = vmatmul.f32.gmra.mxu0 %v3198
      %v3262 = vpop.f32.mrf.mxu0
      %v3263 = vadd.f32 %v3177, %v3262
      %3264 = vmatmul.f32.gmra.mxu0 %v3201
      %v3265 = vpop.f32.mrf.mxu0
      %v3266 = vadd.f32 %v3177, %v3265
      %3267 = vmatmul.f32.gmra.mxu0 %v3204
      %v3268 = vpop.f32.mrf.mxu0
      %v3269 = vadd.f32 %v3177, %v3268
      %3270 = vmatmul.f32.gmra.mxu0 %v3207
      %v3271 = vpop.f32.mrf.mxu0
      %v3272 = vadd.f32 %v3177, %v3271
      %3273 = vmatmul.f32.gmra.mxu0 %v3210
      %v3274 = vpop.f32.mrf.mxu0
      %v3275 = vadd.f32 %v3177, %v3274
      %3276 = vmatmul.f32.gmra.mxu0 %v3213
      %v3277 = vpop.f32.mrf.mxu0
      %v3278 = vadd.f32 %v3177, %v3277
      %3279 = vmatmul.f32.gmra.mxu0 %v3216
      %v3280 = vpop.f32.mrf.mxu0
      %v3281 = vadd.f32 %v3177, %v3280
      %3282 = vmatmul.f32.gmra.mxu0 %v3219
      %v3283 = vpop.f32.mrf.mxu0
      %v3284 = vadd.f32 %v3177, %v3283
      %3285 = vmatmul.f32.gmra.mxu0 %v3222
      %v3286 = vpop.f32.mrf.mxu0
      %v3287 = vadd.f32 %v3177, %v3286
      %3288 = vmatmul.f32.gmra.mxu0 %v3225
      %v3289 = vpop.f32.mrf.mxu0
      %v3290 = vadd.f32 %v3177, %v3289
      %3291 = vdwg.mxu0
      %v3292 = vadd.f32 %v3245, %v1344
      %v3293 = vadd.f32 %v3248, %v1345
      %v3294 = vadd.f32 %v3251, %v1346
      %v3295 = vadd.f32 %v3254, %v1347
      %v3296 = vadd.f32 %v3257, %v1348
      %v3297 = vadd.f32 %v3260, %v1349
      %v3298 = vadd.f32 %v3263, %v1350
      %v3299 = vadd.f32 %v3266, %v1351
      %v3300 = vadd.f32 %v3269, %v1352
      %v3301 = vadd.f32 %v3272, %v1353
      %v3302 = vadd.f32 %v3275, %v1354
      %v3303 = vadd.f32 %v3278, %v1355
      %v3304 = vadd.f32 %v3281, %v1356
      %v3305 = vadd.f32 %v3284, %v1357
      %v3306 = vadd.f32 %v3287, %v1358
      %v3307 = vadd.f32 %v3290, %v1359
      %3310 = vrot.lane.b32.xlu0 %v3171, 64
      %v3311 = vpop.permute.xlu0 %3310
      %3312 = vrot.lane.b32.xlu0 %v3172, 64
      %v3313 = vpop.permute.xlu0 %3312
      %v3316 = vsel %vm806, %v2411, %v3311
      %v3317 = vsel %vm806, %v2412, %v3313
      %3318 = vxpose.xlu0.b32.start [1/16] %v3316, 128
      %3319 = vxpose.xlu0.b32.cont [2/16] %v3317, 128
      %3320 = vxpose.xlu0.b32.cont [3/16] 0.0, 128
      %3321 = vxpose.xlu0.b32.cont [4/16] 0.0, 128
      %3322 = vxpose.xlu0.b32.cont [5/16] 0.0, 128
      %3323 = vxpose.xlu0.b32.cont [6/16] 0.0, 128
      %3324 = vxpose.xlu0.b32.cont [7/16] 0.0, 128
      %3325 = vxpose.xlu0.b32.cont [8/16] 0.0, 128
      %3326 = vxpose.xlu0.b32.cont [9/16] 0.0, 128
      %3327 = vxpose.xlu0.b32.cont [10/16] 0.0, 128
      %3328 = vxpose.xlu0.b32.cont [11/16] 0.0, 128
      %3329 = vxpose.xlu0.b32.cont [12/16] 0.0, 128
      %3330 = vxpose.xlu0.b32.cont [13/16] 0.0, 128
      %3331 = vxpose.xlu0.b32.cont [14/16] 0.0, 128
      %3332 = vxpose.xlu0.b32.cont [15/16] 0.0, 128
      %3333 = vxpose.xlu0.b32.end [16/16] 0.0, 128
      %v3334 = vpop.trf.xlu0
      %v3335 = vpop.trf.xlu0
      %v3336 = vpop.trf.xlu0
      %v3337 = vpop.trf.xlu0
      %v3338 = vpop.trf.xlu0
      %v3339 = vpop.trf.xlu0
      %v3340 = vpop.trf.xlu0
      %v3341 = vpop.trf.xlu0
      %v3342 = vpop.trf.xlu0
      %v3343 = vpop.trf.xlu0
      %v3344 = vpop.trf.xlu0
      %v3345 = vpop.trf.xlu0
      %v3346 = vpop.trf.xlu0
      %v3347 = vpop.trf.xlu0
      %v3348 = vpop.trf.xlu0
      %v3349 = vpop.trf.xlu0
      %3352 = vrot.lane.b32.xlu0 %v3173, 120
      %v3353 = vpop.permute.xlu0 %3352
      %3354 = vrot.lane.b32.xlu0 %v3174, 120
      %v3355 = vpop.permute.xlu0 %3354
      %3358 = vrot.lane.b32.xlu0 %v3177, 120
      %v3359 = vpop.permute.xlu0 %3358
      %v3362 = vsel %vm336, %v3334, 0
      %v3365 = vsel %vm336, %v3335, 0
      %v3368 = vsel %vm336, %v3336, 0
      %v3371 = vsel %vm336, %v3337, 0
      %v3374 = vsel %vm336, %v3338, 0
      %v3377 = vsel %vm336, %v3339, 0
      %v3380 = vsel %vm336, %v3340, 0
      %v3383 = vsel %vm336, %v3341, 0
      %v3386 = vsel %vm336, %v3342, 0
      %v3389 = vsel %vm336, %v3343, 0
      %v3392 = vsel %vm336, %v3344, 0
      %v3395 = vsel %vm336, %v3345, 0
      %v3398 = vsel %vm336, %v3346, 0
      %v3401 = vsel %vm336, %v3347, 0
      %v3404 = vsel %vm336, %v3348, 0
      %v3407 = vsel %vm336, %v3349, 0
      %3409 = vmatpush.msra.mxu0 0.0
      %3410 = vmatpush.msra.mxu0 0.0
      %3411 = vmatpush.msra.mxu0 0.0
      %3412 = vmatpush.msra.mxu0 0.0
      %3413 = vmatpush.msra.mxu0 0.0
      %3414 = vmatpush.msra.mxu0 0.0
      %3415 = vmatpush.msra.mxu0 0.0
      %3416 = vmatpush.msra.mxu0 0.0
      %3417 = vmatpush.msra.mxu0 0.0
      %3418 = vmatpush.msra.mxu0 0.0
      %3419 = vmatpush.msra.mxu0 0.0
      %3420 = vmatpush.msra.mxu0 0.0
      %3421 = vmatpush.msra.mxu0 0.0
      %3422 = vmatpush.msra.mxu0 0.0
      %3423 = vmatpush.msra.mxu0 %v3355
      %3424 = vmatpush.msra.mxu0 %v3353
      %3425 = vmatmul.f32.gmra.mxu0 %v3362
      %v3426 = vpop.f32.mrf.mxu0
      %v3427 = vadd.f32 %v3359, %v3426
      %3428 = vmatmul.f32.gmra.mxu0 %v3365
      %v3429 = vpop.f32.mrf.mxu0
      %v3430 = vadd.f32 %v3359, %v3429
      %3431 = vmatmul.f32.gmra.mxu0 %v3368
      %v3432 = vpop.f32.mrf.mxu0
      %v3433 = vadd.f32 %v3359, %v3432
      %3434 = vmatmul.f32.gmra.mxu0 %v3371
      %v3435 = vpop.f32.mrf.mxu0
      %v3436 = vadd.f32 %v3359, %v3435
      %3437 = vmatmul.f32.gmra.mxu0 %v3374
      %v3438 = vpop.f32.mrf.mxu0
      %v3439 = vadd.f32 %v3359, %v3438
      %3440 = vmatmul.f32.gmra.mxu0 %v3377
      %v3441 = vpop.f32.mrf.mxu0
      %v3442 = vadd.f32 %v3359, %v3441
      %3443 = vmatmul.f32.gmra.mxu0 %v3380
      %v3444 = vpop.f32.mrf.mxu0
      %v3445 = vadd.f32 %v3359, %v3444
      %3446 = vmatmul.f32.gmra.mxu0 %v3383
      %v3447 = vpop.f32.mrf.mxu0
      %v3448 = vadd.f32 %v3359, %v3447
      %3449 = vmatmul.f32.gmra.mxu0 %v3386
      %v3450 = vpop.f32.mrf.mxu0
      %v3451 = vadd.f32 %v3359, %v3450
      %3452 = vmatmul.f32.gmra.mxu0 %v3389
      %v3453 = vpop.f32.mrf.mxu0
      %v3454 = vadd.f32 %v3359, %v3453
      %3455 = vmatmul.f32.gmra.mxu0 %v3392
      %v3456 = vpop.f32.mrf.mxu0
      %v3457 = vadd.f32 %v3359, %v3456
      %3458 = vmatmul.f32.gmra.mxu0 %v3395
      %v3459 = vpop.f32.mrf.mxu0
      %v3460 = vadd.f32 %v3359, %v3459
      %3461 = vmatmul.f32.gmra.mxu0 %v3398
      %v3462 = vpop.f32.mrf.mxu0
      %v3463 = vadd.f32 %v3359, %v3462
      %3464 = vmatmul.f32.gmra.mxu0 %v3401
      %v3465 = vpop.f32.mrf.mxu0
      %v3466 = vadd.f32 %v3359, %v3465
      %3467 = vmatmul.f32.gmra.mxu0 %v3404
      %v3468 = vpop.f32.mrf.mxu0
      %v3469 = vadd.f32 %v3359, %v3468
      %3470 = vmatmul.f32.gmra.mxu0 %v3407
      %v3471 = vpop.f32.mrf.mxu0
      %v3472 = vadd.f32 %v3359, %v3471
      %3473 = vdwg.mxu0
      %v3490 = vadd.f32 %v3427, %v1495
      %v3491 = vadd.f32 %v3430, %v1497
      %v3492 = vadd.f32 %v3433, %v1499
      %v3493 = vadd.f32 %v3436, %v1501
      %v3494 = vadd.f32 %v3439, %v1503
      %v3495 = vadd.f32 %v3442, %v1505
      %v3496 = vadd.f32 %v3445, %v1507
      %v3497 = vadd.f32 %v3448, %v1509
      %v3498 = vadd.f32 %v3451, %v1511
      %v3499 = vadd.f32 %v3454, %v1513
      %v3500 = vadd.f32 %v3457, %v1515
      %v3501 = vadd.f32 %v3460, %v1517
      %v3502 = vadd.f32 %v3463, %v1519
      %v3503 = vadd.f32 %v3466, %v1521
      %v3504 = vadd.f32 %v3469, %v1523
      %v3505 = vadd.f32 %v3472, %v1525
      %3522 = vrot.lane.b32.xlu0 %v3490, 8
      %v3523 = vpop.permute.xlu0 %3522
      %3524 = vrot.lane.b32.xlu0 %v3491, 8
      %v3525 = vpop.permute.xlu0 %3524
      %3526 = vrot.lane.b32.xlu0 %v3492, 8
      %v3527 = vpop.permute.xlu0 %3526
      %3528 = vrot.lane.b32.xlu0 %v3493, 8
      %v3529 = vpop.permute.xlu0 %3528
      %3530 = vrot.lane.b32.xlu0 %v3494, 8
      %v3531 = vpop.permute.xlu0 %3530
      %3532 = vrot.lane.b32.xlu0 %v3495, 8
      %v3533 = vpop.permute.xlu0 %3532
      %3534 = vrot.lane.b32.xlu0 %v3496, 8
      %v3535 = vpop.permute.xlu0 %3534
      %3536 = vrot.lane.b32.xlu0 %v3497, 8
      %v3537 = vpop.permute.xlu0 %3536
      %3538 = vrot.lane.b32.xlu0 %v3498, 8
      %v3539 = vpop.permute.xlu0 %3538
      %3540 = vrot.lane.b32.xlu0 %v3499, 8
      %v3541 = vpop.permute.xlu0 %3540
      %3542 = vrot.lane.b32.xlu0 %v3500, 8
      %v3543 = vpop.permute.xlu0 %3542
      %3544 = vrot.lane.b32.xlu0 %v3501, 8
      %v3545 = vpop.permute.xlu0 %3544
      %3546 = vrot.lane.b32.xlu0 %v3502, 8
      %v3547 = vpop.permute.xlu0 %3546
      %3548 = vrot.lane.b32.xlu0 %v3503, 8
      %v3549 = vpop.permute.xlu0 %3548
      %3550 = vrot.lane.b32.xlu0 %v3504, 8
      %v3551 = vpop.permute.xlu0 %3550
      %3552 = vrot.lane.b32.xlu0 %v3505, 8
      %v3553 = vpop.permute.xlu0 %3552
      %v3570 = vsel %vm407, %v3292, %v3523
      %v3571 = vsel %vm407, %v3293, %v3525
      %v3572 = vsel %vm407, %v3294, %v3527
      %v3573 = vsel %vm407, %v3295, %v3529
      %v3574 = vsel %vm407, %v3296, %v3531
      %v3575 = vsel %vm407, %v3297, %v3533
      %v3576 = vsel %vm407, %v3298, %v3535
      %v3577 = vsel %vm407, %v3299, %v3537
      %v3578 = vsel %vm407, %v3300, %v3539
      %v3579 = vsel %vm407, %v3301, %v3541
      %v3580 = vsel %vm407, %v3302, %v3543
      %v3581 = vsel %vm407, %v3303, %v3545
      %v3582 = vsel %vm407, %v3304, %v3547
      %v3583 = vsel %vm407, %v3305, %v3549
      %v3584 = vsel %vm407, %v3306, %v3551
      %v3585 = vsel %vm407, %v3307, %v3553
      %3586 = vst.msk [vmem:[%s406 + $0x1] sm:$0xff] %vm336, %v3570
      %3587 = vst.msk [vmem:[%s406 + $0x11] sm:$0xff] %vm336, %v3571
      %3588 = vst.msk [vmem:[%s406 + $0x21] sm:$0xff] %vm336, %v3572
      %3589 = vst.msk [vmem:[%s406 + $0x31] sm:$0xff] %vm336, %v3573
      %3590 = vst.msk [vmem:[%s406 + $0x41] sm:$0xff] %vm336, %v3574
      %3591 = vst.msk [vmem:[%s406 + $0x51] sm:$0xff] %vm336, %v3575
      %3592 = vst.msk [vmem:[%s406 + $0x61] sm:$0xff] %vm336, %v3576
      %3593 = vst.msk [vmem:[%s406 + $0x71] sm:$0xff] %vm336, %v3577
      %v3594 = vld [vmem:[#allocation2] sm:$0xff]
      %v3595 = vld [vmem:[#allocation2 + $0x10] sm:$0xff]
      %v3596 = vld [vmem:[#allocation2 + $0x20] sm:$0xff]
      %v3597 = vld [vmem:[#allocation2 + $0x30] sm:$0xff]
      %v3598 = vld [vmem:[#allocation2 + $0x40] sm:$0xff]
      %v3599 = vld [vmem:[#allocation2 + $0x50] sm:$0xff]
      %v3600 = vld [vmem:[#allocation2 + $0x60] sm:$0xff]
      %v3601 = vld [vmem:[#allocation2 + $0x70] sm:$0xff]
      %v3602 = vld [vmem:[#allocation2 + $0x1] sm:$0xff]
      %v3603 = vld [vmem:[#allocation2 + $0x11] sm:$0xff]
      %v3604 = vld [vmem:[#allocation2 + $0x21] sm:$0xff]
      %v3605 = vld [vmem:[#allocation2 + $0x31] sm:$0xff]
      %v3606 = vld [vmem:[#allocation2 + $0x41] sm:$0xff]
      %v3607 = vld [vmem:[#allocation2 + $0x51] sm:$0xff]
      %v3608 = vld [vmem:[#allocation2 + $0x61] sm:$0xff]
      %v3609 = vld [vmem:[#allocation2 + $0x71] sm:$0xff]
      %v3610 = vld [vmem:[#allocation2 + $0x2] sm:$0xff]
      %v3611 = vld [vmem:[#allocation2 + $0x12] sm:$0xff]
      %v3612 = vld [vmem:[#allocation2 + $0x22] sm:$0xff]
      %v3613 = vld [vmem:[#allocation2 + $0x32] sm:$0xff]
      %v3614 = vld [vmem:[#allocation2 + $0x42] sm:$0xff]
      %v3615 = vld [vmem:[#allocation2 + $0x52] sm:$0xff]
      %v3616 = vld [vmem:[#allocation2 + $0x62] sm:$0xff]
      %v3617 = vld [vmem:[#allocation2 + $0x72] sm:$0xff]
      %v3618 = vld [vmem:[%s406] sm:$0xff]
      %v3619 = vld [vmem:[%s406 + $0x10] sm:$0xff]
      %v3620 = vld [vmem:[%s406 + $0x20] sm:$0xff]
      %v3621 = vld [vmem:[%s406 + $0x30] sm:$0xff]
      %v3622 = vld [vmem:[%s406 + $0x40] sm:$0xff]
      %v3623 = vld [vmem:[%s406 + $0x50] sm:$0xff]
      %v3624 = vld [vmem:[%s406 + $0x60] sm:$0xff]
      %v3625 = vld [vmem:[%s406 + $0x70] sm:$0xff]
      %v3626 = vld [vmem:[%s406 + $0x1] sm:$0xff]
      %v3627 = vld [vmem:[%s406 + $0x11] sm:$0xff]
      %v3628 = vld [vmem:[%s406 + $0x21] sm:$0xff]
      %v3629 = vld [vmem:[%s406 + $0x31] sm:$0xff]
      %v3630 = vld [vmem:[%s406 + $0x41] sm:$0xff]
      %v3631 = vld [vmem:[%s406 + $0x51] sm:$0xff]
      %v3632 = vld [vmem:[%s406 + $0x61] sm:$0xff]
      %v3633 = vld [vmem:[%s406 + $0x71] sm:$0xff]
      %v3634 = vld [vmem:[%s406 + $0x2] sm:$0xff]
      %v3635 = vld [vmem:[%s406 + $0x12] sm:$0xff]
      %v3636 = vld [vmem:[%s406 + $0x22] sm:$0xff]
      %v3637 = vld [vmem:[%s406 + $0x32] sm:$0xff]
      %v3638 = vld [vmem:[%s406 + $0x42] sm:$0xff]
      %v3639 = vld [vmem:[%s406 + $0x52] sm:$0xff]
      %v3640 = vld [vmem:[%s406 + $0x62] sm:$0xff]
      %v3641 = vld [vmem:[%s406 + $0x72] sm:$0xff]
      %v3642 = vld [vmem:[%s464] sm:$0xff]
      %v3643 = vld [vmem:[%s464 + $0x10] sm:$0xff]
      %v3644 = vld [vmem:[%s464 + $0x20] sm:$0xff]
      %v3645 = vld [vmem:[%s464 + $0x30] sm:$0xff]
      %v3646 = vld [vmem:[%s464 + $0x40] sm:$0xff]
      %v3647 = vld [vmem:[%s464 + $0x50] sm:$0xff]
      %v3648 = vld [vmem:[%s464 + $0x60] sm:$0xff]
      %v3649 = vld [vmem:[%s464 + $0x70] sm:$0xff]
      %v3650 = vld [vmem:[%s464 + $0x1] sm:$0xff]
      %v3651 = vld [vmem:[%s464 + $0x11] sm:$0xff]
      %v3652 = vld [vmem:[%s464 + $0x21] sm:$0xff]
      %v3653 = vld [vmem:[%s464 + $0x31] sm:$0xff]
      %v3654 = vld [vmem:[%s464 + $0x41] sm:$0xff]
      %v3655 = vld [vmem:[%s464 + $0x51] sm:$0xff]
      %v3656 = vld [vmem:[%s464 + $0x61] sm:$0xff]
      %v3657 = vld [vmem:[%s464 + $0x71] sm:$0xff]
      %v3658 = vld [vmem:[%s464 + $0x2] sm:$0xff]
      %v3659 = vld [vmem:[%s464 + $0x12] sm:$0xff]
      %v3660 = vld [vmem:[%s464 + $0x22] sm:$0xff]
      %v3661 = vld [vmem:[%s464 + $0x32] sm:$0xff]
      %v3662 = vld [vmem:[%s464 + $0x42] sm:$0xff]
      %v3663 = vld [vmem:[%s464 + $0x52] sm:$0xff]
      %v3664 = vld [vmem:[%s464 + $0x62] sm:$0xff]
      %v3665 = vld [vmem:[%s464 + $0x72] sm:$0xff]
      %3674 = vrot.lane.b32.xlu0 %v3602, 16
      %v3675 = vpop.permute.xlu0 %3674
      %3676 = vrot.lane.b32.xlu0 %v3603, 16
      %v3677 = vpop.permute.xlu0 %3676
      %3678 = vrot.lane.b32.xlu0 %v3604, 16
      %v3679 = vpop.permute.xlu0 %3678
      %3680 = vrot.lane.b32.xlu0 %v3605, 16
      %v3681 = vpop.permute.xlu0 %3680
      %3682 = vrot.lane.b32.xlu0 %v3606, 16
      %v3683 = vpop.permute.xlu0 %3682
      %3684 = vrot.lane.b32.xlu0 %v3607, 16
      %v3685 = vpop.permute.xlu0 %3684
      %3686 = vrot.lane.b32.xlu0 %v3608, 16
      %v3687 = vpop.permute.xlu0 %3686
      %3688 = vrot.lane.b32.xlu0 %v3609, 16
      %v3689 = vpop.permute.xlu0 %3688
      %3706 = vrot.lane.b32.xlu0 %v3610, 32
      %v3707 = vpop.permute.xlu0 %3706
      %3708 = vrot.lane.b32.xlu0 %v3611, 32
      %v3709 = vpop.permute.xlu0 %3708
      %3710 = vrot.lane.b32.xlu0 %v3612, 32
      %v3711 = vpop.permute.xlu0 %3710
      %3712 = vrot.lane.b32.xlu0 %v3613, 32
      %v3713 = vpop.permute.xlu0 %3712
      %3714 = vrot.lane.b32.xlu0 %v3614, 32
      %v3715 = vpop.permute.xlu0 %3714
      %3716 = vrot.lane.b32.xlu0 %v3615, 32
      %v3717 = vpop.permute.xlu0 %3716
      %3718 = vrot.lane.b32.xlu0 %v3616, 32
      %v3719 = vpop.permute.xlu0 %3718
      %3720 = vrot.lane.b32.xlu0 %v3617, 32
      %v3721 = vpop.permute.xlu0 %3720
      %3738 = vrot.lane.b32.xlu0 %v3618, 48
      %v3739 = vpop.permute.xlu0 %3738
      %3740 = vrot.lane.b32.xlu0 %v3619, 48
      %v3741 = vpop.permute.xlu0 %3740
      %3742 = vrot.lane.b32.xlu0 %v3620, 48
      %v3743 = vpop.permute.xlu0 %3742
      %3744 = vrot.lane.b32.xlu0 %v3621, 48
      %v3745 = vpop.permute.xlu0 %3744
      %3746 = vrot.lane.b32.xlu0 %v3622, 48
      %v3747 = vpop.permute.xlu0 %3746
      %3748 = vrot.lane.b32.xlu0 %v3623, 48
      %v3749 = vpop.permute.xlu0 %3748
      %3750 = vrot.lane.b32.xlu0 %v3624, 48
      %v3751 = vpop.permute.xlu0 %3750
      %3752 = vrot.lane.b32.xlu0 %v3625, 48
      %v3753 = vpop.permute.xlu0 %3752
      %3770 = vrot.lane.b32.xlu0 %v3626, 64
      %v3771 = vpop.permute.xlu0 %3770
      %3772 = vrot.lane.b32.xlu0 %v3627, 64
      %v3773 = vpop.permute.xlu0 %3772
      %3774 = vrot.lane.b32.xlu0 %v3628, 64
      %v3775 = vpop.permute.xlu0 %3774
      %3776 = vrot.lane.b32.xlu0 %v3629, 64
      %v3777 = vpop.permute.xlu0 %3776
      %3778 = vrot.lane.b32.xlu0 %v3630, 64
      %v3779 = vpop.permute.xlu0 %3778
      %3780 = vrot.lane.b32.xlu0 %v3631, 64
      %v3781 = vpop.permute.xlu0 %3780
      %3782 = vrot.lane.b32.xlu0 %v3632, 64
      %v3783 = vpop.permute.xlu0 %3782
      %3784 = vrot.lane.b32.xlu0 %v3633, 64
      %v3785 = vpop.permute.xlu0 %3784
      %3802 = vrot.lane.b32.xlu0 %v3634, 80
      %v3803 = vpop.permute.xlu0 %3802
      %3804 = vrot.lane.b32.xlu0 %v3635, 80
      %v3805 = vpop.permute.xlu0 %3804
      %3806 = vrot.lane.b32.xlu0 %v3636, 80
      %v3807 = vpop.permute.xlu0 %3806
      %3808 = vrot.lane.b32.xlu0 %v3637, 80
      %v3809 = vpop.permute.xlu0 %3808
      %3810 = vrot.lane.b32.xlu0 %v3638, 80
      %v3811 = vpop.permute.xlu0 %3810
      %3812 = vrot.lane.b32.xlu0 %v3639, 80
      %v3813 = vpop.permute.xlu0 %3812
      %3814 = vrot.lane.b32.xlu0 %v3640, 80
      %v3815 = vpop.permute.xlu0 %3814
      %3816 = vrot.lane.b32.xlu0 %v3641, 80
      %v3817 = vpop.permute.xlu0 %3816
      %3834 = vrot.lane.b32.xlu0 %v3642, 96
      %v3835 = vpop.permute.xlu0 %3834
      %3836 = vrot.lane.b32.xlu0 %v3643, 96
      %v3837 = vpop.permute.xlu0 %3836
      %3838 = vrot.lane.b32.xlu0 %v3644, 96
      %v3839 = vpop.permute.xlu0 %3838
      %3840 = vrot.lane.b32.xlu0 %v3645, 96
      %v3841 = vpop.permute.xlu0 %3840
      %3842 = vrot.lane.b32.xlu0 %v3646, 96
      %v3843 = vpop.permute.xlu0 %3842
      %3844 = vrot.lane.b32.xlu0 %v3647, 96
      %v3845 = vpop.permute.xlu0 %3844
      %3846 = vrot.lane.b32.xlu0 %v3648, 96
      %v3847 = vpop.permute.xlu0 %3846
      %3848 = vrot.lane.b32.xlu0 %v3649, 96
      %v3849 = vpop.permute.xlu0 %3848
      %3866 = vrot.lane.b32.xlu0 %v3650, 112
      %v3867 = vpop.permute.xlu0 %3866
      %3868 = vrot.lane.b32.xlu0 %v3651, 112
      %v3869 = vpop.permute.xlu0 %3868
      %3870 = vrot.lane.b32.xlu0 %v3652, 112
      %v3871 = vpop.permute.xlu0 %3870
      %3872 = vrot.lane.b32.xlu0 %v3653, 112
      %v3873 = vpop.permute.xlu0 %3872
      %3874 = vrot.lane.b32.xlu0 %v3654, 112
      %v3875 = vpop.permute.xlu0 %3874
      %3876 = vrot.lane.b32.xlu0 %v3655, 112
      %v3877 = vpop.permute.xlu0 %3876
      %3878 = vrot.lane.b32.xlu0 %v3656, 112
      %v3879 = vpop.permute.xlu0 %3878
      %3880 = vrot.lane.b32.xlu0 %v3657, 112
      %v3881 = vpop.permute.xlu0 %3880
      %v3890 = vsel %vm336, %v3594, %v3675
      %v3891 = vsel %vm336, %v3595, %v3677
      %v3892 = vsel %vm336, %v3596, %v3679
      %v3893 = vsel %vm336, %v3597, %v3681
      %v3894 = vsel %vm336, %v3598, %v3683
      %v3895 = vsel %vm336, %v3599, %v3685
      %v3896 = vsel %vm336, %v3600, %v3687
      %v3897 = vsel %vm336, %v3601, %v3689
      %v3898 = vsel %vm770, %v3890, %v3707
      %v3899 = vsel %vm770, %v3891, %v3709
      %v3900 = vsel %vm770, %v3892, %v3711
      %v3901 = vsel %vm770, %v3893, %v3713
      %v3902 = vsel %vm770, %v3894, %v3715
      %v3903 = vsel %vm770, %v3895, %v3717
      %v3904 = vsel %vm770, %v3896, %v3719
      %v3905 = vsel %vm770, %v3897, %v3721
      %v3906 = vsel %vm788, %v3898, %v3739
      %v3907 = vsel %vm788, %v3899, %v3741
      %v3908 = vsel %vm788, %v3900, %v3743
      %v3909 = vsel %vm788, %v3901, %v3745
      %v3910 = vsel %vm788, %v3902, %v3747
      %v3911 = vsel %vm788, %v3903, %v3749
      %v3912 = vsel %vm788, %v3904, %v3751
      %v3913 = vsel %vm788, %v3905, %v3753
      %v3914 = vsel %vm806, %v3906, %v3771
      %v3915 = vsel %vm806, %v3907, %v3773
      %v3916 = vsel %vm806, %v3908, %v3775
      %v3917 = vsel %vm806, %v3909, %v3777
      %v3918 = vsel %vm806, %v3910, %v3779
      %v3919 = vsel %vm806, %v3911, %v3781
      %v3920 = vsel %vm806, %v3912, %v3783
      %v3921 = vsel %vm806, %v3913, %v3785
      %vm3922 = vcmask 654336
      %v3923 = vsel %vm3922, %v3914, %v3803
      %v3924 = vsel %vm3922, %v3915, %v3805
      %v3925 = vsel %vm3922, %v3916, %v3807
      %v3926 = vsel %vm3922, %v3917, %v3809
      %v3927 = vsel %vm3922, %v3918, %v3811
      %v3928 = vsel %vm3922, %v3919, %v3813
      %v3929 = vsel %vm3922, %v3920, %v3815
      %v3930 = vsel %vm3922, %v3921, %v3817
      %vm3931 = vcmask 785408
      %v3932 = vsel %vm3931, %v3923, %v3835
      %v3933 = vsel %vm3931, %v3924, %v3837
      %v3934 = vsel %vm3931, %v3925, %v3839
      %v3935 = vsel %vm3931, %v3926, %v3841
      %v3936 = vsel %vm3931, %v3927, %v3843
      %v3937 = vsel %vm3931, %v3928, %v3845
      %v3938 = vsel %vm3931, %v3929, %v3847
      %v3939 = vsel %vm3931, %v3930, %v3849
      %vm3940 = vcmask 916480
      %v3941 = vsel %vm3940, %v3932, %v3867
      %v3942 = vsel %vm3940, %v3933, %v3869
      %v3943 = vsel %vm3940, %v3934, %v3871
      %v3944 = vsel %vm3940, %v3935, %v3873
      %v3945 = vsel %vm3940, %v3936, %v3875
      %v3946 = vsel %vm3940, %v3937, %v3877
      %v3947 = vsel %vm3940, %v3938, %v3879
      %v3948 = vsel %vm3940, %v3939, %v3881
      %3949 = vst.msk [vmem:[%s815 + $0x1] sm:$0xff] %vm336, %v3578
      %3950 = vst.msk [vmem:[%s815 + $0x11] sm:$0xff] %vm336, %v3579
      %3951 = vst.msk [vmem:[%s815 + $0x21] sm:$0xff] %vm336, %v3580
      %3952 = vst.msk [vmem:[%s815 + $0x31] sm:$0xff] %vm336, %v3581
      %3953 = vst.msk [vmem:[%s815 + $0x41] sm:$0xff] %vm336, %v3582
      %3954 = vst.msk [vmem:[%s815 + $0x51] sm:$0xff] %vm336, %v3583
      %3955 = vst.msk [vmem:[%s815 + $0x61] sm:$0xff] %vm336, %v3584
      %3956 = vst.msk [vmem:[%s815 + $0x71] sm:$0xff] %vm336, %v3585
      %v3957 = vld [vmem:[%s364] sm:$0xff]
      %v3958 = vld [vmem:[%s364 + $0x10] sm:$0xff]
      %v3959 = vld [vmem:[%s364 + $0x20] sm:$0xff]
      %v3960 = vld [vmem:[%s364 + $0x30] sm:$0xff]
      %v3961 = vld [vmem:[%s364 + $0x40] sm:$0xff]
      %v3962 = vld [vmem:[%s364 + $0x50] sm:$0xff]
      %v3963 = vld [vmem:[%s364 + $0x60] sm:$0xff]
      %v3964 = vld [vmem:[%s364 + $0x70] sm:$0xff]
      %v3965 = vld [vmem:[%s364 + $0x1] sm:$0xff]
      %v3966 = vld [vmem:[%s364 + $0x11] sm:$0xff]
      %v3967 = vld [vmem:[%s364 + $0x21] sm:$0xff]
      %v3968 = vld [vmem:[%s364 + $0x31] sm:$0xff]
      %v3969 = vld [vmem:[%s364 + $0x41] sm:$0xff]
      %v3970 = vld [vmem:[%s364 + $0x51] sm:$0xff]
      %v3971 = vld [vmem:[%s364 + $0x61] sm:$0xff]
      %v3972 = vld [vmem:[%s364 + $0x71] sm:$0xff]
      %v3973 = vld [vmem:[%s364 + $0x2] sm:$0xff]
      %v3974 = vld [vmem:[%s364 + $0x12] sm:$0xff]
      %v3975 = vld [vmem:[%s364 + $0x22] sm:$0xff]
      %v3976 = vld [vmem:[%s364 + $0x32] sm:$0xff]
      %v3977 = vld [vmem:[%s364 + $0x42] sm:$0xff]
      %v3978 = vld [vmem:[%s364 + $0x52] sm:$0xff]
      %v3979 = vld [vmem:[%s364 + $0x62] sm:$0xff]
      %v3980 = vld [vmem:[%s364 + $0x72] sm:$0xff]
      %v3981 = vld [vmem:[%s815] sm:$0xff]
      %v3982 = vld [vmem:[%s815 + $0x10] sm:$0xff]
      %v3983 = vld [vmem:[%s815 + $0x20] sm:$0xff]
      %v3984 = vld [vmem:[%s815 + $0x30] sm:$0xff]
      %v3985 = vld [vmem:[%s815 + $0x40] sm:$0xff]
      %v3986 = vld [vmem:[%s815 + $0x50] sm:$0xff]
      %v3987 = vld [vmem:[%s815 + $0x60] sm:$0xff]
      %v3988 = vld [vmem:[%s815 + $0x70] sm:$0xff]
      %v3989 = vld [vmem:[%s815 + $0x1] sm:$0xff]
      %v3990 = vld [vmem:[%s815 + $0x11] sm:$0xff]
      %v3991 = vld [vmem:[%s815 + $0x21] sm:$0xff]
      %v3992 = vld [vmem:[%s815 + $0x31] sm:$0xff]
      %v3993 = vld [vmem:[%s815 + $0x41] sm:$0xff]
      %v3994 = vld [vmem:[%s815 + $0x51] sm:$0xff]
      %v3995 = vld [vmem:[%s815 + $0x61] sm:$0xff]
      %v3996 = vld [vmem:[%s815 + $0x71] sm:$0xff]
      %v3997 = vld [vmem:[%s815 + $0x2] sm:$0xff]
      %v3998 = vld [vmem:[%s815 + $0x12] sm:$0xff]
      %v3999 = vld [vmem:[%s815 + $0x22] sm:$0xff]
      %v4000 = vld [vmem:[%s815 + $0x32] sm:$0xff]
      %v4001 = vld [vmem:[%s815 + $0x42] sm:$0xff]
      %v4002 = vld [vmem:[%s815 + $0x52] sm:$0xff]
      %v4003 = vld [vmem:[%s815 + $0x62] sm:$0xff]
      %v4004 = vld [vmem:[%s815 + $0x72] sm:$0xff]
      %v4005 = vld [vmem:[%s872] sm:$0xff]
      %v4006 = vld [vmem:[%s872 + $0x10] sm:$0xff]
      %v4007 = vld [vmem:[%s872 + $0x20] sm:$0xff]
      %v4008 = vld [vmem:[%s872 + $0x30] sm:$0xff]
      %v4009 = vld [vmem:[%s872 + $0x40] sm:$0xff]
      %v4010 = vld [vmem:[%s872 + $0x50] sm:$0xff]
      %v4011 = vld [vmem:[%s872 + $0x60] sm:$0xff]
      %v4012 = vld [vmem:[%s872 + $0x70] sm:$0xff]
      %v4013 = vld [vmem:[%s872 + $0x1] sm:$0xff]
      %v4014 = vld [vmem:[%s872 + $0x11] sm:$0xff]
      %v4015 = vld [vmem:[%s872 + $0x21] sm:$0xff]
      %v4016 = vld [vmem:[%s872 + $0x31] sm:$0xff]
      %v4017 = vld [vmem:[%s872 + $0x41] sm:$0xff]
      %v4018 = vld [vmem:[%s872 + $0x51] sm:$0xff]
      %v4019 = vld [vmem:[%s872 + $0x61] sm:$0xff]
      %v4020 = vld [vmem:[%s872 + $0x71] sm:$0xff]
      %v4021 = vld [vmem:[%s872 + $0x2] sm:$0xff]
      %v4022 = vld [vmem:[%s872 + $0x12] sm:$0xff]
      %v4023 = vld [vmem:[%s872 + $0x22] sm:$0xff]
      %v4024 = vld [vmem:[%s872 + $0x32] sm:$0xff]
      %v4025 = vld [vmem:[%s872 + $0x42] sm:$0xff]
      %v4026 = vld [vmem:[%s872 + $0x52] sm:$0xff]
      %v4027 = vld [vmem:[%s872 + $0x62] sm:$0xff]
      %v4028 = vld [vmem:[%s872 + $0x72] sm:$0xff]
      %4037 = vrot.lane.b32.xlu0 %v3965, 16
      %v4038 = vpop.permute.xlu0 %4037
      %4039 = vrot.lane.b32.xlu0 %v3966, 16
      %v4040 = vpop.permute.xlu0 %4039
      %4041 = vrot.lane.b32.xlu0 %v3967, 16
      %v4042 = vpop.permute.xlu0 %4041
      %4043 = vrot.lane.b32.xlu0 %v3968, 16
      %v4044 = vpop.permute.xlu0 %4043
      %4045 = vrot.lane.b32.xlu0 %v3969, 16
      %v4046 = vpop.permute.xlu0 %4045
      %4047 = vrot.lane.b32.xlu0 %v3970, 16
      %v4048 = vpop.permute.xlu0 %4047
      %4049 = vrot.lane.b32.xlu0 %v3971, 16
      %v4050 = vpop.permute.xlu0 %4049
      %4051 = vrot.lane.b32.xlu0 %v3972, 16
      %v4052 = vpop.permute.xlu0 %4051
      %4069 = vrot.lane.b32.xlu0 %v3973, 32
      %v4070 = vpop.permute.xlu0 %4069
      %4071 = vrot.lane.b32.xlu0 %v3974, 32
      %v4072 = vpop.permute.xlu0 %4071
      %4073 = vrot.lane.b32.xlu0 %v3975, 32
      %v4074 = vpop.permute.xlu0 %4073
      %4075 = vrot.lane.b32.xlu0 %v3976, 32
      %v4076 = vpop.permute.xlu0 %4075
      %4077 = vrot.lane.b32.xlu0 %v3977, 32
      %v4078 = vpop.permute.xlu0 %4077
      %4079 = vrot.lane.b32.xlu0 %v3978, 32
      %v4080 = vpop.permute.xlu0 %4079
      %4081 = vrot.lane.b32.xlu0 %v3979, 32
      %v4082 = vpop.permute.xlu0 %4081
      %4083 = vrot.lane.b32.xlu0 %v3980, 32
      %v4084 = vpop.permute.xlu0 %4083
      %4101 = vrot.lane.b32.xlu0 %v3981, 48
      %v4102 = vpop.permute.xlu0 %4101
      %4103 = vrot.lane.b32.xlu0 %v3982, 48
      %v4104 = vpop.permute.xlu0 %4103
      %4105 = vrot.lane.b32.xlu0 %v3983, 48
      %v4106 = vpop.permute.xlu0 %4105
      %4107 = vrot.lane.b32.xlu0 %v3984, 48
      %v4108 = vpop.permute.xlu0 %4107
      %4109 = vrot.lane.b32.xlu0 %v3985, 48
      %v4110 = vpop.permute.xlu0 %4109
      %4111 = vrot.lane.b32.xlu0 %v3986, 48
      %v4112 = vpop.permute.xlu0 %4111
      %4113 = vrot.lane.b32.xlu0 %v3987, 48
      %v4114 = vpop.permute.xlu0 %4113
      %4115 = vrot.lane.b32.xlu0 %v3988, 48
      %v4116 = vpop.permute.xlu0 %4115
      %4133 = vrot.lane.b32.xlu0 %v3989, 64
      %v4134 = vpop.permute.xlu0 %4133
      %4135 = vrot.lane.b32.xlu0 %v3990, 64
      %v4136 = vpop.permute.xlu0 %4135
      %4137 = vrot.lane.b32.xlu0 %v3991, 64
      %v4138 = vpop.permute.xlu0 %4137
      %4139 = vrot.lane.b32.xlu0 %v3992, 64
      %v4140 = vpop.permute.xlu0 %4139
      %4141 = vrot.lane.b32.xlu0 %v3993, 64
      %v4142 = vpop.permute.xlu0 %4141
      %4143 = vrot.lane.b32.xlu0 %v3994, 64
      %v4144 = vpop.permute.xlu0 %4143
      %4145 = vrot.lane.b32.xlu0 %v3995, 64
      %v4146 = vpop.permute.xlu0 %4145
      %4147 = vrot.lane.b32.xlu0 %v3996, 64
      %v4148 = vpop.permute.xlu0 %4147
      %4165 = vrot.lane.b32.xlu0 %v3997, 80
      %v4166 = vpop.permute.xlu0 %4165
      %4167 = vrot.lane.b32.xlu0 %v3998, 80
      %v4168 = vpop.permute.xlu0 %4167
      %4169 = vrot.lane.b32.xlu0 %v3999, 80
      %v4170 = vpop.permute.xlu0 %4169
      %4171 = vrot.lane.b32.xlu0 %v4000, 80
      %v4172 = vpop.permute.xlu0 %4171
      %4173 = vrot.lane.b32.xlu0 %v4001, 80
      %v4174 = vpop.permute.xlu0 %4173
      %4175 = vrot.lane.b32.xlu0 %v4002, 80
      %v4176 = vpop.permute.xlu0 %4175
      %4177 = vrot.lane.b32.xlu0 %v4003, 80
      %v4178 = vpop.permute.xlu0 %4177
      %4179 = vrot.lane.b32.xlu0 %v4004, 80
      %v4180 = vpop.permute.xlu0 %4179
      %4197 = vrot.lane.b32.xlu0 %v4005, 96
      %v4198 = vpop.permute.xlu0 %4197
      %4199 = vrot.lane.b32.xlu0 %v4006, 96
      %v4200 = vpop.permute.xlu0 %4199
      %4201 = vrot.lane.b32.xlu0 %v4007, 96
      %v4202 = vpop.permute.xlu0 %4201
      %4203 = vrot.lane.b32.xlu0 %v4008, 96
      %v4204 = vpop.permute.xlu0 %4203
      %4205 = vrot.lane.b32.xlu0 %v4009, 96
      %v4206 = vpop.permute.xlu0 %4205
      %4207 = vrot.lane.b32.xlu0 %v4010, 96
      %v4208 = vpop.permute.xlu0 %4207
      %4209 = vrot.lane.b32.xlu0 %v4011, 96
      %v4210 = vpop.permute.xlu0 %4209
      %4211 = vrot.lane.b32.xlu0 %v4012, 96
      %v4212 = vpop.permute.xlu0 %4211
      %4229 = vrot.lane.b32.xlu0 %v4013, 112
      %v4230 = vpop.permute.xlu0 %4229
      %4231 = vrot.lane.b32.xlu0 %v4014, 112
      %v4232 = vpop.permute.xlu0 %4231
      %4233 = vrot.lane.b32.xlu0 %v4015, 112
      %v4234 = vpop.permute.xlu0 %4233
      %4235 = vrot.lane.b32.xlu0 %v4016, 112
      %v4236 = vpop.permute.xlu0 %4235
      %4237 = vrot.lane.b32.xlu0 %v4017, 112
      %v4238 = vpop.permute.xlu0 %4237
      %4239 = vrot.lane.b32.xlu0 %v4018, 112
      %v4240 = vpop.permute.xlu0 %4239
      %4241 = vrot.lane.b32.xlu0 %v4019, 112
      %v4242 = vpop.permute.xlu0 %4241
      %4243 = vrot.lane.b32.xlu0 %v4020, 112
      %v4244 = vpop.permute.xlu0 %4243
      %v4253 = vsel %vm336, %v3957, %v4038
      %v4254 = vsel %vm336, %v3958, %v4040
      %v4255 = vsel %vm336, %v3959, %v4042
      %v4256 = vsel %vm336, %v3960, %v4044
      %v4257 = vsel %vm336, %v3961, %v4046
      %v4258 = vsel %vm336, %v3962, %v4048
      %v4259 = vsel %vm336, %v3963, %v4050
      %v4260 = vsel %vm336, %v3964, %v4052
      %v4261 = vsel %vm770, %v4253, %v4070
      %v4262 = vsel %vm770, %v4254, %v4072
      %v4263 = vsel %vm770, %v4255, %v4074
      %v4264 = vsel %vm770, %v4256, %v4076
      %v4265 = vsel %vm770, %v4257, %v4078
      %v4266 = vsel %vm770, %v4258, %v4080
      %v4267 = vsel %vm770, %v4259, %v4082
      %v4268 = vsel %vm770, %v4260, %v4084
      %v4269 = vsel %vm788, %v4261, %v4102
      %v4270 = vsel %vm788, %v4262, %v4104
      %v4271 = vsel %vm788, %v4263, %v4106
      %v4272 = vsel %vm788, %v4264, %v4108
      %v4273 = vsel %vm788, %v4265, %v4110
      %v4274 = vsel %vm788, %v4266, %v4112
      %v4275 = vsel %vm788, %v4267, %v4114
      %v4276 = vsel %vm788, %v4268, %v4116
      %v4277 = vsel %vm806, %v4269, %v4134
      %v4278 = vsel %vm806, %v4270, %v4136
      %v4279 = vsel %vm806, %v4271, %v4138
      %v4280 = vsel %vm806, %v4272, %v4140
      %v4281 = vsel %vm806, %v4273, %v4142
      %v4282 = vsel %vm806, %v4274, %v4144
      %v4283 = vsel %vm806, %v4275, %v4146
      %v4284 = vsel %vm806, %v4276, %v4148
      %v4285 = vsel %vm3922, %v4277, %v4166
      %v4286 = vsel %vm3922, %v4278, %v4168
      %v4287 = vsel %vm3922, %v4279, %v4170
      %v4288 = vsel %vm3922, %v4280, %v4172
      %v4289 = vsel %vm3922, %v4281, %v4174
      %v4290 = vsel %vm3922, %v4282, %v4176
      %v4291 = vsel %vm3922, %v4283, %v4178
      %v4292 = vsel %vm3922, %v4284, %v4180
      %v4293 = vsel %vm3931, %v4285, %v4198
      %v4294 = vsel %vm3931, %v4286, %v4200
      %v4295 = vsel %vm3931, %v4287, %v4202
      %v4296 = vsel %vm3931, %v4288, %v4204
      %v4297 = vsel %vm3931, %v4289, %v4206
      %v4298 = vsel %vm3931, %v4290, %v4208
      %v4299 = vsel %vm3931, %v4291, %v4210
      %v4300 = vsel %vm3931, %v4292, %v4212
      %v4301 = vsel %vm3940, %v4293, %v4230
      %v4302 = vsel %vm3940, %v4294, %v4232
      %v4303 = vsel %vm3940, %v4295, %v4234
      %v4304 = vsel %vm3940, %v4296, %v4236
      %v4305 = vsel %vm3940, %v4297, %v4238
      %v4306 = vsel %vm3940, %v4298, %v4240
      %v4307 = vsel %vm3940, %v4299, %v4242
      %v4308 = vsel %vm3940, %v4300, %v4244
      %v4309 = vld [vmem:[%s3] sm:$0xff]
      %v4310 = vld [vmem:[%s3 + $0x8] sm:$0xff]
      %v4311 = vld [vmem:[%s3 + $0x10] sm:$0xff]
      %v4312 = vld [vmem:[%s3 + $0x18] sm:$0xff]
      %v4313 = vld [vmem:[%s3 + $0x20] sm:$0xff]
      %v4314 = vld [vmem:[%s3 + $0x28] sm:$0xff]
      %v4315 = vld [vmem:[%s3 + $0x30] sm:$0xff]
      %v4316 = vld [vmem:[%s3 + $0x38] sm:$0xff]
      %v4317 = vld [vmem:[%s3 + $0x40] sm:$0xff]
      %v4318 = vld [vmem:[%s3 + $0x48] sm:$0xff]
      %v4319 = vld [vmem:[%s3 + $0x50] sm:$0xff]
      %v4320 = vld [vmem:[%s3 + $0x58] sm:$0xff]
      %v4321 = vld [vmem:[%s3 + $0x60] sm:$0xff]
      %v4322 = vld [vmem:[%s3 + $0x68] sm:$0xff]
      %v4323 = vld [vmem:[%s3 + $0x70] sm:$0xff]
      %v4324 = vld [vmem:[%s3 + $0x78] sm:$0xff]
      %v4325 = vld [vmem:[%s3 + $0x80] sm:$0xff]
      %v4326 = vld [vmem:[%s3 + $0x88] sm:$0xff]
      %v4327 = vld [vmem:[%s4] sm:$0x1]
      %v4329 = vperm.slane %v4327, 0
      %v4332 = vsel %vm336, %v3658, 0
      %v4335 = vsel %vm336, %v3659, 0
      %v4338 = vsel %vm336, %v3660, 0
      %v4341 = vsel %vm336, %v3661, 0
      %v4344 = vsel %vm336, %v3662, 0
      %v4347 = vsel %vm336, %v3663, 0
      %v4350 = vsel %vm336, %v3664, 0
      %v4353 = vsel %vm336, %v3665, 0
      %v4356 = vsel %vm336, %v4021, 0
      %v4359 = vsel %vm336, %v4022, 0
      %v4362 = vsel %vm336, %v4023, 0
      %v4365 = vsel %vm336, %v4024, 0
      %v4368 = vsel %vm336, %v4025, 0
      %v4371 = vsel %vm336, %v4026, 0
      %v4374 = vsel %vm336, %v4027, 0
      %v4377 = vsel %vm336, %v4028, 0
      %4379 = vmatpush.msra.mxu0 %v4324
      %4380 = vmatpush.msra.mxu0 %v4323
      %4381 = vmatpush.msra.mxu0 %v4322
      %4382 = vmatpush.msra.mxu0 %v4321
      %4383 = vmatpush.msra.mxu0 %v4320
      %4384 = vmatpush.msra.mxu0 %v4319
      %4385 = vmatpush.msra.mxu0 %v4318
      %4386 = vmatpush.msra.mxu0 %v4317
      %4387 = vmatpush.msra.mxu0 %v4316
      %4388 = vmatpush.msra.mxu0 %v4315
      %4389 = vmatpush.msra.mxu0 %v4314
      %4390 = vmatpush.msra.mxu0 %v4313
      %4391 = vmatpush.msra.mxu0 %v4312
      %4392 = vmatpush.msra.mxu0 %v4311
      %4393 = vmatpush.msra.mxu0 %v4310
      %4394 = vmatpush.msra.mxu0 %v4309
      %4395 = vmatmul.f32.gmra.mxu0 %v3941
      %v4396 = vpop.f32.mrf.mxu0
      %v4397 = vadd.f32 %v4329, %v4396
      %4398 = vmatmul.f32.gmra.mxu0 %v3942
      %v4399 = vpop.f32.mrf.mxu0
      %v4400 = vadd.f32 %v4329, %v4399
      %4401 = vmatmul.f32.gmra.mxu0 %v3943
      %v4402 = vpop.f32.mrf.mxu0
      %v4403 = vadd.f32 %v4329, %v4402
      %4404 = vmatmul.f32.gmra.mxu0 %v3944
      %v4405 = vpop.f32.mrf.mxu0
      %v4406 = vadd.f32 %v4329, %v4405
      %4407 = vmatmul.f32.gmra.mxu0 %v3945
      %v4408 = vpop.f32.mrf.mxu0
      %v4409 = vadd.f32 %v4329, %v4408
      %4410 = vmatmul.f32.gmra.mxu0 %v3946
      %v4411 = vpop.f32.mrf.mxu0
      %v4412 = vadd.f32 %v4329, %v4411
      %4413 = vmatmul.f32.gmra.mxu0 %v3947
      %v4414 = vpop.f32.mrf.mxu0
      %v4415 = vadd.f32 %v4329, %v4414
      %4416 = vmatmul.f32.gmra.mxu0 %v3948
      %v4417 = vpop.f32.mrf.mxu0
      %v4418 = vadd.f32 %v4329, %v4417
      %4419 = vmatmul.f32.gmra.mxu0 %v4301
      %v4420 = vpop.f32.mrf.mxu0
      %v4421 = vadd.f32 %v4329, %v4420
      %4422 = vmatmul.f32.gmra.mxu0 %v4302
      %v4423 = vpop.f32.mrf.mxu0
      %v4424 = vadd.f32 %v4329, %v4423
      %4425 = vmatmul.f32.gmra.mxu0 %v4303
      %v4426 = vpop.f32.mrf.mxu0
      %v4427 = vadd.f32 %v4329, %v4426
      %4428 = vmatmul.f32.gmra.mxu0 %v4304
      %v4429 = vpop.f32.mrf.mxu0
      %v4430 = vadd.f32 %v4329, %v4429
      %4431 = vmatmul.f32.gmra.mxu0 %v4305
      %v4432 = vpop.f32.mrf.mxu0
      %v4433 = vadd.f32 %v4329, %v4432
      %4434 = vmatmul.f32.gmra.mxu0 %v4306
      %v4435 = vpop.f32.mrf.mxu0
      %v4436 = vadd.f32 %v4329, %v4435
      %4437 = vmatmul.f32.gmra.mxu0 %v4307
      %v4438 = vpop.f32.mrf.mxu0
      %v4439 = vadd.f32 %v4329, %v4438
      %4440 = vmatmul.f32.gmra.mxu0 %v4308
      %v4441 = vpop.f32.mrf.mxu0
      %v4442 = vadd.f32 %v4329, %v4441
      %4443 = vdwg.mxu0
      %4444 = vmatpush.msra.mxu0 0.0
      %4445 = vmatpush.msra.mxu0 0.0
      %4446 = vmatpush.msra.mxu0 0.0
      %4447 = vmatpush.msra.mxu0 0.0
      %4448 = vmatpush.msra.mxu0 0.0
      %4449 = vmatpush.msra.mxu0 0.0
      %4450 = vmatpush.msra.mxu0 0.0
      %4451 = vmatpush.msra.mxu0 0.0
      %4452 = vmatpush.msra.mxu0 0.0
      %4453 = vmatpush.msra.mxu0 0.0
      %4454 = vmatpush.msra.mxu0 0.0
      %4455 = vmatpush.msra.mxu0 0.0
      %4456 = vmatpush.msra.mxu0 0.0
      %4457 = vmatpush.msra.mxu0 0.0
      %4458 = vmatpush.msra.mxu0 %v4326
      %4459 = vmatpush.msra.mxu0 %v4325
      %4460 = vmatmul.f32.gmra.mxu0 %v4332
      %v4461 = vpop.f32.mrf.mxu0
      %v4462 = vadd.f32 %v4397, %v4461
      %4463 = vmatmul.f32.gmra.mxu0 %v4335
      %v4464 = vpop.f32.mrf.mxu0
      %v4465 = vadd.f32 %v4400, %v4464
      %4466 = vmatmul.f32.gmra.mxu0 %v4338
      %v4467 = vpop.f32.mrf.mxu0
      %v4468 = vadd.f32 %v4403, %v4467
      %4469 = vmatmul.f32.gmra.mxu0 %v4341
      %v4470 = vpop.f32.mrf.mxu0
      %v4471 = vadd.f32 %v4406, %v4470
      %4472 = vmatmul.f32.gmra.mxu0 %v4344
      %v4473 = vpop.f32.mrf.mxu0
      %v4474 = vadd.f32 %v4409, %v4473
      %4475 = vmatmul.f32.gmra.mxu0 %v4347
      %v4476 = vpop.f32.mrf.mxu0
      %v4477 = vadd.f32 %v4412, %v4476
      %4478 = vmatmul.f32.gmra.mxu0 %v4350
      %v4479 = vpop.f32.mrf.mxu0
      %v4480 = vadd.f32 %v4415, %v4479
      %4481 = vmatmul.f32.gmra.mxu0 %v4353
      %v4482 = vpop.f32.mrf.mxu0
      %v4483 = vadd.f32 %v4418, %v4482
      %4484 = vmatmul.f32.gmra.mxu0 %v4356
      %v4485 = vpop.f32.mrf.mxu0
      %v4486 = vadd.f32 %v4421, %v4485
      %4487 = vmatmul.f32.gmra.mxu0 %v4359
      %v4488 = vpop.f32.mrf.mxu0
      %v4489 = vadd.f32 %v4424, %v4488
      %4490 = vmatmul.f32.gmra.mxu0 %v4362
      %v4491 = vpop.f32.mrf.mxu0
      %v4492 = vadd.f32 %v4427, %v4491
      %4493 = vmatmul.f32.gmra.mxu0 %v4365
      %v4494 = vpop.f32.mrf.mxu0
      %v4495 = vadd.f32 %v4430, %v4494
      %4496 = vmatmul.f32.gmra.mxu0 %v4368
      %v4497 = vpop.f32.mrf.mxu0
      %v4498 = vadd.f32 %v4433, %v4497
      %4499 = vmatmul.f32.gmra.mxu0 %v4371
      %v4500 = vpop.f32.mrf.mxu0
      %v4501 = vadd.f32 %v4436, %v4500
      %4502 = vmatmul.f32.gmra.mxu0 %v4374
      %v4503 = vpop.f32.mrf.mxu0
      %v4504 = vadd.f32 %v4439, %v4503
      %4505 = vmatmul.f32.gmra.mxu0 %v4377
      %v4506 = vpop.f32.mrf.mxu0
      %v4507 = vadd.f32 %v4442, %v4506
      %4508 = vdwg.mxu0
      %v4509 = vmax.f32 %v4462, 0.0
      %v4510 = vmax.f32 %v4465, 0.0
      %v4511 = vmax.f32 %v4468, 0.0
      %v4512 = vmax.f32 %v4471, 0.0
      %v4513 = vmax.f32 %v4474, 0.0
      %v4514 = vmax.f32 %v4477, 0.0
      %v4515 = vmax.f32 %v4480, 0.0
      %v4516 = vmax.f32 %v4483, 0.0
      %v4517 = vmax.f32 %v4486, 0.0
      %v4518 = vmax.f32 %v4489, 0.0
      %v4519 = vmax.f32 %v4492, 0.0
      %v4520 = vmax.f32 %v4495, 0.0
      %v4521 = vmax.f32 %v4498, 0.0
      %v4522 = vmax.f32 %v4501, 0.0
      %v4523 = vmax.f32 %v4504, 0.0
      %v4524 = vmax.f32 %v4507, 0.0
      %4525 = vst.msk [vmem:[%s406 + $0x1] sm:$0xff] %vm336, %v4509
      %4526 = vst.msk [vmem:[%s406 + $0x11] sm:$0xff] %vm336, %v4510
      %4527 = vst.msk [vmem:[%s406 + $0x21] sm:$0xff] %vm336, %v4511
      %4528 = vst.msk [vmem:[%s406 + $0x31] sm:$0xff] %vm336, %v4512
      %4529 = vst.msk [vmem:[%s406 + $0x41] sm:$0xff] %vm336, %v4513
      %4530 = vst.msk [vmem:[%s406 + $0x51] sm:$0xff] %vm336, %v4514
      %4531 = vst.msk [vmem:[%s406 + $0x61] sm:$0xff] %vm336, %v4515
      %4532 = vst.msk [vmem:[%s406 + $0x71] sm:$0xff] %vm336, %v4516
      %v4533 = vld [vmem:[#allocation2] sm:$0xff]
      %v4534 = vld [vmem:[#allocation2 + $0x10] sm:$0xff]
      %v4535 = vld [vmem:[#allocation2 + $0x20] sm:$0xff]
      %v4536 = vld [vmem:[#allocation2 + $0x30] sm:$0xff]
      %v4537 = vld [vmem:[#allocation2 + $0x40] sm:$0xff]
      %v4538 = vld [vmem:[#allocation2 + $0x50] sm:$0xff]
      %v4539 = vld [vmem:[#allocation2 + $0x60] sm:$0xff]
      %v4540 = vld [vmem:[#allocation2 + $0x70] sm:$0xff]
      %v4541 = vld [vmem:[#allocation2 + $0x1] sm:$0xff]
      %v4542 = vld [vmem:[#allocation2 + $0x11] sm:$0xff]
      %v4543 = vld [vmem:[#allocation2 + $0x21] sm:$0xff]
      %v4544 = vld [vmem:[#allocation2 + $0x31] sm:$0xff]
      %v4545 = vld [vmem:[#allocation2 + $0x41] sm:$0xff]
      %v4546 = vld [vmem:[#allocation2 + $0x51] sm:$0xff]
      %v4547 = vld [vmem:[#allocation2 + $0x61] sm:$0xff]
      %v4548 = vld [vmem:[#allocation2 + $0x71] sm:$0xff]
      %v4549 = vld [vmem:[#allocation2 + $0x2] sm:$0xff]
      %v4550 = vld [vmem:[#allocation2 + $0x12] sm:$0xff]
      %v4551 = vld [vmem:[#allocation2 + $0x22] sm:$0xff]
      %v4552 = vld [vmem:[#allocation2 + $0x32] sm:$0xff]
      %v4553 = vld [vmem:[#allocation2 + $0x42] sm:$0xff]
      %v4554 = vld [vmem:[#allocation2 + $0x52] sm:$0xff]
      %v4555 = vld [vmem:[#allocation2 + $0x62] sm:$0xff]
      %v4556 = vld [vmem:[#allocation2 + $0x72] sm:$0xff]
      %v4557 = vld [vmem:[%s406] sm:$0xff]
      %v4558 = vld [vmem:[%s406 + $0x10] sm:$0xff]
      %v4559 = vld [vmem:[%s406 + $0x20] sm:$0xff]
      %v4560 = vld [vmem:[%s406 + $0x30] sm:$0xff]
      %v4561 = vld [vmem:[%s406 + $0x40] sm:$0xff]
      %v4562 = vld [vmem:[%s406 + $0x50] sm:$0xff]
      %v4563 = vld [vmem:[%s406 + $0x60] sm:$0xff]
      %v4564 = vld [vmem:[%s406 + $0x70] sm:$0xff]
      %v4565 = vld [vmem:[%s406 + $0x1] sm:$0xff]
      %v4566 = vld [vmem:[%s406 + $0x11] sm:$0xff]
      %v4567 = vld [vmem:[%s406 + $0x21] sm:$0xff]
      %v4568 = vld [vmem:[%s406 + $0x31] sm:$0xff]
      %v4569 = vld [vmem:[%s406 + $0x41] sm:$0xff]
      %v4570 = vld [vmem:[%s406 + $0x51] sm:$0xff]
      %v4571 = vld [vmem:[%s406 + $0x61] sm:$0xff]
      %v4572 = vld [vmem:[%s406 + $0x71] sm:$0xff]
      %v4573 = vld [vmem:[%s406 + $0x2] sm:$0xff]
      %v4574 = vld [vmem:[%s406 + $0x12] sm:$0xff]
      %v4575 = vld [vmem:[%s406 + $0x22] sm:$0xff]
      %v4576 = vld [vmem:[%s406 + $0x32] sm:$0xff]
      %v4577 = vld [vmem:[%s406 + $0x42] sm:$0xff]
      %v4578 = vld [vmem:[%s406 + $0x52] sm:$0xff]
      %v4579 = vld [vmem:[%s406 + $0x62] sm:$0xff]
      %v4580 = vld [vmem:[%s406 + $0x72] sm:$0xff]
      %v4581 = vld [vmem:[%s464] sm:$0xff]
      %v4582 = vld [vmem:[%s464 + $0x10] sm:$0xff]
      %v4583 = vld [vmem:[%s464 + $0x20] sm:$0xff]
      %v4584 = vld [vmem:[%s464 + $0x30] sm:$0xff]
      %v4585 = vld [vmem:[%s464 + $0x40] sm:$0xff]
      %v4586 = vld [vmem:[%s464 + $0x50] sm:$0xff]
      %v4587 = vld [vmem:[%s464 + $0x60] sm:$0xff]
      %v4588 = vld [vmem:[%s464 + $0x70] sm:$0xff]
      %v4589 = vld [vmem:[%s464 + $0x1] sm:$0xff]
      %v4590 = vld [vmem:[%s464 + $0x11] sm:$0xff]
      %v4591 = vld [vmem:[%s464 + $0x21] sm:$0xff]
      %v4592 = vld [vmem:[%s464 + $0x31] sm:$0xff]
      %v4593 = vld [vmem:[%s464 + $0x41] sm:$0xff]
      %v4594 = vld [vmem:[%s464 + $0x51] sm:$0xff]
      %v4595 = vld [vmem:[%s464 + $0x61] sm:$0xff]
      %v4596 = vld [vmem:[%s464 + $0x71] sm:$0xff]
      %v4597 = vld [vmem:[%s464 + $0x2] sm:$0xff]
      %v4598 = vld [vmem:[%s464 + $0x12] sm:$0xff]
      %v4599 = vld [vmem:[%s464 + $0x22] sm:$0xff]
      %v4600 = vld [vmem:[%s464 + $0x32] sm:$0xff]
      %v4601 = vld [vmem:[%s464 + $0x42] sm:$0xff]
      %v4602 = vld [vmem:[%s464 + $0x52] sm:$0xff]
      %v4603 = vld [vmem:[%s464 + $0x62] sm:$0xff]
      %v4604 = vld [vmem:[%s464 + $0x72] sm:$0xff]
      %4613 = vrot.lane.b32.xlu0 %v4541, 16
      %v4614 = vpop.permute.xlu0 %4613
      %4615 = vrot.lane.b32.xlu0 %v4542, 16
      %v4616 = vpop.permute.xlu0 %4615
      %4617 = vrot.lane.b32.xlu0 %v4543, 16
      %v4618 = vpop.permute.xlu0 %4617
      %4619 = vrot.lane.b32.xlu0 %v4544, 16
      %v4620 = vpop.permute.xlu0 %4619
      %4621 = vrot.lane.b32.xlu0 %v4545, 16
      %v4622 = vpop.permute.xlu0 %4621
      %4623 = vrot.lane.b32.xlu0 %v4546, 16
      %v4624 = vpop.permute.xlu0 %4623
      %4625 = vrot.lane.b32.xlu0 %v4547, 16
      %v4626 = vpop.permute.xlu0 %4625
      %4627 = vrot.lane.b32.xlu0 %v4548, 16
      %v4628 = vpop.permute.xlu0 %4627
      %4645 = vrot.lane.b32.xlu0 %v4549, 32
      %v4646 = vpop.permute.xlu0 %4645
      %4647 = vrot.lane.b32.xlu0 %v4550, 32
      %v4648 = vpop.permute.xlu0 %4647
      %4649 = vrot.lane.b32.xlu0 %v4551, 32
      %v4650 = vpop.permute.xlu0 %4649
      %4651 = vrot.lane.b32.xlu0 %v4552, 32
      %v4652 = vpop.permute.xlu0 %4651
      %4653 = vrot.lane.b32.xlu0 %v4553, 32
      %v4654 = vpop.permute.xlu0 %4653
      %4655 = vrot.lane.b32.xlu0 %v4554, 32
      %v4656 = vpop.permute.xlu0 %4655
      %4657 = vrot.lane.b32.xlu0 %v4555, 32
      %v4658 = vpop.permute.xlu0 %4657
      %4659 = vrot.lane.b32.xlu0 %v4556, 32
      %v4660 = vpop.permute.xlu0 %4659
      %4677 = vrot.lane.b32.xlu0 %v4557, 48
      %v4678 = vpop.permute.xlu0 %4677
      %4679 = vrot.lane.b32.xlu0 %v4558, 48
      %v4680 = vpop.permute.xlu0 %4679
      %4681 = vrot.lane.b32.xlu0 %v4559, 48
      %v4682 = vpop.permute.xlu0 %4681
      %4683 = vrot.lane.b32.xlu0 %v4560, 48
      %v4684 = vpop.permute.xlu0 %4683
      %4685 = vrot.lane.b32.xlu0 %v4561, 48
      %v4686 = vpop.permute.xlu0 %4685
      %4687 = vrot.lane.b32.xlu0 %v4562, 48
      %v4688 = vpop.permute.xlu0 %4687
      %4689 = vrot.lane.b32.xlu0 %v4563, 48
      %v4690 = vpop.permute.xlu0 %4689
      %4691 = vrot.lane.b32.xlu0 %v4564, 48
      %v4692 = vpop.permute.xlu0 %4691
      %4709 = vrot.lane.b32.xlu0 %v4565, 64
      %v4710 = vpop.permute.xlu0 %4709
      %4711 = vrot.lane.b32.xlu0 %v4566, 64
      %v4712 = vpop.permute.xlu0 %4711
      %4713 = vrot.lane.b32.xlu0 %v4567, 64
      %v4714 = vpop.permute.xlu0 %4713
      %4715 = vrot.lane.b32.xlu0 %v4568, 64
      %v4716 = vpop.permute.xlu0 %4715
      %4717 = vrot.lane.b32.xlu0 %v4569, 64
      %v4718 = vpop.permute.xlu0 %4717
      %4719 = vrot.lane.b32.xlu0 %v4570, 64
      %v4720 = vpop.permute.xlu0 %4719
      %4721 = vrot.lane.b32.xlu0 %v4571, 64
      %v4722 = vpop.permute.xlu0 %4721
      %4723 = vrot.lane.b32.xlu0 %v4572, 64
      %v4724 = vpop.permute.xlu0 %4723
      %4741 = vrot.lane.b32.xlu0 %v4573, 80
      %v4742 = vpop.permute.xlu0 %4741
      %4743 = vrot.lane.b32.xlu0 %v4574, 80
      %v4744 = vpop.permute.xlu0 %4743
      %4745 = vrot.lane.b32.xlu0 %v4575, 80
      %v4746 = vpop.permute.xlu0 %4745
      %4747 = vrot.lane.b32.xlu0 %v4576, 80
      %v4748 = vpop.permute.xlu0 %4747
      %4749 = vrot.lane.b32.xlu0 %v4577, 80
      %v4750 = vpop.permute.xlu0 %4749
      %4751 = vrot.lane.b32.xlu0 %v4578, 80
      %v4752 = vpop.permute.xlu0 %4751
      %4753 = vrot.lane.b32.xlu0 %v4579, 80
      %v4754 = vpop.permute.xlu0 %4753
      %4755 = vrot.lane.b32.xlu0 %v4580, 80
      %v4756 = vpop.permute.xlu0 %4755
      %4773 = vrot.lane.b32.xlu0 %v4581, 96
      %v4774 = vpop.permute.xlu0 %4773
      %4775 = vrot.lane.b32.xlu0 %v4582, 96
      %v4776 = vpop.permute.xlu0 %4775
      %4777 = vrot.lane.b32.xlu0 %v4583, 96
      %v4778 = vpop.permute.xlu0 %4777
      %4779 = vrot.lane.b32.xlu0 %v4584, 96
      %v4780 = vpop.permute.xlu0 %4779
      %4781 = vrot.lane.b32.xlu0 %v4585, 96
      %v4782 = vpop.permute.xlu0 %4781
      %4783 = vrot.lane.b32.xlu0 %v4586, 96
      %v4784 = vpop.permute.xlu0 %4783
      %4785 = vrot.lane.b32.xlu0 %v4587, 96
      %v4786 = vpop.permute.xlu0 %4785
      %4787 = vrot.lane.b32.xlu0 %v4588, 96
      %v4788 = vpop.permute.xlu0 %4787
      %4805 = vrot.lane.b32.xlu0 %v4589, 112
      %v4806 = vpop.permute.xlu0 %4805
      %4807 = vrot.lane.b32.xlu0 %v4590, 112
      %v4808 = vpop.permute.xlu0 %4807
      %4809 = vrot.lane.b32.xlu0 %v4591, 112
      %v4810 = vpop.permute.xlu0 %4809
      %4811 = vrot.lane.b32.xlu0 %v4592, 112
      %v4812 = vpop.permute.xlu0 %4811
      %4813 = vrot.lane.b32.xlu0 %v4593, 112
      %v4814 = vpop.permute.xlu0 %4813
      %4815 = vrot.lane.b32.xlu0 %v4594, 112
      %v4816 = vpop.permute.xlu0 %4815
      %4817 = vrot.lane.b32.xlu0 %v4595, 112
      %v4818 = vpop.permute.xlu0 %4817
      %4819 = vrot.lane.b32.xlu0 %v4596, 112
      %v4820 = vpop.permute.xlu0 %4819
      %v4829 = vsel %vm336, %v4533, %v4614
      %v4830 = vsel %vm336, %v4534, %v4616
      %v4831 = vsel %vm336, %v4535, %v4618
      %v4832 = vsel %vm336, %v4536, %v4620
      %v4833 = vsel %vm336, %v4537, %v4622
      %v4834 = vsel %vm336, %v4538, %v4624
      %v4835 = vsel %vm336, %v4539, %v4626
      %v4836 = vsel %vm336, %v4540, %v4628
      %v4837 = vsel %vm770, %v4829, %v4646
      %v4838 = vsel %vm770, %v4830, %v4648
      %v4839 = vsel %vm770, %v4831, %v4650
      %v4840 = vsel %vm770, %v4832, %v4652
      %v4841 = vsel %vm770, %v4833, %v4654
      %v4842 = vsel %vm770, %v4834, %v4656
      %v4843 = vsel %vm770, %v4835, %v4658
      %v4844 = vsel %vm770, %v4836, %v4660
      %v4845 = vsel %vm788, %v4837, %v4678
      %v4846 = vsel %vm788, %v4838, %v4680
      %v4847 = vsel %vm788, %v4839, %v4682
      %v4848 = vsel %vm788, %v4840, %v4684
      %v4849 = vsel %vm788, %v4841, %v4686
      %v4850 = vsel %vm788, %v4842, %v4688
      %v4851 = vsel %vm788, %v4843, %v4690
      %v4852 = vsel %vm788, %v4844, %v4692
      %v4853 = vsel %vm806, %v4845, %v4710
      %v4854 = vsel %vm806, %v4846, %v4712
      %v4855 = vsel %vm806, %v4847, %v4714
      %v4856 = vsel %vm806, %v4848, %v4716
      %v4857 = vsel %vm806, %v4849, %v4718
      %v4858 = vsel %vm806, %v4850, %v4720
      %v4859 = vsel %vm806, %v4851, %v4722
      %v4860 = vsel %vm806, %v4852, %v4724
      %v4861 = vsel %vm3922, %v4853, %v4742
      %v4862 = vsel %vm3922, %v4854, %v4744
      %v4863 = vsel %vm3922, %v4855, %v4746
      %v4864 = vsel %vm3922, %v4856, %v4748
      %v4865 = vsel %vm3922, %v4857, %v4750
      %v4866 = vsel %vm3922, %v4858, %v4752
      %v4867 = vsel %vm3922, %v4859, %v4754
      %v4868 = vsel %vm3922, %v4860, %v4756
      %v4869 = vsel %vm3931, %v4861, %v4774
      %v4870 = vsel %vm3931, %v4862, %v4776
      %v4871 = vsel %vm3931, %v4863, %v4778
      %v4872 = vsel %vm3931, %v4864, %v4780
      %v4873 = vsel %vm3931, %v4865, %v4782
      %v4874 = vsel %vm3931, %v4866, %v4784
      %v4875 = vsel %vm3931, %v4867, %v4786
      %v4876 = vsel %vm3931, %v4868, %v4788
      %v4877 = vsel %vm3940, %v4869, %v4806
      %v4878 = vsel %vm3940, %v4870, %v4808
      %v4879 = vsel %vm3940, %v4871, %v4810
      %v4880 = vsel %vm3940, %v4872, %v4812
      %v4881 = vsel %vm3940, %v4873, %v4814
      %v4882 = vsel %vm3940, %v4874, %v4816
      %v4883 = vsel %vm3940, %v4875, %v4818
      %v4884 = vsel %vm3940, %v4876, %v4820
      %4885 = vst.msk [vmem:[%s815 + $0x1] sm:$0xff] %vm336, %v4517
      %4886 = vst.msk [vmem:[%s815 + $0x11] sm:$0xff] %vm336, %v4518
      %4887 = vst.msk [vmem:[%s815 + $0x21] sm:$0xff] %vm336, %v4519
      %4888 = vst.msk [vmem:[%s815 + $0x31] sm:$0xff] %vm336, %v4520
      %4889 = vst.msk [vmem:[%s815 + $0x41] sm:$0xff] %vm336, %v4521
      %4890 = vst.msk [vmem:[%s815 + $0x51] sm:$0xff] %vm336, %v4522
      %4891 = vst.msk [vmem:[%s815 + $0x61] sm:$0xff] %vm336, %v4523
      %4892 = vst.msk [vmem:[%s815 + $0x71] sm:$0xff] %vm336, %v4524
      %v4893 = vld [vmem:[%s364] sm:$0xff]
      %v4894 = vld [vmem:[%s364 + $0x10] sm:$0xff]
      %v4895 = vld [vmem:[%s364 + $0x20] sm:$0xff]
      %v4896 = vld [vmem:[%s364 + $0x30] sm:$0xff]
      %v4897 = vld [vmem:[%s364 + $0x40] sm:$0xff]
      %v4898 = vld [vmem:[%s364 + $0x50] sm:$0xff]
      %v4899 = vld [vmem:[%s364 + $0x60] sm:$0xff]
      %v4900 = vld [vmem:[%s364 + $0x70] sm:$0xff]
      %v4901 = vld [vmem:[%s364 + $0x1] sm:$0xff]
      %v4902 = vld [vmem:[%s364 + $0x11] sm:$0xff]
      %v4903 = vld [vmem:[%s364 + $0x21] sm:$0xff]
      %v4904 = vld [vmem:[%s364 + $0x31] sm:$0xff]
      %v4905 = vld [vmem:[%s364 + $0x41] sm:$0xff]
      %v4906 = vld [vmem:[%s364 + $0x51] sm:$0xff]
      %v4907 = vld [vmem:[%s364 + $0x61] sm:$0xff]
      %v4908 = vld [vmem:[%s364 + $0x71] sm:$0xff]
      %v4909 = vld [vmem:[%s364 + $0x2] sm:$0xff]
      %v4910 = vld [vmem:[%s364 + $0x12] sm:$0xff]
      %v4911 = vld [vmem:[%s364 + $0x22] sm:$0xff]
      %v4912 = vld [vmem:[%s364 + $0x32] sm:$0xff]
      %v4913 = vld [vmem:[%s364 + $0x42] sm:$0xff]
      %v4914 = vld [vmem:[%s364 + $0x52] sm:$0xff]
      %v4915 = vld [vmem:[%s364 + $0x62] sm:$0xff]
      %v4916 = vld [vmem:[%s364 + $0x72] sm:$0xff]
      %v4917 = vld [vmem:[%s815] sm:$0xff]
      %v4918 = vld [vmem:[%s815 + $0x10] sm:$0xff]
      %v4919 = vld [vmem:[%s815 + $0x20] sm:$0xff]
      %v4920 = vld [vmem:[%s815 + $0x30] sm:$0xff]
      %v4921 = vld [vmem:[%s815 + $0x40] sm:$0xff]
      %v4922 = vld [vmem:[%s815 + $0x50] sm:$0xff]
      %v4923 = vld [vmem:[%s815 + $0x60] sm:$0xff]
      %v4924 = vld [vmem:[%s815 + $0x70] sm:$0xff]
      %v4925 = vld [vmem:[%s815 + $0x1] sm:$0xff]
      %v4926 = vld [vmem:[%s815 + $0x11] sm:$0xff]
      %v4927 = vld [vmem:[%s815 + $0x21] sm:$0xff]
      %v4928 = vld [vmem:[%s815 + $0x31] sm:$0xff]
      %v4929 = vld [vmem:[%s815 + $0x41] sm:$0xff]
      %v4930 = vld [vmem:[%s815 + $0x51] sm:$0xff]
      %v4931 = vld [vmem:[%s815 + $0x61] sm:$0xff]
      %v4932 = vld [vmem:[%s815 + $0x71] sm:$0xff]
      %v4933 = vld [vmem:[%s815 + $0x2] sm:$0xff]
      %v4934 = vld [vmem:[%s815 + $0x12] sm:$0xff]
      %v4935 = vld [vmem:[%s815 + $0x22] sm:$0xff]
      %v4936 = vld [vmem:[%s815 + $0x32] sm:$0xff]
      %v4937 = vld [vmem:[%s815 + $0x42] sm:$0xff]
      %v4938 = vld [vmem:[%s815 + $0x52] sm:$0xff]
      %v4939 = vld [vmem:[%s815 + $0x62] sm:$0xff]
      %v4940 = vld [vmem:[%s815 + $0x72] sm:$0xff]
      %v4941 = vld [vmem:[%s872] sm:$0xff]
      %v4942 = vld [vmem:[%s872 + $0x10] sm:$0xff]
      %v4943 = vld [vmem:[%s872 + $0x20] sm:$0xff]
      %v4944 = vld [vmem:[%s872 + $0x30] sm:$0xff]
      %v4945 = vld [vmem:[%s872 + $0x40] sm:$0xff]
      %v4946 = vld [vmem:[%s872 + $0x50] sm:$0xff]
      %v4947 = vld [vmem:[%s872 + $0x60] sm:$0xff]
      %v4948 = vld [vmem:[%s872 + $0x70] sm:$0xff]
      %v4949 = vld [vmem:[%s872 + $0x1] sm:$0xff]
      %v4950 = vld [vmem:[%s872 + $0x11] sm:$0xff]
      %v4951 = vld [vmem:[%s872 + $0x21] sm:$0xff]
      %v4952 = vld [vmem:[%s872 + $0x31] sm:$0xff]
      %v4953 = vld [vmem:[%s872 + $0x41] sm:$0xff]
      %v4954 = vld [vmem:[%s872 + $0x51] sm:$0xff]
      %v4955 = vld [vmem:[%s872 + $0x61] sm:$0xff]
      %v4956 = vld [vmem:[%s872 + $0x71] sm:$0xff]
      %v4957 = vld [vmem:[%s872 + $0x2] sm:$0xff]
      %v4958 = vld [vmem:[%s872 + $0x12] sm:$0xff]
      %v4959 = vld [vmem:[%s872 + $0x22] sm:$0xff]
      %v4960 = vld [vmem:[%s872 + $0x32] sm:$0xff]
      %v4961 = vld [vmem:[%s872 + $0x42] sm:$0xff]
      %v4962 = vld [vmem:[%s872 + $0x52] sm:$0xff]
      %v4963 = vld [vmem:[%s872 + $0x62] sm:$0xff]
      %v4964 = vld [vmem:[%s872 + $0x72] sm:$0xff]
      %4973 = vrot.lane.b32.xlu0 %v4901, 16
      %v4974 = vpop.permute.xlu0 %4973
      %4975 = vrot.lane.b32.xlu0 %v4902, 16
      %v4976 = vpop.permute.xlu0 %4975
      %4977 = vrot.lane.b32.xlu0 %v4903, 16
      %v4978 = vpop.permute.xlu0 %4977
      %4979 = vrot.lane.b32.xlu0 %v4904, 16
      %v4980 = vpop.permute.xlu0 %4979
      %4981 = vrot.lane.b32.xlu0 %v4905, 16
      %v4982 = vpop.permute.xlu0 %4981
      %4983 = vrot.lane.b32.xlu0 %v4906, 16
      %v4984 = vpop.permute.xlu0 %4983
      %4985 = vrot.lane.b32.xlu0 %v4907, 16
      %v4986 = vpop.permute.xlu0 %4985
      %4987 = vrot.lane.b32.xlu0 %v4908, 16
      %v4988 = vpop.permute.xlu0 %4987
      %5005 = vrot.lane.b32.xlu0 %v4909, 32
      %v5006 = vpop.permute.xlu0 %5005
      %5007 = vrot.lane.b32.xlu0 %v4910, 32
      %v5008 = vpop.permute.xlu0 %5007
      %5009 = vrot.lane.b32.xlu0 %v4911, 32
      %v5010 = vpop.permute.xlu0 %5009
      %5011 = vrot.lane.b32.xlu0 %v4912, 32
      %v5012 = vpop.permute.xlu0 %5011
      %5013 = vrot.lane.b32.xlu0 %v4913, 32
      %v5014 = vpop.permute.xlu0 %5013
      %5015 = vrot.lane.b32.xlu0 %v4914, 32
      %v5016 = vpop.permute.xlu0 %5015
      %5017 = vrot.lane.b32.xlu0 %v4915, 32
      %v5018 = vpop.permute.xlu0 %5017
      %5019 = vrot.lane.b32.xlu0 %v4916, 32
      %v5020 = vpop.permute.xlu0 %5019
      %5037 = vrot.lane.b32.xlu0 %v4917, 48
      %v5038 = vpop.permute.xlu0 %5037
      %5039 = vrot.lane.b32.xlu0 %v4918, 48
      %v5040 = vpop.permute.xlu0 %5039
      %5041 = vrot.lane.b32.xlu0 %v4919, 48
      %v5042 = vpop.permute.xlu0 %5041
      %5043 = vrot.lane.b32.xlu0 %v4920, 48
      %v5044 = vpop.permute.xlu0 %5043
      %5045 = vrot.lane.b32.xlu0 %v4921, 48
      %v5046 = vpop.permute.xlu0 %5045
      %5047 = vrot.lane.b32.xlu0 %v4922, 48
      %v5048 = vpop.permute.xlu0 %5047
      %5049 = vrot.lane.b32.xlu0 %v4923, 48
      %v5050 = vpop.permute.xlu0 %5049
      %5051 = vrot.lane.b32.xlu0 %v4924, 48
      %v5052 = vpop.permute.xlu0 %5051
      %5069 = vrot.lane.b32.xlu0 %v4925, 64
      %v5070 = vpop.permute.xlu0 %5069
      %5071 = vrot.lane.b32.xlu0 %v4926, 64
      %v5072 = vpop.permute.xlu0 %5071
      %5073 = vrot.lane.b32.xlu0 %v4927, 64
      %v5074 = vpop.permute.xlu0 %5073
      %5075 = vrot.lane.b32.xlu0 %v4928, 64
      %v5076 = vpop.permute.xlu0 %5075
      %5077 = vrot.lane.b32.xlu0 %v4929, 64
      %v5078 = vpop.permute.xlu0 %5077
      %5079 = vrot.lane.b32.xlu0 %v4930, 64
      %v5080 = vpop.permute.xlu0 %5079
      %5081 = vrot.lane.b32.xlu0 %v4931, 64
      %v5082 = vpop.permute.xlu0 %5081
      %5083 = vrot.lane.b32.xlu0 %v4932, 64
      %v5084 = vpop.permute.xlu0 %5083
      %5101 = vrot.lane.b32.xlu0 %v4933, 80
      %v5102 = vpop.permute.xlu0 %5101
      %5103 = vrot.lane.b32.xlu0 %v4934, 80
      %v5104 = vpop.permute.xlu0 %5103
      %5105 = vrot.lane.b32.xlu0 %v4935, 80
      %v5106 = vpop.permute.xlu0 %5105
      %5107 = vrot.lane.b32.xlu0 %v4936, 80
      %v5108 = vpop.permute.xlu0 %5107
      %5109 = vrot.lane.b32.xlu0 %v4937, 80
      %v5110 = vpop.permute.xlu0 %5109
      %5111 = vrot.lane.b32.xlu0 %v4938, 80
      %v5112 = vpop.permute.xlu0 %5111
      %5113 = vrot.lane.b32.xlu0 %v4939, 80
      %v5114 = vpop.permute.xlu0 %5113
      %5115 = vrot.lane.b32.xlu0 %v4940, 80
      %v5116 = vpop.permute.xlu0 %5115
      %5133 = vrot.lane.b32.xlu0 %v4941, 96
      %v5134 = vpop.permute.xlu0 %5133
      %5135 = vrot.lane.b32.xlu0 %v4942, 96
      %v5136 = vpop.permute.xlu0 %5135
      %5137 = vrot.lane.b32.xlu0 %v4943, 96
      %v5138 = vpop.permute.xlu0 %5137
      %5139 = vrot.lane.b32.xlu0 %v4944, 96
      %v5140 = vpop.permute.xlu0 %5139
      %5141 = vrot.lane.b32.xlu0 %v4945, 96
      %v5142 = vpop.permute.xlu0 %5141
      %5143 = vrot.lane.b32.xlu0 %v4946, 96
      %v5144 = vpop.permute.xlu0 %5143
      %5145 = vrot.lane.b32.xlu0 %v4947, 96
      %v5146 = vpop.permute.xlu0 %5145
      %5147 = vrot.lane.b32.xlu0 %v4948, 96
      %v5148 = vpop.permute.xlu0 %5147
      %5165 = vrot.lane.b32.xlu0 %v4949, 112
      %v5166 = vpop.permute.xlu0 %5165
      %5167 = vrot.lane.b32.xlu0 %v4950, 112
      %v5168 = vpop.permute.xlu0 %5167
      %5169 = vrot.lane.b32.xlu0 %v4951, 112
      %v5170 = vpop.permute.xlu0 %5169
      %5171 = vrot.lane.b32.xlu0 %v4952, 112
      %v5172 = vpop.permute.xlu0 %5171
      %5173 = vrot.lane.b32.xlu0 %v4953, 112
      %v5174 = vpop.permute.xlu0 %5173
      %5175 = vrot.lane.b32.xlu0 %v4954, 112
      %v5176 = vpop.permute.xlu0 %5175
      %5177 = vrot.lane.b32.xlu0 %v4955, 112
      %v5178 = vpop.permute.xlu0 %5177
      %5179 = vrot.lane.b32.xlu0 %v4956, 112
      %v5180 = vpop.permute.xlu0 %5179
      %v5189 = vsel %vm336, %v4893, %v4974
      %v5190 = vsel %vm336, %v4894, %v4976
      %v5191 = vsel %vm336, %v4895, %v4978
      %v5192 = vsel %vm336, %v4896, %v4980
      %v5193 = vsel %vm336, %v4897, %v4982
      %v5194 = vsel %vm336, %v4898, %v4984
      %v5195 = vsel %vm336, %v4899, %v4986
      %v5196 = vsel %vm336, %v4900, %v4988
      %v5197 = vsel %vm770, %v5189, %v5006
      %v5198 = vsel %vm770, %v5190, %v5008
      %v5199 = vsel %vm770, %v5191, %v5010
      %v5200 = vsel %vm770, %v5192, %v5012
      %v5201 = vsel %vm770, %v5193, %v5014
      %v5202 = vsel %vm770, %v5194, %v5016
      %v5203 = vsel %vm770, %v5195, %v5018
      %v5204 = vsel %vm770, %v5196, %v5020
      %v5205 = vsel %vm788, %v5197, %v5038
      %v5206 = vsel %vm788, %v5198, %v5040
      %v5207 = vsel %vm788, %v5199, %v5042
      %v5208 = vsel %vm788, %v5200, %v5044
      %v5209 = vsel %vm788, %v5201, %v5046
      %v5210 = vsel %vm788, %v5202, %v5048
      %v5211 = vsel %vm788, %v5203, %v5050
      %v5212 = vsel %vm788, %v5204, %v5052
      %v5213 = vsel %vm806, %v5205, %v5070
      %v5214 = vsel %vm806, %v5206, %v5072
      %v5215 = vsel %vm806, %v5207, %v5074
      %v5216 = vsel %vm806, %v5208, %v5076
      %v5217 = vsel %vm806, %v5209, %v5078
      %v5218 = vsel %vm806, %v5210, %v5080
      %v5219 = vsel %vm806, %v5211, %v5082
      %v5220 = vsel %vm806, %v5212, %v5084
      %v5221 = vsel %vm3922, %v5213, %v5102
      %v5222 = vsel %vm3922, %v5214, %v5104
      %v5223 = vsel %vm3922, %v5215, %v5106
      %v5224 = vsel %vm3922, %v5216, %v5108
      %v5225 = vsel %vm3922, %v5217, %v5110
      %v5226 = vsel %vm3922, %v5218, %v5112
      %v5227 = vsel %vm3922, %v5219, %v5114
      %v5228 = vsel %vm3922, %v5220, %v5116
      %v5229 = vsel %vm3931, %v5221, %v5134
      %v5230 = vsel %vm3931, %v5222, %v5136
      %v5231 = vsel %vm3931, %v5223, %v5138
      %v5232 = vsel %vm3931, %v5224, %v5140
      %v5233 = vsel %vm3931, %v5225, %v5142
      %v5234 = vsel %vm3931, %v5226, %v5144
      %v5235 = vsel %vm3931, %v5227, %v5146
      %v5236 = vsel %vm3931, %v5228, %v5148
      %v5237 = vsel %vm3940, %v5229, %v5166
      %v5238 = vsel %vm3940, %v5230, %v5168
      %v5239 = vsel %vm3940, %v5231, %v5170
      %v5240 = vsel %vm3940, %v5232, %v5172
      %v5241 = vsel %vm3940, %v5233, %v5174
      %v5242 = vsel %vm3940, %v5234, %v5176
      %v5243 = vsel %vm3940, %v5235, %v5178
      %v5244 = vsel %vm3940, %v5236, %v5180
      %v5245 = vld [vmem:[%s3] sm:$0xff]
      %v5246 = vld [vmem:[%s3 + $0x8] sm:$0xff]
      %v5247 = vld [vmem:[%s3 + $0x10] sm:$0xff]
      %v5248 = vld [vmem:[%s3 + $0x18] sm:$0xff]
      %v5249 = vld [vmem:[%s3 + $0x20] sm:$0xff]
      %v5250 = vld [vmem:[%s3 + $0x28] sm:$0xff]
      %v5251 = vld [vmem:[%s3 + $0x30] sm:$0xff]
      %v5252 = vld [vmem:[%s3 + $0x38] sm:$0xff]
      %v5253 = vld [vmem:[%s3 + $0x40] sm:$0xff]
      %v5254 = vld [vmem:[%s3 + $0x48] sm:$0xff]
      %v5255 = vld [vmem:[%s3 + $0x50] sm:$0xff]
      %v5256 = vld [vmem:[%s3 + $0x58] sm:$0xff]
      %v5257 = vld [vmem:[%s3 + $0x60] sm:$0xff]
      %v5258 = vld [vmem:[%s3 + $0x68] sm:$0xff]
      %v5259 = vld [vmem:[%s3 + $0x70] sm:$0xff]
      %v5260 = vld [vmem:[%s3 + $0x78] sm:$0xff]
      %v5261 = vld [vmem:[%s3 + $0x80] sm:$0xff]
      %v5262 = vld [vmem:[%s3 + $0x88] sm:$0xff]
      %v5263 = vld [vmem:[%s4] sm:$0x1]
      %v5265 = vperm.slane %v5263, 0
      %5284 = vrot.lane.b32.xlu0 %v5245, 112
      %v5285 = vpop.permute.xlu0 %5284
      %5286 = vrot.lane.b32.xlu0 %v5246, 112
      %v5287 = vpop.permute.xlu0 %5286
      %5288 = vrot.lane.b32.xlu0 %v5247, 112
      %v5289 = vpop.permute.xlu0 %5288
      %5290 = vrot.lane.b32.xlu0 %v5248, 112
      %v5291 = vpop.permute.xlu0 %5290
      %5292 = vrot.lane.b32.xlu0 %v5249, 112
      %v5293 = vpop.permute.xlu0 %5292
      %5294 = vrot.lane.b32.xlu0 %v5250, 112
      %v5295 = vpop.permute.xlu0 %5294
      %5296 = vrot.lane.b32.xlu0 %v5251, 112
      %v5297 = vpop.permute.xlu0 %5296
      %5298 = vrot.lane.b32.xlu0 %v5252, 112
      %v5299 = vpop.permute.xlu0 %5298
      %5300 = vrot.lane.b32.xlu0 %v5253, 112
      %v5301 = vpop.permute.xlu0 %5300
      %5302 = vrot.lane.b32.xlu0 %v5254, 112
      %v5303 = vpop.permute.xlu0 %5302
      %5304 = vrot.lane.b32.xlu0 %v5255, 112
      %v5305 = vpop.permute.xlu0 %5304
      %5306 = vrot.lane.b32.xlu0 %v5256, 112
      %v5307 = vpop.permute.xlu0 %5306
      %5308 = vrot.lane.b32.xlu0 %v5257, 112
      %v5309 = vpop.permute.xlu0 %5308
      %5310 = vrot.lane.b32.xlu0 %v5258, 112
      %v5311 = vpop.permute.xlu0 %5310
      %5312 = vrot.lane.b32.xlu0 %v5259, 112
      %v5313 = vpop.permute.xlu0 %5312
      %5314 = vrot.lane.b32.xlu0 %v5260, 112
      %v5315 = vpop.permute.xlu0 %5314
      %5316 = vrot.lane.b32.xlu0 %v5261, 112
      %v5317 = vpop.permute.xlu0 %5316
      %5318 = vrot.lane.b32.xlu0 %v5262, 112
      %v5319 = vpop.permute.xlu0 %5318
      %5338 = vrot.lane.b32.xlu0 %v5265, 112
      %v5339 = vpop.permute.xlu0 %5338
      %v5342 = vsel %vm336, %v4597, 0
      %v5345 = vsel %vm336, %v4598, 0
      %v5348 = vsel %vm336, %v4599, 0
      %v5351 = vsel %vm336, %v4600, 0
      %v5354 = vsel %vm336, %v4601, 0
      %v5357 = vsel %vm336, %v4602, 0
      %v5360 = vsel %vm336, %v4603, 0
      %v5363 = vsel %vm336, %v4604, 0
      %v5366 = vsel %vm336, %v4957, 0
      %v5369 = vsel %vm336, %v4958, 0
      %v5372 = vsel %vm336, %v4959, 0
      %v5375 = vsel %vm336, %v4960, 0
      %v5378 = vsel %vm336, %v4961, 0
      %v5381 = vsel %vm336, %v4962, 0
      %v5384 = vsel %vm336, %v4963, 0
      %v5387 = vsel %vm336, %v4964, 0
      %5389 = vmatpush.msra.mxu0 %v5315
      %5390 = vmatpush.msra.mxu0 %v5313
      %5391 = vmatpush.msra.mxu0 %v5311
      %5392 = vmatpush.msra.mxu0 %v5309
      %5393 = vmatpush.msra.mxu0 %v5307
      %5394 = vmatpush.msra.mxu0 %v5305
      %5395 = vmatpush.msra.mxu0 %v5303
      %5396 = vmatpush.msra.mxu0 %v5301
      %5397 = vmatpush.msra.mxu0 %v5299
      %5398 = vmatpush.msra.mxu0 %v5297
      %5399 = vmatpush.msra.mxu0 %v5295
      %5400 = vmatpush.msra.mxu0 %v5293
      %5401 = vmatpush.msra.mxu0 %v5291
      %5402 = vmatpush.msra.mxu0 %v5289
      %5403 = vmatpush.msra.mxu0 %v5287
      %5404 = vmatpush.msra.mxu0 %v5285
      %5405 = vmatmul.f32.gmra.mxu0 %v4877
      %v5406 = vpop.f32.mrf.mxu0
      %v5407 = vadd.f32 %v5339, %v5406
      %5408 = vmatmul.f32.gmra.mxu0 %v4878
      %v5409 = vpop.f32.mrf.mxu0
      %v5410 = vadd.f32 %v5339, %v5409
      %5411 = vmatmul.f32.gmra.mxu0 %v4879
      %v5412 = vpop.f32.mrf.mxu0
      %v5413 = vadd.f32 %v5339, %v5412
      %5414 = vmatmul.f32.gmra.mxu0 %v4880
      %v5415 = vpop.f32.mrf.mxu0
      %v5416 = vadd.f32 %v5339, %v5415
      %5417 = vmatmul.f32.gmra.mxu0 %v4881
      %v5418 = vpop.f32.mrf.mxu0
      %v5419 = vadd.f32 %v5339, %v5418
      %5420 = vmatmul.f32.gmra.mxu0 %v4882
      %v5421 = vpop.f32.mrf.mxu0
      %v5422 = vadd.f32 %v5339, %v5421
      %5423 = vmatmul.f32.gmra.mxu0 %v4883
      %v5424 = vpop.f32.mrf.mxu0
      %v5425 = vadd.f32 %v5339, %v5424
      %5426 = vmatmul.f32.gmra.mxu0 %v4884
      %v5427 = vpop.f32.mrf.mxu0
      %v5428 = vadd.f32 %v5339, %v5427
      %5429 = vmatmul.f32.gmra.mxu0 %v5237
      %v5430 = vpop.f32.mrf.mxu0
      %v5431 = vadd.f32 %v5339, %v5430
      %5432 = vmatmul.f32.gmra.mxu0 %v5238
      %v5433 = vpop.f32.mrf.mxu0
      %v5434 = vadd.f32 %v5339, %v5433
      %5435 = vmatmul.f32.gmra.mxu0 %v5239
      %v5436 = vpop.f32.mrf.mxu0
      %v5437 = vadd.f32 %v5339, %v5436
      %5438 = vmatmul.f32.gmra.mxu0 %v5240
      %v5439 = vpop.f32.mrf.mxu0
      %v5440 = vadd.f32 %v5339, %v5439
      %5441 = vmatmul.f32.gmra.mxu0 %v5241
      %v5442 = vpop.f32.mrf.mxu0
      %v5443 = vadd.f32 %v5339, %v5442
      %5444 = vmatmul.f32.gmra.mxu0 %v5242
      %v5445 = vpop.f32.mrf.mxu0
      %v5446 = vadd.f32 %v5339, %v5445
      %5447 = vmatmul.f32.gmra.mxu0 %v5243
      %v5448 = vpop.f32.mrf.mxu0
      %v5449 = vadd.f32 %v5339, %v5448
      %5450 = vmatmul.f32.gmra.mxu0 %v5244
      %v5451 = vpop.f32.mrf.mxu0
      %v5452 = vadd.f32 %v5339, %v5451
      %5453 = vdwg.mxu0
      %5454 = vmatpush.msra.mxu0 0.0
      %5455 = vmatpush.msra.mxu0 0.0
      %5456 = vmatpush.msra.mxu0 0.0
      %5457 = vmatpush.msra.mxu0 0.0
      %5458 = vmatpush.msra.mxu0 0.0
      %5459 = vmatpush.msra.mxu0 0.0
      %5460 = vmatpush.msra.mxu0 0.0
      %5461 = vmatpush.msra.mxu0 0.0
      %5462 = vmatpush.msra.mxu0 0.0
      %5463 = vmatpush.msra.mxu0 0.0
      %5464 = vmatpush.msra.mxu0 0.0
      %5465 = vmatpush.msra.mxu0 0.0
      %5466 = vmatpush.msra.mxu0 0.0
      %5467 = vmatpush.msra.mxu0 0.0
      %5468 = vmatpush.msra.mxu0 %v5319
      %5469 = vmatpush.msra.mxu0 %v5317
      %5470 = vmatmul.f32.gmra.mxu0 %v5342
      %v5471 = vpop.f32.mrf.mxu0
      %v5472 = vadd.f32 %v5407, %v5471
      %5473 = vmatmul.f32.gmra.mxu0 %v5345
      %v5474 = vpop.f32.mrf.mxu0
      %v5475 = vadd.f32 %v5410, %v5474
      %5476 = vmatmul.f32.gmra.mxu0 %v5348
      %v5477 = vpop.f32.mrf.mxu0
      %v5478 = vadd.f32 %v5413, %v5477
      %5479 = vmatmul.f32.gmra.mxu0 %v5351
      %v5480 = vpop.f32.mrf.mxu0
      %v5481 = vadd.f32 %v5416, %v5480
      %5482 = vmatmul.f32.gmra.mxu0 %v5354
      %v5483 = vpop.f32.mrf.mxu0
      %v5484 = vadd.f32 %v5419, %v5483
      %5485 = vmatmul.f32.gmra.mxu0 %v5357
      %v5486 = vpop.f32.mrf.mxu0
      %v5487 = vadd.f32 %v5422, %v5486
      %5488 = vmatmul.f32.gmra.mxu0 %v5360
      %v5489 = vpop.f32.mrf.mxu0
      %v5490 = vadd.f32 %v5425, %v5489
      %5491 = vmatmul.f32.gmra.mxu0 %v5363
      %v5492 = vpop.f32.mrf.mxu0
      %v5493 = vadd.f32 %v5428, %v5492
      %5494 = vmatmul.f32.gmra.mxu0 %v5366
      %v5495 = vpop.f32.mrf.mxu0
      %v5496 = vadd.f32 %v5431, %v5495
      %5497 = vmatmul.f32.gmra.mxu0 %v5369
      %v5498 = vpop.f32.mrf.mxu0
      %v5499 = vadd.f32 %v5434, %v5498
      %5500 = vmatmul.f32.gmra.mxu0 %v5372
      %v5501 = vpop.f32.mrf.mxu0
      %v5502 = vadd.f32 %v5437, %v5501
      %5503 = vmatmul.f32.gmra.mxu0 %v5375
      %v5504 = vpop.f32.mrf.mxu0
      %v5505 = vadd.f32 %v5440, %v5504
      %5506 = vmatmul.f32.gmra.mxu0 %v5378
      %v5507 = vpop.f32.mrf.mxu0
      %v5508 = vadd.f32 %v5443, %v5507
      %5509 = vmatmul.f32.gmra.mxu0 %v5381
      %v5510 = vpop.f32.mrf.mxu0
      %v5511 = vadd.f32 %v5446, %v5510
      %5512 = vmatmul.f32.gmra.mxu0 %v5384
      %v5513 = vpop.f32.mrf.mxu0
      %v5514 = vadd.f32 %v5449, %v5513
      %5515 = vmatmul.f32.gmra.mxu0 %v5387
      %v5516 = vpop.f32.mrf.mxu0
      %v5517 = vadd.f32 %v5452, %v5516
      %5518 = vdwg.mxu0
      %v5519 = vxor.u32 %v5472, 2147483648
      %v5520 = vxor.u32 %v5475, 2147483648
      %v5521 = vxor.u32 %v5478, 2147483648
      %v5522 = vxor.u32 %v5481, 2147483648
      %v5523 = vxor.u32 %v5484, 2147483648
      %v5524 = vxor.u32 %v5487, 2147483648
      %v5525 = vxor.u32 %v5490, 2147483648
      %v5526 = vxor.u32 %v5493, 2147483648
      %v5527 = vxor.u32 %v5496, 2147483648
      %v5528 = vxor.u32 %v5499, 2147483648
      %v5529 = vxor.u32 %v5502, 2147483648
      %v5530 = vxor.u32 %v5505, 2147483648
      %v5531 = vxor.u32 %v5508, 2147483648
      %v5532 = vxor.u32 %v5511, 2147483648
      %v5533 = vxor.u32 %v5514, 2147483648
      %v5534 = vxor.u32 %v5517, 2147483648
      %v5535 = vmul.f32 %v5519, 1.442695
      %v5536 = vpow.pop %v5535
      %v5537 = vmul.f32 %v5520, 1.442695
      %v5538 = vpow.pop %v5537
      %v5539 = vmul.f32 %v5521, 1.442695
      %v5540 = vpow.pop %v5539
      %v5541 = vmul.f32 %v5522, 1.442695
      %v5542 = vpow.pop %v5541
      %v5543 = vmul.f32 %v5523, 1.442695
      %v5544 = vpow.pop %v5543
      %v5545 = vmul.f32 %v5524, 1.442695
      %v5546 = vpow.pop %v5545
      %v5547 = vmul.f32 %v5525, 1.442695
      %v5548 = vpow.pop %v5547
      %v5549 = vmul.f32 %v5526, 1.442695
      %v5550 = vpow.pop %v5549
      %v5551 = vmul.f32 %v5527, 1.442695
      %v5552 = vpow.pop %v5551
      %v5553 = vmul.f32 %v5528, 1.442695
      %v5554 = vpow.pop %v5553
      %v5555 = vmul.f32 %v5529, 1.442695
      %v5556 = vpow.pop %v5555
      %v5557 = vmul.f32 %v5530, 1.442695
      %v5558 = vpow.pop %v5557
      %v5559 = vmul.f32 %v5531, 1.442695
      %v5560 = vpow.pop %v5559
      %v5561 = vmul.f32 %v5532, 1.442695
      %v5562 = vpow.pop %v5561
      %v5563 = vmul.f32 %v5533, 1.442695
      %v5564 = vpow.pop %v5563
      %v5565 = vmul.f32 %v5534, 1.442695
      %v5566 = vpow.pop %v5565
      %v5567 = vadd.f32 %v5536, 1.0
      %v5568 = vadd.f32 %v5538, 1.0
      %v5569 = vadd.f32 %v5540, 1.0
      %v5570 = vadd.f32 %v5542, 1.0
      %v5571 = vadd.f32 %v5544, 1.0
      %v5572 = vadd.f32 %v5546, 1.0
      %v5573 = vadd.f32 %v5548, 1.0
      %v5574 = vadd.f32 %v5550, 1.0
      %v5575 = vadd.f32 %v5552, 1.0
      %v5576 = vadd.f32 %v5554, 1.0
      %v5577 = vadd.f32 %v5556, 1.0
      %v5578 = vadd.f32 %v5558, 1.0
      %v5579 = vadd.f32 %v5560, 1.0
      %v5580 = vadd.f32 %v5562, 1.0
      %v5581 = vadd.f32 %v5564, 1.0
      %v5582 = vadd.f32 %v5566, 1.0
      %v5583 = vrcp.pop %v5567
      %v5584 = vmul.f32 %v5567, %v5583
      %v5585 = vsub.f32 1.0, %v5584
      %v5586 = vmul.f32 %v5583, %v5585
      %v5587 = vadd.f32 %v5583, %v5586
      %vm5588 = vweird.f32 %v5567
      %vm5589 = vweird.f32 %v5583
      %vm5590 = vmor %vm5588, %vm5589
      %v5591 = vsel %vm5590, %v5583, %v5587
      %v5592 = vand.u32 2147483647, %v5567
      %vm5593 = vcmp.eq.f32.partialorder %v5592, 8.507059e+37
      %v5594 = vand.u32 %v5567, 2147483648
      %v5595 = vor.u32 1.1754944e-38, %v5594
      %v5596 = vsel %vm5593, %v5595, %v5591
      %v5597 = vmul.f32 1.0, %v5596
      %v5598 = vrcp.pop %v5568
      %v5599 = vmul.f32 %v5568, %v5598
      %v5600 = vsub.f32 1.0, %v5599
      %v5601 = vmul.f32 %v5598, %v5600
      %v5602 = vadd.f32 %v5598, %v5601
      %vm5603 = vweird.f32 %v5568
      %vm5604 = vweird.f32 %v5598
      %vm5605 = vmor %vm5603, %vm5604
      %v5606 = vsel %vm5605, %v5598, %v5602
      %v5607 = vand.u32 2147483647, %v5568
      %vm5608 = vcmp.eq.f32.partialorder %v5607, 8.507059e+37
      %v5609 = vand.u32 %v5568, 2147483648
      %v5610 = vor.u32 1.1754944e-38, %v5609
      %v5611 = vsel %vm5608, %v5610, %v5606
      %v5612 = vmul.f32 1.0, %v5611
      %v5613 = vrcp.pop %v5569
      %v5614 = vmul.f32 %v5569, %v5613
      %v5615 = vsub.f32 1.0, %v5614
      %v5616 = vmul.f32 %v5613, %v5615
      %v5617 = vadd.f32 %v5613, %v5616
      %vm5618 = vweird.f32 %v5569
      %vm5619 = vweird.f32 %v5613
      %vm5620 = vmor %vm5618, %vm5619
      %v5621 = vsel %vm5620, %v5613, %v5617
      %v5622 = vand.u32 2147483647, %v5569
      %vm5623 = vcmp.eq.f32.partialorder %v5622, 8.507059e+37
      %v5624 = vand.u32 %v5569, 2147483648
      %v5625 = vor.u32 1.1754944e-38, %v5624
      %v5626 = vsel %vm5623, %v5625, %v5621
      %v5627 = vmul.f32 1.0, %v5626
      %v5628 = vrcp.pop %v5570
      %v5629 = vmul.f32 %v5570, %v5628
      %v5630 = vsub.f32 1.0, %v5629
      %v5631 = vmul.f32 %v5628, %v5630
      %v5632 = vadd.f32 %v5628, %v5631
      %vm5633 = vweird.f32 %v5570
      %vm5634 = vweird.f32 %v5628
      %vm5635 = vmor %vm5633, %vm5634
      %v5636 = vsel %vm5635, %v5628, %v5632
      %v5637 = vand.u32 2147483647, %v5570
      %vm5638 = vcmp.eq.f32.partialorder %v5637, 8.507059e+37
      %v5639 = vand.u32 %v5570, 2147483648
      %v5640 = vor.u32 1.1754944e-38, %v5639
      %v5641 = vsel %vm5638, %v5640, %v5636
      %v5642 = vmul.f32 1.0, %v5641
      %v5643 = vrcp.pop %v5571
      %v5644 = vmul.f32 %v5571, %v5643
      %v5645 = vsub.f32 1.0, %v5644
      %v5646 = vmul.f32 %v5643, %v5645
      %v5647 = vadd.f32 %v5643, %v5646
      %vm5648 = vweird.f32 %v5571
      %vm5649 = vweird.f32 %v5643
      %vm5650 = vmor %vm5648, %vm5649
      %v5651 = vsel %vm5650, %v5643, %v5647
      %v5652 = vand.u32 2147483647, %v5571
      %vm5653 = vcmp.eq.f32.partialorder %v5652, 8.507059e+37
      %v5654 = vand.u32 %v5571, 2147483648
      %v5655 = vor.u32 1.1754944e-38, %v5654
      %v5656 = vsel %vm5653, %v5655, %v5651
      %v5657 = vmul.f32 1.0, %v5656
      %v5658 = vrcp.pop %v5572
      %v5659 = vmul.f32 %v5572, %v5658
      %v5660 = vsub.f32 1.0, %v5659
      %v5661 = vmul.f32 %v5658, %v5660
      %v5662 = vadd.f32 %v5658, %v5661
      %vm5663 = vweird.f32 %v5572
      %vm5664 = vweird.f32 %v5658
      %vm5665 = vmor %vm5663, %vm5664
      %v5666 = vsel %vm5665, %v5658, %v5662
      %v5667 = vand.u32 2147483647, %v5572
      %vm5668 = vcmp.eq.f32.partialorder %v5667, 8.507059e+37
      %v5669 = vand.u32 %v5572, 2147483648
      %v5670 = vor.u32 1.1754944e-38, %v5669
      %v5671 = vsel %vm5668, %v5670, %v5666
      %v5672 = vmul.f32 1.0, %v5671
      %v5673 = vrcp.pop %v5573
      %v5674 = vmul.f32 %v5573, %v5673
      %v5675 = vsub.f32 1.0, %v5674
      %v5676 = vmul.f32 %v5673, %v5675
      %v5677 = vadd.f32 %v5673, %v5676
      %vm5678 = vweird.f32 %v5573
      %vm5679 = vweird.f32 %v5673
      %vm5680 = vmor %vm5678, %vm5679
      %v5681 = vsel %vm5680, %v5673, %v5677
      %v5682 = vand.u32 2147483647, %v5573
      %vm5683 = vcmp.eq.f32.partialorder %v5682, 8.507059e+37
      %v5684 = vand.u32 %v5573, 2147483648
      %v5685 = vor.u32 1.1754944e-38, %v5684
      %v5686 = vsel %vm5683, %v5685, %v5681
      %v5687 = vmul.f32 1.0, %v5686
      %v5688 = vrcp.pop %v5574
      %v5689 = vmul.f32 %v5574, %v5688
      %v5690 = vsub.f32 1.0, %v5689
      %v5691 = vmul.f32 %v5688, %v5690
      %v5692 = vadd.f32 %v5688, %v5691
      %vm5693 = vweird.f32 %v5574
      %vm5694 = vweird.f32 %v5688
      %vm5695 = vmor %vm5693, %vm5694
      %v5696 = vsel %vm5695, %v5688, %v5692
      %v5697 = vand.u32 2147483647, %v5574
      %vm5698 = vcmp.eq.f32.partialorder %v5697, 8.507059e+37
      %v5699 = vand.u32 %v5574, 2147483648
      %v5700 = vor.u32 1.1754944e-38, %v5699
      %v5701 = vsel %vm5698, %v5700, %v5696
      %v5702 = vmul.f32 1.0, %v5701
      %v5703 = vrcp.pop %v5575
      %v5704 = vmul.f32 %v5575, %v5703
      %v5705 = vsub.f32 1.0, %v5704
      %v5706 = vmul.f32 %v5703, %v5705
      %v5707 = vadd.f32 %v5703, %v5706
      %vm5708 = vweird.f32 %v5575
      %vm5709 = vweird.f32 %v5703
      %vm5710 = vmor %vm5708, %vm5709
      %v5711 = vsel %vm5710, %v5703, %v5707
      %v5712 = vand.u32 2147483647, %v5575
      %vm5713 = vcmp.eq.f32.partialorder %v5712, 8.507059e+37
      %v5714 = vand.u32 %v5575, 2147483648
      %v5715 = vor.u32 1.1754944e-38, %v5714
      %v5716 = vsel %vm5713, %v5715, %v5711
      %v5717 = vmul.f32 1.0, %v5716
      %v5718 = vrcp.pop %v5576
      %v5719 = vmul.f32 %v5576, %v5718
      %v5720 = vsub.f32 1.0, %v5719
      %v5721 = vmul.f32 %v5718, %v5720
      %v5722 = vadd.f32 %v5718, %v5721
      %vm5723 = vweird.f32 %v5576
      %vm5724 = vweird.f32 %v5718
      %vm5725 = vmor %vm5723, %vm5724
      %v5726 = vsel %vm5725, %v5718, %v5722
      %v5727 = vand.u32 2147483647, %v5576
      %vm5728 = vcmp.eq.f32.partialorder %v5727, 8.507059e+37
      %v5729 = vand.u32 %v5576, 2147483648
      %v5730 = vor.u32 1.1754944e-38, %v5729
      %v5731 = vsel %vm5728, %v5730, %v5726
      %v5732 = vmul.f32 1.0, %v5731
      %v5733 = vrcp.pop %v5577
      %v5734 = vmul.f32 %v5577, %v5733
      %v5735 = vsub.f32 1.0, %v5734
      %v5736 = vmul.f32 %v5733, %v5735
      %v5737 = vadd.f32 %v5733, %v5736
      %vm5738 = vweird.f32 %v5577
      %vm5739 = vweird.f32 %v5733
      %vm5740 = vmor %vm5738, %vm5739
      %v5741 = vsel %vm5740, %v5733, %v5737
      %v5742 = vand.u32 2147483647, %v5577
      %vm5743 = vcmp.eq.f32.partialorder %v5742, 8.507059e+37
      %v5744 = vand.u32 %v5577, 2147483648
      %v5745 = vor.u32 1.1754944e-38, %v5744
      %v5746 = vsel %vm5743, %v5745, %v5741
      %v5747 = vmul.f32 1.0, %v5746
      %v5748 = vrcp.pop %v5578
      %v5749 = vmul.f32 %v5578, %v5748
      %v5750 = vsub.f32 1.0, %v5749
      %v5751 = vmul.f32 %v5748, %v5750
      %v5752 = vadd.f32 %v5748, %v5751
      %vm5753 = vweird.f32 %v5578
      %vm5754 = vweird.f32 %v5748
      %vm5755 = vmor %vm5753, %vm5754
      %v5756 = vsel %vm5755, %v5748, %v5752
      %v5757 = vand.u32 2147483647, %v5578
      %vm5758 = vcmp.eq.f32.partialorder %v5757, 8.507059e+37
      %v5759 = vand.u32 %v5578, 2147483648
      %v5760 = vor.u32 1.1754944e-38, %v5759
      %v5761 = vsel %vm5758, %v5760, %v5756
      %v5762 = vmul.f32 1.0, %v5761
      %v5763 = vrcp.pop %v5579
      %v5764 = vmul.f32 %v5579, %v5763
      %v5765 = vsub.f32 1.0, %v5764
      %v5766 = vmul.f32 %v5763, %v5765
      %v5767 = vadd.f32 %v5763, %v5766
      %vm5768 = vweird.f32 %v5579
      %vm5769 = vweird.f32 %v5763
      %vm5770 = vmor %vm5768, %vm5769
      %v5771 = vsel %vm5770, %v5763, %v5767
      %v5772 = vand.u32 2147483647, %v5579
      %vm5773 = vcmp.eq.f32.partialorder %v5772, 8.507059e+37
      %v5774 = vand.u32 %v5579, 2147483648
      %v5775 = vor.u32 1.1754944e-38, %v5774
      %v5776 = vsel %vm5773, %v5775, %v5771
      %v5777 = vmul.f32 1.0, %v5776
      %v5778 = vrcp.pop %v5580
      %v5779 = vmul.f32 %v5580, %v5778
      %v5780 = vsub.f32 1.0, %v5779
      %v5781 = vmul.f32 %v5778, %v5780
      %v5782 = vadd.f32 %v5778, %v5781
      %vm5783 = vweird.f32 %v5580
      %vm5784 = vweird.f32 %v5778
      %vm5785 = vmor %vm5783, %vm5784
      %v5786 = vsel %vm5785, %v5778, %v5782
      %v5787 = vand.u32 2147483647, %v5580
      %vm5788 = vcmp.eq.f32.partialorder %v5787, 8.507059e+37
      %v5789 = vand.u32 %v5580, 2147483648
      %v5790 = vor.u32 1.1754944e-38, %v5789
      %v5791 = vsel %vm5788, %v5790, %v5786
      %v5792 = vmul.f32 1.0, %v5791
      %v5793 = vrcp.pop %v5581
      %v5794 = vmul.f32 %v5581, %v5793
      %v5795 = vsub.f32 1.0, %v5794
      %v5796 = vmul.f32 %v5793, %v5795
      %v5797 = vadd.f32 %v5793, %v5796
      %vm5798 = vweird.f32 %v5581
      %vm5799 = vweird.f32 %v5793
      %vm5800 = vmor %vm5798, %vm5799
      %v5801 = vsel %vm5800, %v5793, %v5797
      %v5802 = vand.u32 2147483647, %v5581
      %vm5803 = vcmp.eq.f32.partialorder %v5802, 8.507059e+37
      %v5804 = vand.u32 %v5581, 2147483648
      %v5805 = vor.u32 1.1754944e-38, %v5804
      %v5806 = vsel %vm5803, %v5805, %v5801
      %v5807 = vmul.f32 1.0, %v5806
      %v5808 = vrcp.pop %v5582
      %v5809 = vmul.f32 %v5582, %v5808
      %v5810 = vsub.f32 1.0, %v5809
      %v5811 = vmul.f32 %v5808, %v5810
      %v5812 = vadd.f32 %v5808, %v5811
      %vm5813 = vweird.f32 %v5582
      %vm5814 = vweird.f32 %v5808
      %vm5815 = vmor %vm5813, %vm5814
      %v5816 = vsel %vm5815, %v5808, %v5812
      %v5817 = vand.u32 2147483647, %v5582
      %vm5818 = vcmp.eq.f32.partialorder %v5817, 8.507059e+37
      %v5819 = vand.u32 %v5582, 2147483648
      %v5820 = vor.u32 1.1754944e-38, %v5819
      %v5821 = vsel %vm5818, %v5820, %v5816
      %v5822 = vmul.f32 1.0, %v5821
      %5823 = vxpose.xlu0.b32.start [1/16] %v5597, 128
      %5824 = vxpose.xlu0.b32.cont [2/16] %v5612, 128
      %5825 = vxpose.xlu0.b32.cont [3/16] %v5627, 128
      %5826 = vxpose.xlu0.b32.cont [4/16] %v5642, 128
      %5827 = vxpose.xlu0.b32.cont [5/16] %v5657, 128
      %5828 = vxpose.xlu0.b32.cont [6/16] %v5672, 128
      %5829 = vxpose.xlu0.b32.cont [7/16] %v5687, 128
      %5830 = vxpose.xlu0.b32.cont [8/16] %v5702, 128
      %5831 = vxpose.xlu0.b32.cont [9/16] %v5717, 128
      %5832 = vxpose.xlu0.b32.cont [10/16] %v5732, 128
      %5833 = vxpose.xlu0.b32.cont [11/16] %v5747, 128
      %5834 = vxpose.xlu0.b32.cont [12/16] %v5762, 128
      %5835 = vxpose.xlu0.b32.cont [13/16] %v5777, 128
      %5836 = vxpose.xlu0.b32.cont [14/16] %v5792, 128
      %5837 = vxpose.xlu0.b32.cont [15/16] %v5807, 128
      %5838 = vxpose.xlu0.b32.end [16/16] %v5822, 128
      %v5839 = vpop.trf.xlu0
      %v5840 = vpop.trf.xlu0
      %v5841 = vpop.trf.xlu0
      %v5842 = vpop.trf.xlu0
      %v5843 = vpop.trf.xlu0
      %v5844 = vpop.trf.xlu0
      %v5845 = vpop.trf.xlu0
      %v5846 = vpop.trf.xlu0
      %v5847 = vpop.trf.xlu0
      %v5848 = vpop.trf.xlu0
      %v5849 = vpop.trf.xlu0
      %v5850 = vpop.trf.xlu0
      %v5851 = vpop.trf.xlu0
      %v5852 = vpop.trf.xlu0
      %v5853 = vpop.trf.xlu0
      %v5854 = vpop.trf.xlu0
      %5855 = vst [vmem:[%s335] sm:$0x3f] %v5839
      %p5856 = scmp.lt.s32.totalorder %s20, 1
      %s5857 = scalar_select %p5856, %s20, 1
      %s5858 = smul.addr %s5857, 8
      %s5859 = scalar_lea.vmem %s9, %s5858
      // Predicated region
      $region57: #{proposal_relation_block.1} parent=55 // pred_check
        %p5860 = pneg %p232
      $region58: #{proposal_relation_block.1} parent=55 // pred_check_branch
        %5862 = sbr.rel (%p5860) target = $region60
      $region59: #{proposal_relation_block.1} parent=55 // pred_region
        _
      $region60: #{proposal_relation_block.1} parent=55 // pred_fallthru
        _
    $region56: #{proposal_relation_block.1} parent=5 // pred_fallthru
      _
    %p5863 = scmp.le.s32.totalorder 2, %s15
    // Predicated region
    $region61: #{proposal_relation_block.1} parent=5 // pred_check
      %p5864 = pneg %p5863
    $region62: #{proposal_relation_block.1} parent=5 // pred_check_branch
      %5866 = sbr.rel (%p5864) target = $region64
    $region63: #{proposal_relation_block.1} parent=5 // pred_region
      %s5867 = ssub.s32 %s15, 2
      // Predicated region
      $region65: #{proposal_relation_block.1} parent=63 // pred_check
        %p5868 = pneg %p238
      $region66: #{proposal_relation_block.1} parent=63 // pred_check_branch
        %5870 = sbr.rel (%p5868) target = $region68
      $region67: #{proposal_relation_block.1} parent=63 // pred_region
        %p5871 = scmp.lt.s32.totalorder %s21, 1
        %s5872 = scalar_select %p5871, %s21, 1
        %s5873 = smul.addr %s5872, 8
        %s5874 = scalar_lea.vmem %s9, %s5873
      $region68: #{proposal_relation_block.1} parent=63 // pred_fallthru
        _
    $region64: #{proposal_relation_block.1} parent=5 // pred_fallthru
      _
  $region6: #{proposal_relation_block.1} parent=0 // loop_footer
    %s19 = sadd.s32 1, %s15
  $region7: #{proposal_relation_block.1} parent=0 // loop_footer_branch
    %14 = sbr.rel target = $region3
  $region8: #{proposal_relation_block.1} parent=0 // loop_exit
    _

</llo_original>
